<compile_context>
chip_gen: v6e
topology: v6e:2x2x1
jax: 0.10.0
libtpu: 0.0.40
codegen_flags: <defaults>
</compile_context>

<pallas_src>
import jax
import jax.numpy as jnp
from jax import lax
from jax.experimental import pallas as pl
from jax.experimental.pallas import tpu as pltpu


_BIG = 1e10          # soft-DTW boundary (exp(-_BIG/gamma) underflows, matching the reference)
_MAX_UNROLL_T = 16   # fully unroll the diagonal loops up to this T; fori_loop beyond


# ----------------------------------------------------------------------------- kernel ---

def _make_dilate_kernel(T, T_pad, LANE, gamma, q_dtype):
    """Kernel computing per-lane soft-DTW value and soft-path temporal sum for one lane block."""
    f32 = jnp.float32
    ND = 2 * T - 1               # interior anti-diagonals d = 2 .. 2T, stored at index d-2
    inv_gamma = 1.0 / gamma
    unrolled = T <= _MAX_UNROLL_T

    def kernel(tgt_ref, orev_ref, out_ref, q0_ref, q1_ref):
        t = tgt_ref[...].astype(f32)        # targets:  sublane s = target[s]
        o_rev = orev_ref[...].astype(f32)   # outputs, time-reversed over the padded T_pad axis
        t_sq = t * t

        row = lax.broadcasted_iota(jnp.int32, (T_pad, LANE), 0)
        top_row = row == 0
        bot_pad_row = row == T_pad - 1
        last_row = row == T - 1             # sublane holding cell (T, .)
        row2f = (2 * row).astype(f32)
        big = jnp.full((T_pad, LANE), _BIG, f32)

        def shift_down(x, bnd):
            # out[s] = x[s-1] for s >= 1 ; out[0] = bnd          (XLU sublane rotate)
            return jnp.where(top_row, bnd, pltpu.roll(x, shift=1, axis=0))

        def shift_up(x):
            # out[s] = x[s+1] for s < T_pad-1 ; out[T_pad-1] = 0
            return jnp.where(bot_pad_row, 0.0, pltpu.roll(x, shift=T_pad - 1, axis=0))

        def diag_mask(d):
            # valid sublanes of interior diagonal d:  max(0, d-1-T) <= s <= min(T-1, d-2)
            return (row >= jnp.maximum(d - 1 - T, 0)) & (row <= jnp.minimum(d - 2, T - 1))

        # -------- merged forward soft-DTW pass (wavefront over anti-diagonals) -----------
        # Diagonal d holds cells (i, j) = (s+1, d-1-s); predecessors live on d-1 / d-2.
        def fwd_body(d, carry):
            vm1, vm2, o_sh = carry            # V on diagonals d-1 / d-2, rolled outputs
            if unrolled:
                r = (d - 1) % T_pad           # static per-diagonal rotate (independent rolls)
                o_cur = o_rev if r == 0 else pltpu.roll(o_rev, shift=r, axis=0)
                o_next = o_sh                 # carry unused on the unrolled path
            else:
                o_cur = o_sh                  # incrementally rolled (static shift=1 per step)
                o_next = pltpu.roll(o_sh, shift=1, axis=0)

            # D(i,j) = clamp(t_i^2 + o_j^2 - 2 t_i o_j, 0); o_cur[s] = output[d-2-s]
            dist = jnp.maximum(t_sq + o_cur * o_cur - 2.0 * t * o_cur, 0.0)

            p0 = vm1                                           # V[i,   j-1]
            bnd = jnp.where(jnp.equal(d, 2), 0.0, _BIG)        # V[0,0] = 0, else boundary
            p1 = shift_down(vm2, bnd)                          # V[i-1, j-1]
            p2 = shift_down(vm1, _BIG)                         # V[i-1, j  ]

            n0, n1, n2 = -p0, -p1, -p2
            mx = jnp.maximum(jnp.maximum(n0, n1), n2)
            e0 = jnp.exp((n0 - mx) * inv_gamma)
            e1 = jnp.exp((n1 - mx) * inv_gamma)
            e2 = jnp.exp((n2 - mx) * inv_gamma)
            z = e0 + e1 + e2
            valid = diag_mask(d)
            w = pl.reciprocal(z, approx=True) * valid.astype(f32)   # mask folded into 1/Z
            vmin = -(gamma * jnp.log(z) + mx)

            # Only Q0/Q1 are stored; Q2 is reconstructed as valid - Q0 - Q1 in the backward
            # pass (this also exactly renormalizes the approximate reciprocal).
            q0_ref[d - 2] = (e0 * w).astype(q_dtype)           # weight of (i,   j-1)
            q1_ref[d - 2] = (e1 * w).astype(q_dtype)           # weight of (i-1, j-1)
            vnew = jnp.where(valid, dist + vmin, _BIG)         # invalid cells act as boundary
            return vnew, vm1, o_next

        o0 = o_rev if unrolled else pltpu.roll(o_rev, shift=1, axis=0)
        fwd_init = (big, big, o0)
        if unrolled:
            carry = fwd_init
            for d in range(2, 2 * T + 1):
                carry = fwd_body(d, carry)
        else:
            carry = lax.fori_loop(2, 2 * T + 1, fwd_body, fwd_init)
        v_last = carry[0]                                      # V on diagonal 2T

        # per-lane soft-DTW value V[T, T] (sublane T-1 of the last diagonal)
        shape_row = jnp.sum(jnp.where(last_row, v_last, 0.0), axis=0, keepdims=True)

        # -------- backward soft-path pass + temporal accumulation ------------------------
        # E[i,j] = Q0[i,j+1] E[i,j+1] + Q1[i+1,j+1] E[i+1,j+1] + Q2[i+1,j] E[i+1,j]
        def bwd_body(m, carry):
            ep1, ep2, acc = carry             # E on diagonals d+1 / d+2, running sum
            d = 2 * T - 1 - m                 # current diagonal: 2T-1 down to 2
            if isinstance(d, int):
                d_q1 = min(d, 2 * T - 2)
            else:
                d_q1 = jnp.minimum(d, 2 * T - 2)
            q0 = q0_ref[d - 1].astype(f32)                     # Q on diagonal d+1
            q1n = q1_ref[d - 1].astype(f32)
            q2 = diag_mask(d + 1).astype(f32) - q0 - q1n       # derived third weight
            q1f = q1_ref[d_q1].astype(f32)                     # Q1 on diag d+2 (ep2==0 if clamped)
            ed = q0 * ep1 + shift_up(q2 * ep1 + q1f * ep2)
            ed = jnp.where(diag_mask(d), ed, 0.0)
            df = lax.convert_element_type(d, f32)
            dij = row2f + 2.0 - df                             # (i - j) on this diagonal
            acc = acc + ed * (dij * dij)                       # Omega[i,j] = (i-j)^2
            return ed, ep1, acc

        bwd_init = (last_row.astype(f32),                      # E on diag 2T   : E[T,T] = 1
                    jnp.zeros((T_pad, LANE), f32),             # E on diag 2T+1 : all zero
                    jnp.zeros((T_pad, LANE), f32))
        if unrolled:
            carry = bwd_init
            for m in range(0, 2 * T - 2):
                carry = bwd_body(m, carry)
        else:
            carry = lax.fori_loop(0, 2 * T - 2, bwd_body, bwd_init)
        acc = carry[2]
        temp_row = jnp.sum(acc, axis=0, keepdims=True)         # per-lane sum of E * (i-j)^2

        # lane-dense (8, LANE) output slab: row 0 = shape value, row 1 = temporal sum
        row8 = lax.broadcasted_iota(jnp.int32, (8, LANE), 0)
        slab = (jnp.where(row8 == 0, shape_row, 0.0)
                + jnp.where(row8 == 1, temp_row, 0.0))
        out_ref[...] = slab[None]

    return kernel


def _choose_lane_tile(T, T_pad, BKp, q_itemsize, budget_bytes=24 << 20):
    """Lane-tile width: wide enough to hide EUP latency at small T, small enough for VMEM."""
    per_lane = 2 * (2 * T - 1) * T_pad * q_itemsize            # Q0+Q1 scratch bytes per lane
    by_budget = max(128, (budget_bytes // per_lane) // 128 * 128)
    want = 512 if T <= 32 else 256
    tile = max(128, min(BKp, want, by_budget))
    while BKp % tile:                                          # tile must divide BKp
        tile -= 128
    return int(tile)


def _dilate_loss_core(tgt_tk, out_tk, alpha, gamma):
    """tgt_tk / out_tk: (T, BK) float32, lanes = sampled series. Returns the scalar loss."""
    T, BK = tgt_tk.shape
    T_pad = ((T + 7) // 8) * 8                                 # sublane-aligned DP height
    BKp = ((BK + 127) // 128) * 128                            # lane-dense series count
    # bf16 Q wants a 16-sublane tile; fall back to f32 otherwise (still correct, just larger).
    q_dtype = jnp.bfloat16 if T_pad % 16 == 0 else jnp.float32
    q_itemsize = jnp.dtype(q_dtype).itemsize
    LANE = _choose_lane_tile(T, T_pad, BKp, q_itemsize)
    nblk = BKp // LANE
    ND = 2 * T - 1

    tgt_p = jnp.zeros((T_pad, BKp), jnp.float32).at[:T, :BK].set(tgt_tk.astype(jnp.float32))
    out_p = jnp.zeros((T_pad, BKp), jnp.float32).at[:T, :BK].set(out_tk.astype(jnp.float32))
    out_rev = out_p[::-1, :]                                   # reversed over T_pad for the rolls

    q_bytes = 2 * ND * T_pad * LANE * q_itemsize
    io_bytes = 2 * 2 * T_pad * LANE * 4 + 2 * 8 * LANE * 4     # double-buffered ins + out
    vmem_limit = int(min(100 << 20, max(32 << 20, q_bytes + io_bytes + (8 << 20))))

    kernel = _make_dilate_kernel(T, T_pad, LANE, float(gamma), q_dtype)
    partials = pl.pallas_call(
        kernel,
        out_shape=jax.ShapeDtypeStruct((nblk, 8, LANE), jnp.float32),
        grid_spec=pltpu.PrefetchScalarGridSpec(
            num_scalar_prefetch=0,
            grid=(nblk,),                                      # independent lane blocks
            in_specs=[pl.BlockSpec((T_pad, LANE), lambda i: (0, i)),
                      pl.BlockSpec((T_pad, LANE), lambda i: (0, i))],
            out_specs=pl.BlockSpec((1, 8, LANE), lambda i: (i, 0, 0)),
            scratch_shapes=[pltpu.VMEM((ND, T_pad, LANE), q_dtype),
                            pltpu.VMEM((ND, T_pad, LANE), q_dtype)],
        ),
        compiler_params=pltpu.CompilerParams(
            dimension_semantics=("parallel",),                 # lane blocks shard across TCs (v7x)
            vmem_limit_bytes=vmem_limit,
        ),
    )(tgt_p, out_rev)

    # final reductions over lane blocks in plain XLA (tiny), padded lanes masked out
    lane_mask = (jnp.arange(BKp) < BK).astype(jnp.float32)
    shape_per_lane = partials[:, 0, :].reshape(-1)
    temp_per_lane = partials[:, 1, :].reshape(-1)
    loss_shape = jnp.sum(shape_per_lane * lane_mask) / BK
    loss_temporal = jnp.sum(temp_per_lane * lane_mask) / (BK * T * T)
    return alpha * loss_shape + (1.0 - alpha) * loss_temporal


# ------------------------------------------------------------------------------- glue ---

def sample_top_pixels_modified(true, pred, mask, pixels=50):
    """Matches the PyTorch helper: top-`pixels` mask locations, gathered & reshaped."""
    # TODO(synk): top-k + data-dependent gather stays in plain JAX (lax.top_k /
    # take_along_axis) — a Pallas DMA-gather is not worthwhile at this size.
    B, T = true.shape[0], true.shape[1]
    H, W = true.shape[3], true.shape[4]
    mask_flat = mask.reshape(B, -1)
    _, top_idx = jax.lax.top_k(mask_flat, pixels)                       # (B, pixels)
    idx = jnp.broadcast_to(top_idx[:, None, None, :], (B, T, 1, pixels))
    true_flat = true.reshape(B, T, 1, H * W)
    pred_flat = pred.reshape(B, T, 1, H * W)
    g_true = jnp.take_along_axis(true_flat, idx, axis=-1)               # (B, T, 1, pixels)
    g_pred = jnp.take_along_axis(pred_flat, idx, axis=-1)
    sampled_true = g_true.reshape(-1, T, 1)                             # (B*pixels, T, 1)
    sampled_pred = g_pred.reshape(-1, T, 1)
    return sampled_true, sampled_pred


class DilateLoss:
    """JAX / Pallas re-implementation of openstl DilateLoss.forward."""

    def __init__(self, alpha=0.1, gamma=0.001):
        self.alpha = alpha
        self.gamma = gamma

    def __call__(self, pred, true, static_ch):
        sampled_true, sampled_pred = sample_top_pixels_modified(true, pred, static_ch, pixels=50)
        # kernel layout: (T, BK) with BK = B*50 on the lane axis
        tgt_tk = jnp.transpose(sampled_true[:, :, 0], (1, 0)).astype(jnp.float32)
        out_tk = jnp.transpose(sampled_pred[:, :, 0], (1, 0)).astype(jnp.float32)
        return _dilate_loss_core(tgt_tk, out_tk, self.alpha, self.gamma)


# ------------------------------------------------------------------------------- main ---

if __name__ == "__main__":
    key = jax.random.PRNGKey(0)
    k1, k2, k3 = jax.random.split(key, 3)
    B, T, H, W = 2, 8, 16, 16
    pred = jax.random.normal(k1, (B, T, 1, H, W), dtype=jnp.float32)
    true = jax.random.normal(k2, (B, T, 1, H, W), dtype=jnp.float32)
    static_ch = jax.random.uniform(k3, (B, 1, 1, H, W), dtype=jnp.float32)

    loss_fn = DilateLoss(alpha=0.1, gamma=0.001)
    loss = loss_fn(pred, true, static_ch)
    jax.block_until_ready(loss)
    print("KERNEL_OK")
</pallas_src>

<mosaic_0001>
module attributes {stable_mosaic.version = 11 : i64} {
  func.func @kernel(%arg0: i32, %arg1: memref<8x128xf32, #tpu.memory_space<vmem>>, %arg2: memref<8x128xf32, #tpu.memory_space<vmem>>, %arg3: memref<1x8x128xf32, #tpu.memory_space<vmem>>, %arg4: memref<15x8x128xf32, #tpu.memory_space<vmem>>, %arg5: memref<15x8x128xf32, #tpu.memory_space<vmem>>) attributes {dimension_semantics = [#tpu.dimension_semantics<parallel>], iteration_bounds = array<i64: 1>, scalar_prefetch = 0 : i64, scratch_operands = 2 : i64, tpu.core_type = #tpu.core_type<tc>, window_params = [{transform_indices = @transform_0, window_bounds = array<i64: 8, 128>}, {transform_indices = @transform_1, window_bounds = array<i64: 8, 128>}, {transform_indices = @transform_2, window_bounds = array<i64: 1, 8, 128>}]} {
    %c0 = arith.constant 0 : index
    %c0_0 = arith.constant 0 : index
    %0 = vector.load %arg1[%c0, %c0_0] : memref<8x128xf32, #tpu.memory_space<vmem>>, vector<8x128xf32>
    %c0_1 = arith.constant 0 : index
    %c0_2 = arith.constant 0 : index
    %1 = vector.load %arg2[%c0_1, %c0_2] : memref<8x128xf32, #tpu.memory_space<vmem>>, vector<8x128xf32>
    %2 = arith.mulf %0, %0 : vector<8x128xf32>
    %3 = tpu.iota {dimensions = array<i32: 0>} : vector<8x128xi32>
    %c0_i32 = arith.constant 0 : i32
    %4 = vector.broadcast %c0_i32 : i32 to vector<8x128xi32>
    %5 = arith.cmpi eq, %3, %4 : vector<8x128xi32>
    %c7_i32 = arith.constant 7 : i32
    %6 = vector.broadcast %c7_i32 : i32 to vector<8x128xi32>
    %7 = arith.cmpi eq, %3, %6 : vector<8x128xi32>
    %c7_i32_3 = arith.constant 7 : i32
    %8 = vector.broadcast %c7_i32_3 : i32 to vector<8x128xi32>
    %9 = arith.cmpi eq, %3, %8 : vector<8x128xi32>
    %c2_i32 = arith.constant 2 : i32
    %10 = vector.broadcast %c2_i32 : i32 to vector<8x128xi32>
    %11 = arith.muli %10, %3 : vector<8x128xi32>
    %12 = arith.sitofp %11 : vector<8x128xi32> to vector<8x128xf32>
    %cst = arith.constant 1.000000e+10 : f32
    %13 = vector.broadcast %cst : f32 to vector<8x128xf32>
    %c1_i32 = arith.constant 1 : i32
    %14 = tpu.dynamic_rotate %1 by %c1_i32 dim 0 : vector<8x128xf32>, i32 -> vector<8x128xf32>
    %15 = arith.mulf %14, %14 : vector<8x128xf32>
    %16 = arith.addf %2, %15 : vector<8x128xf32>
    %cst_4 = arith.constant 2.000000e+00 : f32
    %17 = vector.broadcast %cst_4 : f32 to vector<8x128xf32>
    %18 = arith.mulf %17, %0 : vector<8x128xf32>
    %19 = arith.mulf %18, %14 : vector<8x128xf32>
    %20 = arith.subf %16, %19 : vector<8x128xf32>
    %cst_5 = arith.constant 0.000000e+00 : f32
    %21 = vector.broadcast %cst_5 : f32 to vector<8x128xf32>
    %22 = arith.maximumf %20, %21 : vector<8x128xf32>
    %c2_i32_6 = arith.constant 2 : i32
    %c2_i32_7 = arith.constant 2 : i32
    %23 = arith.cmpi eq, %c2_i32_6, %c2_i32_7 : i32
    %cst_8 = arith.constant 0.000000e+00 : f32
    %cst_9 = arith.constant 1.000000e+10 : f32
    %24 = arith.select %23, %cst_8, %cst_9 : f32
    %c1_i32_10 = arith.constant 1 : i32
    %25 = tpu.dynamic_rotate %13 by %c1_i32_10 dim 0 : vector<8x128xf32>, i32 -> vector<8x128xf32>
    %26 = vector.broadcast %24 : f32 to vector<8x128xf32>
    %27 = arith.select %5, %26, %25 : vector<8x128xi1>, vector<8x128xf32>
    %c1_i32_11 = arith.constant 1 : i32
    %28 = tpu.dynamic_rotate %13 by %c1_i32_11 dim 0 : vector<8x128xf32>, i32 -> vector<8x128xf32>
    %cst_12 = arith.constant 1.000000e+10 : f32
    %29 = vector.broadcast %cst_12 : f32 to vector<8x128xf32>
    %30 = arith.select %5, %29, %28 : vector<8x128xi1>, vector<8x128xf32>
    %cst_13 = arith.constant 0.000000e+00 : f32
    %31 = vector.broadcast %cst_13 : f32 to vector<8x128xf32>
    %32 = arith.subf %31, %13 : vector<8x128xf32>
    %cst_14 = arith.constant 0.000000e+00 : f32
    %33 = vector.broadcast %cst_14 : f32 to vector<8x128xf32>
    %34 = arith.subf %33, %27 : vector<8x128xf32>
    %cst_15 = arith.constant 0.000000e+00 : f32
    %35 = vector.broadcast %cst_15 : f32 to vector<8x128xf32>
    %36 = arith.subf %35, %30 : vector<8x128xf32>
    %37 = arith.maximumf %32, %34 : vector<8x128xf32>
    %38 = arith.maximumf %37, %36 : vector<8x128xf32>
    %39 = arith.subf %32, %38 : vector<8x128xf32>
    %cst_16 = arith.constant 1.000000e+03 : f32
    %40 = vector.broadcast %cst_16 : f32 to vector<8x128xf32>
    %41 = arith.mulf %39, %40 : vector<8x128xf32>
    %42 = math.exp %41 : vector<8x128xf32>
    %43 = arith.subf %34, %38 : vector<8x128xf32>
    %cst_17 = arith.constant 1.000000e+03 : f32
    %44 = vector.broadcast %cst_17 : f32 to vector<8x128xf32>
    %45 = arith.mulf %43, %44 : vector<8x128xf32>
    %46 = math.exp %45 : vector<8x128xf32>
    %47 = arith.subf %36, %38 : vector<8x128xf32>
    %cst_18 = arith.constant 1.000000e+03 : f32
    %48 = vector.broadcast %cst_18 : f32 to vector<8x128xf32>
    %49 = arith.mulf %47, %48 : vector<8x128xf32>
    %50 = math.exp %49 : vector<8x128xf32>
    %51 = arith.addf %42, %46 : vector<8x128xf32>
    %52 = arith.addf %51, %50 : vector<8x128xf32>
    %c-7_i32 = arith.constant -7 : i32
    %c0_i32_19 = arith.constant 0 : i32
    %53 = arith.maxsi %c-7_i32, %c0_i32_19 : i32
    %54 = vector.broadcast %53 : i32 to vector<8x128xi32>
    %55 = arith.cmpi sge, %3, %54 : vector<8x128xi32>
    %c0_i32_20 = arith.constant 0 : i32
    %c7_i32_21 = arith.constant 7 : i32
    %56 = arith.minsi %c0_i32_20, %c7_i32_21 : i32
    %57 = vector.broadcast %56 : i32 to vector<8x128xi32>
    %58 = arith.cmpi sle, %3, %57 : vector<8x128xi32>
    %59 = arith.andi %55, %58 : vector<8x128xi1>
    %60 = tpu.reciprocal %52 {approx = true} : vector<8x128xf32> -> vector<8x128xf32>
    %61 = arith.extui %59 : vector<8x128xi1> to vector<8x128xi32>
    %62 = arith.sitofp %61 : vector<8x128xi32> to vector<8x128xf32>
    %63 = arith.mulf %60, %62 : vector<8x128xf32>
    %64 = math.log %52 : vector<8x128xf32>
    %cst_22 = arith.constant 1.000000e-03 : f32
    %65 = vector.broadcast %cst_22 : f32 to vector<8x128xf32>
    %66 = arith.mulf %65, %64 : vector<8x128xf32>
    %67 = arith.addf %66, %38 : vector<8x128xf32>
    %cst_23 = arith.constant 0.000000e+00 : f32
    %68 = vector.broadcast %cst_23 : f32 to vector<8x128xf32>
    %69 = arith.subf %68, %67 : vector<8x128xf32>
    %70 = arith.mulf %42, %63 : vector<8x128xf32>
    %c0_24 = arith.constant 0 : index
    %c0_25 = arith.constant 0 : index
    %c0_26 = arith.constant 0 : index
    %71 = vector.load %arg4[%c0_24, %c0_25, %c0_26] : memref<15x8x128xf32, #tpu.memory_space<vmem>>, vector<1x8x128xf32>
    %72 = vector.shape_cast %71 : vector<1x8x128xf32> to vector<8x128xf32>
    %73 = vector.shape_cast %70 : vector<8x128xf32> to vector<1x8x128xf32>
    tpu.vector_store %arg4[%c0_24, %c0_25, %c0_26], %73 {strides = array<i32>} : memref<15x8x128xf32, #tpu.memory_space<vmem>>, vector<1x8x128xf32>,
    %74 = arith.mulf %46, %63 : vector<8x128xf32>
    %c0_27 = arith.constant 0 : index
    %c0_28 = arith.constant 0 : index
    %c0_29 = arith.constant 0 : index
    %75 = vector.load %arg5[%c0_27, %c0_28, %c0_29] : memref<15x8x128xf32, #tpu.memory_space<vmem>>, vector<1x8x128xf32>
    %76 = vector.shape_cast %75 : vector<1x8x128xf32> to vector<8x128xf32>
    %77 = vector.shape_cast %74 : vector<8x128xf32> to vector<1x8x128xf32>
    tpu.vector_store %arg5[%c0_27, %c0_28, %c0_29], %77 {strides = array<i32>} : memref<15x8x128xf32, #tpu.memory_space<vmem>>, vector<1x8x128xf32>,
    %78 = arith.addf %22, %69 : vector<8x128xf32>
    %cst_30 = arith.constant 1.000000e+10 : f32
    %79 = vector.broadcast %cst_30 : f32 to vector<8x128xf32>
    %80 = arith.select %59, %78, %79 : vector<8x128xi1>, vector<8x128xf32>
    %c2_i32_31 = arith.constant 2 : i32
    %81 = tpu.dynamic_rotate %1 by %c2_i32_31 dim 0 : vector<8x128xf32>, i32 -> vector<8x128xf32>
    %82 = arith.mulf %81, %81 : vector<8x128xf32>
    %83 = arith.addf %2, %82 : vector<8x128xf32>
    %cst_32 = arith.constant 2.000000e+00 : f32
    %84 = vector.broadcast %cst_32 : f32 to vector<8x128xf32>
    %85 = arith.mulf %84, %0 : vector<8x128xf32>
    %86 = arith.mulf %85, %81 : vector<8x128xf32>
    %87 = arith.subf %83, %86 : vector<8x128xf32>
    %cst_33 = arith.constant 0.000000e+00 : f32
    %88 = vector.broadcast %cst_33 : f32 to vector<8x128xf32>
    %89 = arith.maximumf %87, %88 : vector<8x128xf32>
    %c3_i32 = arith.constant 3 : i32
    %c2_i32_34 = arith.constant 2 : i32
    %90 = arith.cmpi eq, %c3_i32, %c2_i32_34 : i32
    %cst_35 = arith.constant 0.000000e+00 : f32
    %cst_36 = arith.constant 1.000000e+10 : f32
    %91 = arith.select %90, %cst_35, %cst_36 : f32
    %c1_i32_37 = arith.constant 1 : i32
    %92 = tpu.dynamic_rotate %13 by %c1_i32_37 dim 0 : vector<8x128xf32>, i32 -> vector<8x128xf32>
    %93 = vector.broadcast %91 : f32 to vector<8x128xf32>
    %94 = arith.select %5, %93, %92 : vector<8x128xi1>, vector<8x128xf32>
    %c1_i32_38 = arith.constant 1 : i32
    %95 = tpu.dynamic_rotate %80 by %c1_i32_38 dim 0 : vector<8x128xf32>, i32 -> vector<8x128xf32>
    %cst_39 = arith.constant 1.000000e+10 : f32
    %96 = vector.broadcast %cst_39 : f32 to vector<8x128xf32>
    %97 = arith.select %5, %96, %95 : vector<8x128xi1>, vector<8x128xf32>
    %cst_40 = arith.constant 0.000000e+00 : f32
    %98 = vector.broadcast %cst_40 : f32 to vector<8x128xf32>
    %99 = arith.subf %98, %80 : vector<8x128xf32>
    %cst_41 = arith.constant 0.000000e+00 : f32
    %100 = vector.broadcast %cst_41 : f32 to vector<8x128xf32>
    %101 = arith.subf %100, %94 : vector<8x128xf32>
    %cst_42 = arith.constant 0.000000e+00 : f32
    %102 = vector.broadcast %cst_42 : f32 to vector<8x128xf32>
    %103 = arith.subf %102, %97 : vector<8x128xf32>
    %104 = arith.maximumf %99, %101 : vector<8x128xf32>
    %105 = arith.maximumf %104, %103 : vector<8x128xf32>
    %106 = arith.subf %99, %105 : vector<8x128xf32>
    %cst_43 = arith.constant 1.000000e+03 : f32
    %107 = vector.broadcast %cst_43 : f32 to vector<8x128xf32>
    %108 = arith.mulf %106, %107 : vector<8x128xf32>
    %109 = math.exp %108 : vector<8x128xf32>
    %110 = arith.subf %101, %105 : vector<8x128xf32>
    %cst_44 = arith.constant 1.000000e+03 : f32
    %111 = vector.broadcast %cst_44 : f32 to vector<8x128xf32>
    %112 = arith.mulf %110, %111 : vector<8x128xf32>
    %113 = math.exp %112 : vector<8x128xf32>
    %114 = arith.subf %103, %105 : vector<8x128xf32>
    %cst_45 = arith.constant 1.000000e+03 : f32
    %115 = vector.broadcast %cst_45 : f32 to vector<8x128xf32>
    %116 = arith.mulf %114, %115 : vector<8x128xf32>
    %117 = math.exp %116 : vector<8x128xf32>
    %118 = arith.addf %109, %113 : vector<8x128xf32>
    %119 = arith.addf %118, %117 : vector<8x128xf32>
    %c-6_i32 = arith.constant -6 : i32
    %c0_i32_46 = arith.constant 0 : i32
    %120 = arith.maxsi %c-6_i32, %c0_i32_46 : i32
    %121 = vector.broadcast %120 : i32 to vector<8x128xi32>
    %122 = arith.cmpi sge, %3, %121 : vector<8x128xi32>
    %c1_i32_47 = arith.constant 1 : i32
    %c7_i32_48 = arith.constant 7 : i32
    %123 = arith.minsi %c1_i32_47, %c7_i32_48 : i32
    %124 = vector.broadcast %123 : i32 to vector<8x128xi32>
    %125 = arith.cmpi sle, %3, %124 : vector<8x128xi32>
    %126 = arith.andi %122, %125 : vector<8x128xi1>
    %127 = tpu.reciprocal %119 {approx = true} : vector<8x128xf32> -> vector<8x128xf32>
    %128 = arith.extui %126 : vector<8x128xi1> to vector<8x128xi32>
    %129 = arith.sitofp %128 : vector<8x128xi32> to vector<8x128xf32>
    %130 = arith.mulf %127, %129 : vector<8x128xf32>
    %131 = math.log %119 : vector<8x128xf32>
    %cst_49 = arith.constant 1.000000e-03 : f32
    %132 = vector.broadcast %cst_49 : f32 to vector<8x128xf32>
    %133 = arith.mulf %132, %131 : vector<8x128xf32>
    %134 = arith.addf %133, %105 : vector<8x128xf32>
    %cst_50 = arith.constant 0.000000e+00 : f32
    %135 = vector.broadcast %cst_50 : f32 to vector<8x128xf32>
    %136 = arith.subf %135, %134 : vector<8x128xf32>
    %137 = arith.mulf %109, %130 : vector<8x128xf32>
    %c1 = arith.constant 1 : index
    %c0_51 = arith.constant 0 : index
    %c0_52 = arith.constant 0 : index
    %138 = vector.load %arg4[%c1, %c0_51, %c0_52] : memref<15x8x128xf32, #tpu.memory_space<vmem>>, vector<1x8x128xf32>
    %139 = vector.shape_cast %138 : vector<1x8x128xf32> to vector<8x128xf32>
    %140 = vector.shape_cast %137 : vector<8x128xf32> to vector<1x8x128xf32>
    tpu.vector_store %arg4[%c1, %c0_51, %c0_52], %140 {strides = array<i32>} : memref<15x8x128xf32, #tpu.memory_space<vmem>>, vector<1x8x128xf32>,
    %141 = arith.mulf %113, %130 : vector<8x128xf32>
    %c1_53 = arith.constant 1 : index
    %c0_54 = arith.constant 0 : index
    %c0_55 = arith.constant 0 : index
    %142 = vector.load %arg5[%c1_53, %c0_54, %c0_55] : memref<15x8x128xf32, #tpu.memory_space<vmem>>, vector<1x8x128xf32>
    %143 = vector.shape_cast %142 : vector<1x8x128xf32> to vector<8x128xf32>
    %144 = vector.shape_cast %141 : vector<8x128xf32> to vector<1x8x128xf32>
    tpu.vector_store %arg5[%c1_53, %c0_54, %c0_55], %144 {strides = array<i32>} : memref<15x8x128xf32, #tpu.memory_space<vmem>>, vector<1x8x128xf32>,
    %145 = arith.addf %89, %136 : vector<8x128xf32>
    %cst_56 = arith.constant 1.000000e+10 : f32
    %146 = vector.broadcast %cst_56 : f32 to vector<8x128xf32>
    %147 = arith.select %126, %145, %146 : vector<8x128xi1>, vector<8x128xf32>
    %c3_i32_57 = arith.constant 3 : i32
    %148 = tpu.dynamic_rotate %1 by %c3_i32_57 dim 0 : vector<8x128xf32>, i32 -> vector<8x128xf32>
    %149 = arith.mulf %148, %148 : vector<8x128xf32>
    %150 = arith.addf %2, %149 : vector<8x128xf32>
    %cst_58 = arith.constant 2.000000e+00 : f32
    %151 = vector.broadcast %cst_58 : f32 to vector<8x128xf32>
    %152 = arith.mulf %151, %0 : vector<8x128xf32>
    %153 = arith.mulf %152, %148 : vector<8x128xf32>
    %154 = arith.subf %150, %153 : vector<8x128xf32>
    %cst_59 = arith.constant 0.000000e+00 : f32
    %155 = vector.broadcast %cst_59 : f32 to vector<8x128xf32>
    %156 = arith.maximumf %154, %155 : vector<8x128xf32>
    %c4_i32 = arith.constant 4 : i32
    %c2_i32_60 = arith.constant 2 : i32
    %157 = arith.cmpi eq, %c4_i32, %c2_i32_60 : i32
    %cst_61 = arith.constant 0.000000e+00 : f32
    %cst_62 = arith.constant 1.000000e+10 : f32
    %158 = arith.select %157, %cst_61, %cst_62 : f32
    %c1_i32_63 = arith.constant 1 : i32
    %159 = tpu.dynamic_rotate %80 by %c1_i32_63 dim 0 : vector<8x128xf32>, i32 -> vector<8x128xf32>
    %160 = vector.broadcast %158 : f32 to vector<8x128xf32>
    %161 = arith.select %5, %160, %159 : vector<8x128xi1>, vector<8x128xf32>
    %c1_i32_64 = arith.constant 1 : i32
    %162 = tpu.dynamic_rotate %147 by %c1_i32_64 dim 0 : vector<8x128xf32>, i32 -> vector<8x128xf32>
    %cst_65 = arith.constant 1.000000e+10 : f32
    %163 = vector.broadcast %cst_65 : f32 to vector<8x128xf32>
    %164 = arith.select %5, %163, %162 : vector<8x128xi1>, vector<8x128xf32>
    %cst_66 = arith.constant 0.000000e+00 : f32
    %165 = vector.broadcast %cst_66 : f32 to vector<8x128xf32>
    %166 = arith.subf %165, %147 : vector<8x128xf32>
    %cst_67 = arith.constant 0.000000e+00 : f32
    %167 = vector.broadcast %cst_67 : f32 to vector<8x128xf32>
    %168 = arith.subf %167, %161 : vector<8x128xf32>
    %cst_68 = arith.constant 0.000000e+00 : f32
    %169 = vector.broadcast %cst_68 : f32 to vector<8x128xf32>
    %170 = arith.subf %169, %164 : vector<8x128xf32>
    %171 = arith.maximumf %166, %168 : vector<8x128xf32>
    %172 = arith.maximumf %171, %170 : vector<8x128xf32>
    %173 = arith.subf %166, %172 : vector<8x128xf32>
    %cst_69 = arith.constant 1.000000e+03 : f32
    %174 = vector.broadcast %cst_69 : f32 to vector<8x128xf32>
    %175 = arith.mulf %173, %174 : vector<8x128xf32>
    %176 = math.exp %175 : vector<8x128xf32>
    %177 = arith.subf %168, %172 : vector<8x128xf32>
    %cst_70 = arith.constant 1.000000e+03 : f32
    %178 = vector.broadcast %cst_70 : f32 to vector<8x128xf32>
    %179 = arith.mulf %177, %178 : vector<8x128xf32>
    %180 = math.exp %179 : vector<8x128xf32>
    %181 = arith.subf %170, %172 : vector<8x128xf32>
    %cst_71 = arith.constant 1.000000e+03 : f32
    %182 = vector.broadcast %cst_71 : f32 to vector<8x128xf32>
    %183 = arith.mulf %181, %182 : vector<8x128xf32>
    %184 = math.exp %183 : vector<8x128xf32>
    %185 = arith.addf %176, %180 : vector<8x128xf32>
    %186 = arith.addf %185, %184 : vector<8x128xf32>
    %c-5_i32 = arith.constant -5 : i32
    %c0_i32_72 = arith.constant 0 : i32
    %187 = arith.maxsi %c-5_i32, %c0_i32_72 : i32
    %188 = vector.broadcast %187 : i32 to vector<8x128xi32>
    %189 = arith.cmpi sge, %3, %188 : vector<8x128xi32>
    %c2_i32_73 = arith.constant 2 : i32
    %c7_i32_74 = arith.constant 7 : i32
    %190 = arith.minsi %c2_i32_73, %c7_i32_74 : i32
    %191 = vector.broadcast %190 : i32 to vector<8x128xi32>
    %192 = arith.cmpi sle, %3, %191 : vector<8x128xi32>
    %193 = arith.andi %189, %192 : vector<8x128xi1>
    %194 = tpu.reciprocal %186 {approx = true} : vector<8x128xf32> -> vector<8x128xf32>
    %195 = arith.extui %193 : vector<8x128xi1> to vector<8x128xi32>
    %196 = arith.sitofp %195 : vector<8x128xi32> to vector<8x128xf32>
    %197 = arith.mulf %194, %196 : vector<8x128xf32>
    %198 = math.log %186 : vector<8x128xf32>
    %cst_75 = arith.constant 1.000000e-03 : f32
    %199 = vector.broadcast %cst_75 : f32 to vector<8x128xf32>
    %200 = arith.mulf %199, %198 : vector<8x128xf32>
    %201 = arith.addf %200, %172 : vector<8x128xf32>
    %cst_76 = arith.constant 0.000000e+00 : f32
    %202 = vector.broadcast %cst_76 : f32 to vector<8x128xf32>
    %203 = arith.subf %202, %201 : vector<8x128xf32>
    %204 = arith.mulf %176, %197 : vector<8x128xf32>
    %c2 = arith.constant 2 : index
    %c0_77 = arith.constant 0 : index
    %c0_78 = arith.constant 0 : index
    %205 = vector.load %arg4[%c2, %c0_77, %c0_78] : memref<15x8x128xf32, #tpu.memory_space<vmem>>, vector<1x8x128xf32>
    %206 = vector.shape_cast %205 : vector<1x8x128xf32> to vector<8x128xf32>
    %207 = vector.shape_cast %204 : vector<8x128xf32> to vector<1x8x128xf32>
    tpu.vector_store %arg4[%c2, %c0_77, %c0_78], %207 {strides = array<i32>} : memref<15x8x128xf32, #tpu.memory_space<vmem>>, vector<1x8x128xf32>,
    %208 = arith.mulf %180, %197 : vector<8x128xf32>
    %c2_79 = arith.constant 2 : index
    %c0_80 = arith.constant 0 : index
    %c0_81 = arith.constant 0 : index
    %209 = vector.load %arg5[%c2_79, %c0_80, %c0_81] : memref<15x8x128xf32, #tpu.memory_space<vmem>>, vector<1x8x128xf32>
    %210 = vector.shape_cast %209 : vector<1x8x128xf32> to vector<8x128xf32>
    %211 = vector.shape_cast %208 : vector<8x128xf32> to vector<1x8x128xf32>
    tpu.vector_store %arg5[%c2_79, %c0_80, %c0_81], %211 {strides = array<i32>} : memref<15x8x128xf32, #tpu.memory_space<vmem>>, vector<1x8x128xf32>,
    %212 = arith.addf %156, %203 : vector<8x128xf32>
    %cst_82 = arith.constant 1.000000e+10 : f32
    %213 = vector.broadcast %cst_82 : f32 to vector<8x128xf32>
    %214 = arith.select %193, %212, %213 : vector<8x128xi1>, vector<8x128xf32>
    %c4_i32_83 = arith.constant 4 : i32
    %215 = tpu.dynamic_rotate %1 by %c4_i32_83 dim 0 : vector<8x128xf32>, i32 -> vector<8x128xf32>
    %216 = arith.mulf %215, %215 : vector<8x128xf32>
    %217 = arith.addf %2, %216 : vector<8x128xf32>
    %cst_84 = arith.constant 2.000000e+00 : f32
    %218 = vector.broadcast %cst_84 : f32 to vector<8x128xf32>
    %219 = arith.mulf %218, %0 : vector<8x128xf32>
    %220 = arith.mulf %219, %215 : vector<8x128xf32>
    %221 = arith.subf %217, %220 : vector<8x128xf32>
    %cst_85 = arith.constant 0.000000e+00 : f32
    %222 = vector.broadcast %cst_85 : f32 to vector<8x128xf32>
    %223 = arith.maximumf %221, %222 : vector<8x128xf32>
    %c5_i32 = arith.constant 5 : i32
    %c2_i32_86 = arith.constant 2 : i32
    %224 = arith.cmpi eq, %c5_i32, %c2_i32_86 : i32
    %cst_87 = arith.constant 0.000000e+00 : f32
    %cst_88 = arith.constant 1.000000e+10 : f32
    %225 = arith.select %224, %cst_87, %cst_88 : f32
    %c1_i32_89 = arith.constant 1 : i32
    %226 = tpu.dynamic_rotate %147 by %c1_i32_89 dim 0 : vector<8x128xf32>, i32 -> vector<8x128xf32>
    %227 = vector.broadcast %225 : f32 to vector<8x128xf32>
    %228 = arith.select %5, %227, %226 : vector<8x128xi1>, vector<8x128xf32>
    %c1_i32_90 = arith.constant 1 : i32
    %229 = tpu.dynamic_rotate %214 by %c1_i32_90 dim 0 : vector<8x128xf32>, i32 -> vector<8x128xf32>
    %cst_91 = arith.constant 1.000000e+10 : f32
    %230 = vector.broadcast %cst_91 : f32 to vector<8x128xf32>
    %231 = arith.select %5, %230, %229 : vector<8x128xi1>, vector<8x128xf32>
    %cst_92 = arith.constant 0.000000e+00 : f32
    %232 = vector.broadcast %cst_92 : f32 to vector<8x128xf32>
    %233 = arith.subf %232, %214 : vector<8x128xf32>
    %cst_93 = arith.constant 0.000000e+00 : f32
    %234 = vector.broadcast %cst_93 : f32 to vector<8x128xf32>
    %235 = arith.subf %234, %228 : vector<8x128xf32>
    %cst_94 = arith.constant 0.000000e+00 : f32
    %236 = vector.broadcast %cst_94 : f32 to vector<8x128xf32>
    %237 = arith.subf %236, %231 : vector<8x128xf32>
    %238 = arith.maximumf %233, %235 : vector<8x128xf32>
    %239 = arith.maximumf %238, %237 : vector<8x128xf32>
    %240 = arith.subf %233, %239 : vector<8x128xf32>
    %cst_95 = arith.constant 1.000000e+03 : f32
    %241 = vector.broadcast %cst_95 : f32 to vector<8x128xf32>
    %242 = arith.mulf %240, %241 : vector<8x128xf32>
    %243 = math.exp %242 : vector<8x128xf32>
    %244 = arith.subf %235, %239 : vector<8x128xf32>
    %cst_96 = arith.constant 1.000000e+03 : f32
    %245 = vector.broadcast %cst_96 : f32 to vector<8x128xf32>
    %246 = arith.mulf %244, %245 : vector<8x128xf32>
    %247 = math.exp %246 : vector<8x128xf32>
    %248 = arith.subf %237, %239 : vector<8x128xf32>
    %cst_97 = arith.constant 1.000000e+03 : f32
    %249 = vector.broadcast %cst_97 : f32 to vector<8x128xf32>
    %250 = arith.mulf %248, %249 : vector<8x128xf32>
    %251 = math.exp %250 : vector<8x128xf32>
    %252 = arith.addf %243, %247 : vector<8x128xf32>
    %253 = arith.addf %252, %251 : vector<8x128xf32>
    %c-4_i32 = arith.constant -4 : i32
    %c0_i32_98 = arith.constant 0 : i32
    %254 = arith.maxsi %c-4_i32, %c0_i32_98 : i32
    %255 = vector.broadcast %254 : i32 to vector<8x128xi32>
    %256 = arith.cmpi sge, %3, %255 : vector<8x128xi32>
    %c3_i32_99 = arith.constant 3 : i32
    %c7_i32_100 = arith.constant 7 : i32
    %257 = arith.minsi %c3_i32_99, %c7_i32_100 : i32
    %258 = vector.broadcast %257 : i32 to vector<8x128xi32>
    %259 = arith.cmpi sle, %3, %258 : vector<8x128xi32>
    %260 = arith.andi %256, %259 : vector<8x128xi1>
    %261 = tpu.reciprocal %253 {approx = true} : vector<8x128xf32> -> vector<8x128xf32>
    %262 = arith.extui %260 : vector<8x128xi1> to vector<8x128xi32>
    %263 = arith.sitofp %262 : vector<8x128xi32> to vector<8x128xf32>
    %264 = arith.mulf %261, %263 : vector<8x128xf32>
    %265 = math.log %253 : vector<8x128xf32>
    %cst_101 = arith.constant 1.000000e-03 : f32
    %266 = vector.broadcast %cst_101 : f32 to vector<8x128xf32>
    %267 = arith.mulf %266, %265 : vector<8x128xf32>
    %268 = arith.addf %267, %239 : vector<8x128xf32>
    %cst_102 = arith.constant 0.000000e+00 : f32
    %269 = vector.broadcast %cst_102 : f32 to vector<8x128xf32>
    %270 = arith.subf %269, %268 : vector<8x128xf32>
    %271 = arith.mulf %243, %264 : vector<8x128xf32>
    %c3 = arith.constant 3 : index
    %c0_103 = arith.constant 0 : index
    %c0_104 = arith.constant 0 : index
    %272 = vector.load %arg4[%c3, %c0_103, %c0_104] : memref<15x8x128xf32, #tpu.memory_space<vmem>>, vector<1x8x128xf32>
    %273 = vector.shape_cast %272 : vector<1x8x128xf32> to vector<8x128xf32>
    %274 = vector.shape_cast %271 : vector<8x128xf32> to vector<1x8x128xf32>
    tpu.vector_store %arg4[%c3, %c0_103, %c0_104], %274 {strides = array<i32>} : memref<15x8x128xf32, #tpu.memory_space<vmem>>, vector<1x8x128xf32>,
    %275 = arith.mulf %247, %264 : vector<8x128xf32>
    %c3_105 = arith.constant 3 : index
    %c0_106 = arith.constant 0 : index
    %c0_107 = arith.constant 0 : index
    %276 = vector.load %arg5[%c3_105, %c0_106, %c0_107] : memref<15x8x128xf32, #tpu.memory_space<vmem>>, vector<1x8x128xf32>
    %277 = vector.shape_cast %276 : vector<1x8x128xf32> to vector<8x128xf32>
    %278 = vector.shape_cast %275 : vector<8x128xf32> to vector<1x8x128xf32>
    tpu.vector_store %arg5[%c3_105, %c0_106, %c0_107], %278 {strides = array<i32>} : memref<15x8x128xf32, #tpu.memory_space<vmem>>, vector<1x8x128xf32>,
    %279 = arith.addf %223, %270 : vector<8x128xf32>
    %cst_108 = arith.constant 1.000000e+10 : f32
    %280 = vector.broadcast %cst_108 : f32 to vector<8x128xf32>
    %281 = arith.select %260, %279, %280 : vector<8x128xi1>, vector<8x128xf32>
    %c5_i32_109 = arith.constant 5 : i32
    %282 = tpu.dynamic_rotate %1 by %c5_i32_109 dim 0 : vector<8x128xf32>, i32 -> vector<8x128xf32>
    %283 = arith.mulf %282, %282 : vector<8x128xf32>
    %284 = arith.addf %2, %283 : vector<8x128xf32>
    %cst_110 = arith.constant 2.000000e+00 : f32
    %285 = vector.broadcast %cst_110 : f32 to vector<8x128xf32>
    %286 = arith.mulf %285, %0 : vector<8x128xf32>
    %287 = arith.mulf %286, %282 : vector<8x128xf32>
    %288 = arith.subf %284, %287 : vector<8x128xf32>
    %cst_111 = arith.constant 0.000000e+00 : f32
    %289 = vector.broadcast %cst_111 : f32 to vector<8x128xf32>
    %290 = arith.maximumf %288, %289 : vector<8x128xf32>
    %c6_i32 = arith.constant 6 : i32
    %c2_i32_112 = arith.constant 2 : i32
    %291 = arith.cmpi eq, %c6_i32, %c2_i32_112 : i32
    %cst_113 = arith.constant 0.000000e+00 : f32
    %cst_114 = arith.constant 1.000000e+10 : f32
    %292 = arith.select %291, %cst_113, %cst_114 : f32
    %c1_i32_115 = arith.constant 1 : i32
    %293 = tpu.dynamic_rotate %214 by %c1_i32_115 dim 0 : vector<8x128xf32>, i32 -> vector<8x128xf32>
    %294 = vector.broadcast %292 : f32 to vector<8x128xf32>
    %295 = arith.select %5, %294, %293 : vector<8x128xi1>, vector<8x128xf32>
    %c1_i32_116 = arith.constant 1 : i32
    %296 = tpu.dynamic_rotate %281 by %c1_i32_116 dim 0 : vector<8x128xf32>, i32 -> vector<8x128xf32>
    %cst_117 = arith.constant 1.000000e+10 : f32
    %297 = vector.broadcast %cst_117 : f32 to vector<8x128xf32>
    %298 = arith.select %5, %297, %296 : vector<8x128xi1>, vector<8x128xf32>
    %cst_118 = arith.constant 0.000000e+00 : f32
    %299 = vector.broadcast %cst_118 : f32 to vector<8x128xf32>
    %300 = arith.subf %299, %281 : vector<8x128xf32>
    %cst_119 = arith.constant 0.000000e+00 : f32
    %301 = vector.broadcast %cst_119 : f32 to vector<8x128xf32>
    %302 = arith.subf %301, %295 : vector<8x128xf32>
    %cst_120 = arith.constant 0.000000e+00 : f32
    %303 = vector.broadcast %cst_120 : f32 to vector<8x128xf32>
    %304 = arith.subf %303, %298 : vector<8x128xf32>
    %305 = arith.maximumf %300, %302 : vector<8x128xf32>
    %306 = arith.maximumf %305, %304 : vector<8x128xf32>
    %307 = arith.subf %300, %306 : vector<8x128xf32>
    %cst_121 = arith.constant 1.000000e+03 : f32
    %308 = vector.broadcast %cst_121 : f32 to vector<8x128xf32>
    %309 = arith.mulf %307, %308 : vector<8x128xf32>
    %310 = math.exp %309 : vector<8x128xf32>
    %311 = arith.subf %302, %306 : vector<8x128xf32>
    %cst_122 = arith.constant 1.000000e+03 : f32
    %312 = vector.broadcast %cst_122 : f32 to vector<8x128xf32>
    %313 = arith.mulf %311, %312 : vector<8x128xf32>
    %314 = math.exp %313 : vector<8x128xf32>
    %315 = arith.subf %304, %306 : vector<8x128xf32>
    %cst_123 = arith.constant 1.000000e+03 : f32
    %316 = vector.broadcast %cst_123 : f32 to vector<8x128xf32>
    %317 = arith.mulf %315, %316 : vector<8x128xf32>
    %318 = math.exp %317 : vector<8x128xf32>
    %319 = arith.addf %310, %314 : vector<8x128xf32>
    %320 = arith.addf %319, %318 : vector<8x128xf32>
    %c-3_i32 = arith.constant -3 : i32
    %c0_i32_124 = arith.constant 0 : i32
    %321 = arith.maxsi %c-3_i32, %c0_i32_124 : i32
    %322 = vector.broadcast %321 : i32 to vector<8x128xi32>
    %323 = arith.cmpi sge, %3, %322 : vector<8x128xi32>
    %c4_i32_125 = arith.constant 4 : i32
    %c7_i32_126 = arith.constant 7 : i32
    %324 = arith.minsi %c4_i32_125, %c7_i32_126 : i32
    %325 = vector.broadcast %324 : i32 to vector<8x128xi32>
    %326 = arith.cmpi sle, %3, %325 : vector<8x128xi32>
    %327 = arith.andi %323, %326 : vector<8x128xi1>
    %328 = tpu.reciprocal %320 {approx = true} : vector<8x128xf32> -> vector<8x128xf32>
    %329 = arith.extui %327 : vector<8x128xi1> to vector<8x128xi32>
    %330 = arith.sitofp %329 : vector<8x128xi32> to vector<8x128xf32>
    %331 = arith.mulf %328, %330 : vector<8x128xf32>
    %332 = math.log %320 : vector<8x128xf32>
    %cst_127 = arith.constant 1.000000e-03 : f32
    %333 = vector.broadcast %cst_127 : f32 to vector<8x128xf32>
    %334 = arith.mulf %333, %332 : vector<8x128xf32>
    %335 = arith.addf %334, %306 : vector<8x128xf32>
    %cst_128 = arith.constant 0.000000e+00 : f32
    %336 = vector.broadcast %cst_128 : f32 to vector<8x128xf32>
    %337 = arith.subf %336, %335 : vector<8x128xf32>
    %338 = arith.mulf %310, %331 : vector<8x128xf32>
    %c4 = arith.constant 4 : index
    %c0_129 = arith.constant 0 : index
    %c0_130 = arith.constant 0 : index
    %339 = vector.load %arg4[%c4, %c0_129, %c0_130] : memref<15x8x128xf32, #tpu.memory_space<vmem>>, vector<1x8x128xf32>
    %340 = vector.shape_cast %339 : vector<1x8x128xf32> to vector<8x128xf32>
    %341 = vector.shape_cast %338 : vector<8x128xf32> to vector<1x8x128xf32>
    tpu.vector_store %arg4[%c4, %c0_129, %c0_130], %341 {strides = array<i32>} : memref<15x8x128xf32, #tpu.memory_space<vmem>>, vector<1x8x128xf32>,
    %342 = arith.mulf %314, %331 : vector<8x128xf32>
    %c4_131 = arith.constant 4 : index
    %c0_132 = arith.constant 0 : index
    %c0_133 = arith.constant 0 : index
    %343 = vector.load %arg5[%c4_131, %c0_132, %c0_133] : memref<15x8x128xf32, #tpu.memory_space<vmem>>, vector<1x8x128xf32>
    %344 = vector.shape_cast %343 : vector<1x8x128xf32> to vector<8x128xf32>
    %345 = vector.shape_cast %342 : vector<8x128xf32> to vector<1x8x128xf32>
    tpu.vector_store %arg5[%c4_131, %c0_132, %c0_133], %345 {strides = array<i32>} : memref<15x8x128xf32, #tpu.memory_space<vmem>>, vector<1x8x128xf32>,
    %346 = arith.addf %290, %337 : vector<8x128xf32>
    %cst_134 = arith.constant 1.000000e+10 : f32
    %347 = vector.broadcast %cst_134 : f32 to vector<8x128xf32>
    %348 = arith.select %327, %346, %347 : vector<8x128xi1>, vector<8x128xf32>
    %c6_i32_135 = arith.constant 6 : i32
    %349 = tpu.dynamic_rotate %1 by %c6_i32_135 dim 0 : vector<8x128xf32>, i32 -> vector<8x128xf32>
    %350 = arith.mulf %349, %349 : vector<8x128xf32>
    %351 = arith.addf %2, %350 : vector<8x128xf32>
    %cst_136 = arith.constant 2.000000e+00 : f32
    %352 = vector.broadcast %cst_136 : f32 to vector<8x128xf32>
    %353 = arith.mulf %352, %0 : vector<8x128xf32>
    %354 = arith.mulf %353, %349 : vector<8x128xf32>
    %355 = arith.subf %351, %354 : vector<8x128xf32>
    %cst_137 = arith.constant 0.000000e+00 : f32
    %356 = vector.broadcast %cst_137 : f32 to vector<8x128xf32>
    %357 = arith.maximumf %355, %356 : vector<8x128xf32>
    %c7_i32_138 = arith.constant 7 : i32
    %c2_i32_139 = arith.constant 2 : i32
    %358 = arith.cmpi eq, %c7_i32_138, %c2_i32_139 : i32
    %cst_140 = arith.constant 0.000000e+00 : f32
    %cst_141 = arith.constant 1.000000e+10 : f32
    %359 = arith.select %358, %cst_140, %cst_141 : f32
    %c1_i32_142 = arith.constant 1 : i32
    %360 = tpu.dynamic_rotate %281 by %c1_i32_142 dim 0 : vector<8x128xf32>, i32 -> vector<8x128xf32>
    %361 = vector.broadcast %359 : f32 to vector<8x128xf32>
    %362 = arith.select %5, %361, %360 : vector<8x128xi1>, vector<8x128xf32>
    %c1_i32_143 = arith.constant 1 : i32
    %363 = tpu.dynamic_rotate %348 by %c1_i32_143 dim 0 : vector<8x128xf32>, i32 -> vector<8x128xf32>
    %cst_144 = arith.constant 1.000000e+10 : f32
    %364 = vector.broadcast %cst_144 : f32 to vector<8x128xf32>
    %365 = arith.select %5, %364, %363 : vector<8x128xi1>, vector<8x128xf32>
    %cst_145 = arith.constant 0.000000e+00 : f32
    %366 = vector.broadcast %cst_145 : f32 to vector<8x128xf32>
    %367 = arith.subf %366, %348 : vector<8x128xf32>
    %cst_146 = arith.constant 0.000000e+00 : f32
    %368 = vector.broadcast %cst_146 : f32 to vector<8x128xf32>
    %369 = arith.subf %368, %362 : vector<8x128xf32>
    %cst_147 = arith.constant 0.000000e+00 : f32
    %370 = vector.broadcast %cst_147 : f32 to vector<8x128xf32>
    %371 = arith.subf %370, %365 : vector<8x128xf32>
    %372 = arith.maximumf %367, %369 : vector<8x128xf32>
    %373 = arith.maximumf %372, %371 : vector<8x128xf32>
    %374 = arith.subf %367, %373 : vector<8x128xf32>
    %cst_148 = arith.constant 1.000000e+03 : f32
    %375 = vector.broadcast %cst_148 : f32 to vector<8x128xf32>
    %376 = arith.mulf %374, %375 : vector<8x128xf32>
    %377 = math.exp %376 : vector<8x128xf32>
    %378 = arith.subf %369, %373 : vector<8x128xf32>
    %cst_149 = arith.constant 1.000000e+03 : f32
    %379 = vector.broadcast %cst_149 : f32 to vector<8x128xf32>
    %380 = arith.mulf %378, %379 : vector<8x128xf32>
    %381 = math.exp %380 : vector<8x128xf32>
    %382 = arith.subf %371, %373 : vector<8x128xf32>
    %cst_150 = arith.constant 1.000000e+03 : f32
    %383 = vector.broadcast %cst_150 : f32 to vector<8x128xf32>
    %384 = arith.mulf %382, %383 : vector<8x128xf32>
    %385 = math.exp %384 : vector<8x128xf32>
    %386 = arith.addf %377, %381 : vector<8x128xf32>
    %387 = arith.addf %386, %385 : vector<8x128xf32>
    %c-2_i32 = arith.constant -2 : i32
    %c0_i32_151 = arith.constant 0 : i32
    %388 = arith.maxsi %c-2_i32, %c0_i32_151 : i32
    %389 = vector.broadcast %388 : i32 to vector<8x128xi32>
    %390 = arith.cmpi sge, %3, %389 : vector<8x128xi32>
    %c5_i32_152 = arith.constant 5 : i32
    %c7_i32_153 = arith.constant 7 : i32
    %391 = arith.minsi %c5_i32_152, %c7_i32_153 : i32
    %392 = vector.broadcast %391 : i32 to vector<8x128xi32>
    %393 = arith.cmpi sle, %3, %392 : vector<8x128xi32>
    %394 = arith.andi %390, %393 : vector<8x128xi1>
    %395 = tpu.reciprocal %387 {approx = true} : vector<8x128xf32> -> vector<8x128xf32>
    %396 = arith.extui %394 : vector<8x128xi1> to vector<8x128xi32>
    %397 = arith.sitofp %396 : vector<8x128xi32> to vector<8x128xf32>
    %398 = arith.mulf %395, %397 : vector<8x128xf32>
    %399 = math.log %387 : vector<8x128xf32>
    %cst_154 = arith.constant 1.000000e-03 : f32
    %400 = vector.broadcast %cst_154 : f32 to vector<8x128xf32>
    %401 = arith.mulf %400, %399 : vector<8x128xf32>
    %402 = arith.addf %401, %373 : vector<8x128xf32>
    %cst_155 = arith.constant 0.000000e+00 : f32
    %403 = vector.broadcast %cst_155 : f32 to vector<8x128xf32>
    %404 = arith.subf %403, %402 : vector<8x128xf32>
    %405 = arith.mulf %377, %398 : vector<8x128xf32>
    %c5 = arith.constant 5 : index
    %c0_156 = arith.constant 0 : index
    %c0_157 = arith.constant 0 : index
    %406 = vector.load %arg4[%c5, %c0_156, %c0_157] : memref<15x8x128xf32, #tpu.memory_space<vmem>>, vector<1x8x128xf32>
    %407 = vector.shape_cast %406 : vector<1x8x128xf32> to vector<8x128xf32>
    %408 = vector.shape_cast %405 : vector<8x128xf32> to vector<1x8x128xf32>
    tpu.vector_store %arg4[%c5, %c0_156, %c0_157], %408 {strides = array<i32>} : memref<15x8x128xf32, #tpu.memory_space<vmem>>, vector<1x8x128xf32>,
    %409 = arith.mulf %381, %398 : vector<8x128xf32>
    %c5_158 = arith.constant 5 : index
    %c0_159 = arith.constant 0 : index
    %c0_160 = arith.constant 0 : index
    %410 = vector.load %arg5[%c5_158, %c0_159, %c0_160] : memref<15x8x128xf32, #tpu.memory_space<vmem>>, vector<1x8x128xf32>
    %411 = vector.shape_cast %410 : vector<1x8x128xf32> to vector<8x128xf32>
    %412 = vector.shape_cast %409 : vector<8x128xf32> to vector<1x8x128xf32>
    tpu.vector_store %arg5[%c5_158, %c0_159, %c0_160], %412 {strides = array<i32>} : memref<15x8x128xf32, #tpu.memory_space<vmem>>, vector<1x8x128xf32>,
    %413 = arith.addf %357, %404 : vector<8x128xf32>
    %cst_161 = arith.constant 1.000000e+10 : f32
    %414 = vector.broadcast %cst_161 : f32 to vector<8x128xf32>
    %415 = arith.select %394, %413, %414 : vector<8x128xi1>, vector<8x128xf32>
    %c7_i32_162 = arith.constant 7 : i32
    %416 = tpu.dynamic_rotate %1 by %c7_i32_162 dim 0 : vector<8x128xf32>, i32 -> vector<8x128xf32>
    %417 = arith.mulf %416, %416 : vector<8x128xf32>
    %418 = arith.addf %2, %417 : vector<8x128xf32>
    %cst_163 = arith.constant 2.000000e+00 : f32
    %419 = vector.broadcast %cst_163 : f32 to vector<8x128xf32>
    %420 = arith.mulf %419, %0 : vector<8x128xf32>
    %421 = arith.mulf %420, %416 : vector<8x128xf32>
    %422 = arith.subf %418, %421 : vector<8x128xf32>
    %cst_164 = arith.constant 0.000000e+00 : f32
    %423 = vector.broadcast %cst_164 : f32 to vector<8x128xf32>
    %424 = arith.maximumf %422, %423 : vector<8x128xf32>
    %c8_i32 = arith.constant 8 : i32
    %c2_i32_165 = arith.constant 2 : i32
    %425 = arith.cmpi eq, %c8_i32, %c2_i32_165 : i32
    %cst_166 = arith.constant 0.000000e+00 : f32
    %cst_167 = arith.constant 1.000000e+10 : f32
    %426 = arith.select %425, %cst_166, %cst_167 : f32
    %c1_i32_168 = arith.constant 1 : i32
    %427 = tpu.dynamic_rotate %348 by %c1_i32_168 dim 0 : vector<8x128xf32>, i32 -> vector<8x128xf32>
    %428 = vector.broadcast %426 : f32 to vector<8x128xf32>
    %429 = arith.select %5, %428, %427 : vector<8x128xi1>, vector<8x128xf32>
    %c1_i32_169 = arith.constant 1 : i32
    %430 = tpu.dynamic_rotate %415 by %c1_i32_169 dim 0 : vector<8x128xf32>, i32 -> vector<8x128xf32>
    %cst_170 = arith.constant 1.000000e+10 : f32
    %431 = vector.broadcast %cst_170 : f32 to vector<8x128xf32>
    %432 = arith.select %5, %431, %430 : vector<8x128xi1>, vector<8x128xf32>
    %cst_171 = arith.constant 0.000000e+00 : f32
    %433 = vector.broadcast %cst_171 : f32 to vector<8x128xf32>
    %434 = arith.subf %433, %415 : vector<8x128xf32>
    %cst_172 = arith.constant 0.000000e+00 : f32
    %435 = vector.broadcast %cst_172 : f32 to vector<8x128xf32>
    %436 = arith.subf %435, %429 : vector<8x128xf32>
    %cst_173 = arith.constant 0.000000e+00 : f32
    %437 = vector.broadcast %cst_173 : f32 to vector<8x128xf32>
    %438 = arith.subf %437, %432 : vector<8x128xf32>
    %439 = arith.maximumf %434, %436 : vector<8x128xf32>
    %440 = arith.maximumf %439, %438 : vector<8x128xf32>
    %441 = arith.subf %434, %440 : vector<8x128xf32>
    %cst_174 = arith.constant 1.000000e+03 : f32
    %442 = vector.broadcast %cst_174 : f32 to vector<8x128xf32>
    %443 = arith.mulf %441, %442 : vector<8x128xf32>
    %444 = math.exp %443 : vector<8x128xf32>
    %445 = arith.subf %436, %440 : vector<8x128xf32>
    %cst_175 = arith.constant 1.000000e+03 : f32
    %446 = vector.broadcast %cst_175 : f32 to vector<8x128xf32>
    %447 = arith.mulf %445, %446 : vector<8x128xf32>
    %448 = math.exp %447 : vector<8x128xf32>
    %449 = arith.subf %438, %440 : vector<8x128xf32>
    %cst_176 = arith.constant 1.000000e+03 : f32
    %450 = vector.broadcast %cst_176 : f32 to vector<8x128xf32>
    %451 = arith.mulf %449, %450 : vector<8x128xf32>
    %452 = math.exp %451 : vector<8x128xf32>
    %453 = arith.addf %444, %448 : vector<8x128xf32>
    %454 = arith.addf %453, %452 : vector<8x128xf32>
    %c-1_i32 = arith.constant -1 : i32
    %c0_i32_177 = arith.constant 0 : i32
    %455 = arith.maxsi %c-1_i32, %c0_i32_177 : i32
    %456 = vector.broadcast %455 : i32 to vector<8x128xi32>
    %457 = arith.cmpi sge, %3, %456 : vector<8x128xi32>
    %c6_i32_178 = arith.constant 6 : i32
    %c7_i32_179 = arith.constant 7 : i32
    %458 = arith.minsi %c6_i32_178, %c7_i32_179 : i32
    %459 = vector.broadcast %458 : i32 to vector<8x128xi32>
    %460 = arith.cmpi sle, %3, %459 : vector<8x128xi32>
    %461 = arith.andi %457, %460 : vector<8x128xi1>
    %462 = tpu.reciprocal %454 {approx = true} : vector<8x128xf32> -> vector<8x128xf32>
    %463 = arith.extui %461 : vector<8x128xi1> to vector<8x128xi32>
    %464 = arith.sitofp %463 : vector<8x128xi32> to vector<8x128xf32>
    %465 = arith.mulf %462, %464 : vector<8x128xf32>
    %466 = math.log %454 : vector<8x128xf32>
    %cst_180 = arith.constant 1.000000e-03 : f32
    %467 = vector.broadcast %cst_180 : f32 to vector<8x128xf32>
    %468 = arith.mulf %467, %466 : vector<8x128xf32>
    %469 = arith.addf %468, %440 : vector<8x128xf32>
    %cst_181 = arith.constant 0.000000e+00 : f32
    %470 = vector.broadcast %cst_181 : f32 to vector<8x128xf32>
    %471 = arith.subf %470, %469 : vector<8x128xf32>
    %472 = arith.mulf %444, %465 : vector<8x128xf32>
    %c6 = arith.constant 6 : index
    %c0_182 = arith.constant 0 : index
    %c0_183 = arith.constant 0 : index
    %473 = vector.load %arg4[%c6, %c0_182, %c0_183] : memref<15x8x128xf32, #tpu.memory_space<vmem>>, vector<1x8x128xf32>
    %474 = vector.shape_cast %473 : vector<1x8x128xf32> to vector<8x128xf32>
    %475 = vector.shape_cast %472 : vector<8x128xf32> to vector<1x8x128xf32>
    tpu.vector_store %arg4[%c6, %c0_182, %c0_183], %475 {strides = array<i32>} : memref<15x8x128xf32, #tpu.memory_space<vmem>>, vector<1x8x128xf32>,
    %476 = arith.mulf %448, %465 : vector<8x128xf32>
    %c6_184 = arith.constant 6 : index
    %c0_185 = arith.constant 0 : index
    %c0_186 = arith.constant 0 : index
    %477 = vector.load %arg5[%c6_184, %c0_185, %c0_186] : memref<15x8x128xf32, #tpu.memory_space<vmem>>, vector<1x8x128xf32>
    %478 = vector.shape_cast %477 : vector<1x8x128xf32> to vector<8x128xf32>
    %479 = vector.shape_cast %476 : vector<8x128xf32> to vector<1x8x128xf32>
    tpu.vector_store %arg5[%c6_184, %c0_185, %c0_186], %479 {strides = array<i32>} : memref<15x8x128xf32, #tpu.memory_space<vmem>>, vector<1x8x128xf32>,
    %480 = arith.addf %424, %471 : vector<8x128xf32>
    %cst_187 = arith.constant 1.000000e+10 : f32
    %481 = vector.broadcast %cst_187 : f32 to vector<8x128xf32>
    %482 = arith.select %461, %480, %481 : vector<8x128xi1>, vector<8x128xf32>
    %483 = arith.mulf %1, %1 : vector<8x128xf32>
    %484 = arith.addf %2, %483 : vector<8x128xf32>
    %cst_188 = arith.constant 2.000000e+00 : f32
    %485 = vector.broadcast %cst_188 : f32 to vector<8x128xf32>
    %486 = arith.mulf %485, %0 : vector<8x128xf32>
    %487 = arith.mulf %486, %1 : vector<8x128xf32>
    %488 = arith.subf %484, %487 : vector<8x128xf32>
    %cst_189 = arith.constant 0.000000e+00 : f32
    %489 = vector.broadcast %cst_189 : f32 to vector<8x128xf32>
    %490 = arith.maximumf %488, %489 : vector<8x128xf32>
    %c9_i32 = arith.constant 9 : i32
    %c2_i32_190 = arith.constant 2 : i32
    %491 = arith.cmpi eq, %c9_i32, %c2_i32_190 : i32
    %cst_191 = arith.constant 0.000000e+00 : f32
    %cst_192 = arith.constant 1.000000e+10 : f32
    %492 = arith.select %491, %cst_191, %cst_192 : f32
    %c1_i32_193 = arith.constant 1 : i32
    %493 = tpu.dynamic_rotate %415 by %c1_i32_193 dim 0 : vector<8x128xf32>, i32 -> vector<8x128xf32>
    %494 = vector.broadcast %492 : f32 to vector<8x128xf32>
    %495 = arith.select %5, %494, %493 : vector<8x128xi1>, vector<8x128xf32>
    %c1_i32_194 = arith.constant 1 : i32
    %496 = tpu.dynamic_rotate %482 by %c1_i32_194 dim 0 : vector<8x128xf32>, i32 -> vector<8x128xf32>
    %cst_195 = arith.constant 1.000000e+10 : f32
    %497 = vector.broadcast %cst_195 : f32 to vector<8x128xf32>
    %498 = arith.select %5, %497, %496 : vector<8x128xi1>, vector<8x128xf32>
    %cst_196 = arith.constant 0.000000e+00 : f32
    %499 = vector.broadcast %cst_196 : f32 to vector<8x128xf32>
    %500 = arith.subf %499, %482 : vector<8x128xf32>
    %cst_197 = arith.constant 0.000000e+00 : f32
    %501 = vector.broadcast %cst_197 : f32 to vector<8x128xf32>
    %502 = arith.subf %501, %495 : vector<8x128xf32>
    %cst_198 = arith.constant 0.000000e+00 : f32
    %503 = vector.broadcast %cst_198 : f32 to vector<8x128xf32>
    %504 = arith.subf %503, %498 : vector<8x128xf32>
    %505 = arith.maximumf %500, %502 : vector<8x128xf32>
    %506 = arith.maximumf %505, %504 : vector<8x128xf32>
    %507 = arith.subf %500, %506 : vector<8x128xf32>
    %cst_199 = arith.constant 1.000000e+03 : f32
    %508 = vector.broadcast %cst_199 : f32 to vector<8x128xf32>
    %509 = arith.mulf %507, %508 : vector<8x128xf32>
    %510 = math.exp %509 : vector<8x128xf32>
    %511 = arith.subf %502, %506 : vector<8x128xf32>
    %cst_200 = arith.constant 1.000000e+03 : f32
    %512 = vector.broadcast %cst_200 : f32 to vector<8x128xf32>
    %513 = arith.mulf %511, %512 : vector<8x128xf32>
    %514 = math.exp %513 : vector<8x128xf32>
    %515 = arith.subf %504, %506 : vector<8x128xf32>
    %cst_201 = arith.constant 1.000000e+03 : f32
    %516 = vector.broadcast %cst_201 : f32 to vector<8x128xf32>
    %517 = arith.mulf %515, %516 : vector<8x128xf32>
    %518 = math.exp %517 : vector<8x128xf32>
    %519 = arith.addf %510, %514 : vector<8x128xf32>
    %520 = arith.addf %519, %518 : vector<8x128xf32>
    %c0_i32_202 = arith.constant 0 : i32
    %c0_i32_203 = arith.constant 0 : i32
    %521 = arith.maxsi %c0_i32_202, %c0_i32_203 : i32
    %522 = vector.broadcast %521 : i32 to vector<8x128xi32>
    %523 = arith.cmpi sge, %3, %522 : vector<8x128xi32>
    %c7_i32_204 = arith.constant 7 : i32
    %c7_i32_205 = arith.constant 7 : i32
    %524 = arith.minsi %c7_i32_204, %c7_i32_205 : i32
    %525 = vector.broadcast %524 : i32 to vector<8x128xi32>
    %526 = arith.cmpi sle, %3, %525 : vector<8x128xi32>
    %527 = arith.andi %523, %526 : vector<8x128xi1>
    %528 = tpu.reciprocal %520 {approx = true} : vector<8x128xf32> -> vector<8x128xf32>
    %529 = arith.extui %527 : vector<8x128xi1> to vector<8x128xi32>
    %530 = arith.sitofp %529 : vector<8x128xi32> to vector<8x128xf32>
    %531 = arith.mulf %528, %530 : vector<8x128xf32>
    %532 = math.log %520 : vector<8x128xf32>
    %cst_206 = arith.constant 1.000000e-03 : f32
    %533 = vector.broadcast %cst_206 : f32 to vector<8x128xf32>
    %534 = arith.mulf %533, %532 : vector<8x128xf32>
    %535 = arith.addf %534, %506 : vector<8x128xf32>
    %cst_207 = arith.constant 0.000000e+00 : f32
    %536 = vector.broadcast %cst_207 : f32 to vector<8x128xf32>
    %537 = arith.subf %536, %535 : vector<8x128xf32>
    %538 = arith.mulf %510, %531 : vector<8x128xf32>
    %c7 = arith.constant 7 : index
    %c0_208 = arith.constant 0 : index
    %c0_209 = arith.constant 0 : index
    %539 = vector.load %arg4[%c7, %c0_208, %c0_209] : memref<15x8x128xf32, #tpu.memory_space<vmem>>, vector<1x8x128xf32>
    %540 = vector.shape_cast %539 : vector<1x8x128xf32> to vector<8x128xf32>
    %541 = vector.shape_cast %538 : vector<8x128xf32> to vector<1x8x128xf32>
    tpu.vector_store %arg4[%c7, %c0_208, %c0_209], %541 {strides = array<i32>} : memref<15x8x128xf32, #tpu.memory_space<vmem>>, vector<1x8x128xf32>,
    %542 = arith.mulf %514, %531 : vector<8x128xf32>
    %c7_210 = arith.constant 7 : index
    %c0_211 = arith.constant 0 : index
    %c0_212 = arith.constant 0 : index
    %543 = vector.load %arg5[%c7_210, %c0_211, %c0_212] : memref<15x8x128xf32, #tpu.memory_space<vmem>>, vector<1x8x128xf32>
    %544 = vector.shape_cast %543 : vector<1x8x128xf32> to vector<8x128xf32>
    %545 = vector.shape_cast %542 : vector<8x128xf32> to vector<1x8x128xf32>
    tpu.vector_store %arg5[%c7_210, %c0_211, %c0_212], %545 {strides = array<i32>} : memref<15x8x128xf32, #tpu.memory_space<vmem>>, vector<1x8x128xf32>,
    %546 = arith.addf %490, %537 : vector<8x128xf32>
    %cst_213 = arith.constant 1.000000e+10 : f32
    %547 = vector.broadcast %cst_213 : f32 to vector<8x128xf32>
    %548 = arith.select %527, %546, %547 : vector<8x128xi1>, vector<8x128xf32>
    %c1_i32_214 = arith.constant 1 : i32
    %549 = tpu.dynamic_rotate %1 by %c1_i32_214 dim 0 : vector<8x128xf32>, i32 -> vector<8x128xf32>
    %550 = arith.mulf %549, %549 : vector<8x128xf32>
    %551 = arith.addf %2, %550 : vector<8x128xf32>
    %cst_215 = arith.constant 2.000000e+00 : f32
    %552 = vector.broadcast %cst_215 : f32 to vector<8x128xf32>
    %553 = arith.mulf %552, %0 : vector<8x128xf32>
    %554 = arith.mulf %553, %549 : vector<8x128xf32>
    %555 = arith.subf %551, %554 : vector<8x128xf32>
    %cst_216 = arith.constant 0.000000e+00 : f32
    %556 = vector.broadcast %cst_216 : f32 to vector<8x128xf32>
    %557 = arith.maximumf %555, %556 : vector<8x128xf32>
    %c10_i32 = arith.constant 10 : i32
    %c2_i32_217 = arith.constant 2 : i32
    %558 = arith.cmpi eq, %c10_i32, %c2_i32_217 : i32
    %cst_218 = arith.constant 0.000000e+00 : f32
    %cst_219 = arith.constant 1.000000e+10 : f32
    %559 = arith.select %558, %cst_218, %cst_219 : f32
    %c1_i32_220 = arith.constant 1 : i32
    %560 = tpu.dynamic_rotate %482 by %c1_i32_220 dim 0 : vector<8x128xf32>, i32 -> vector<8x128xf32>
    %561 = vector.broadcast %559 : f32 to vector<8x128xf32>
    %562 = arith.select %5, %561, %560 : vector<8x128xi1>, vector<8x128xf32>
    %c1_i32_221 = arith.constant 1 : i32
    %563 = tpu.dynamic_rotate %548 by %c1_i32_221 dim 0 : vector<8x128xf32>, i32 -> vector<8x128xf32>
    %cst_222 = arith.constant 1.000000e+10 : f32
    %564 = vector.broadcast %cst_222 : f32 to vector<8x128xf32>
    %565 = arith.select %5, %564, %563 : vector<8x128xi1>, vector<8x128xf32>
    %cst_223 = arith.constant 0.000000e+00 : f32
    %566 = vector.broadcast %cst_223 : f32 to vector<8x128xf32>
    %567 = arith.subf %566, %548 : vector<8x128xf32>
    %cst_224 = arith.constant 0.000000e+00 : f32
    %568 = vector.broadcast %cst_224 : f32 to vector<8x128xf32>
    %569 = arith.subf %568, %562 : vector<8x128xf32>
    %cst_225 = arith.constant 0.000000e+00 : f32
    %570 = vector.broadcast %cst_225 : f32 to vector<8x128xf32>
    %571 = arith.subf %570, %565 : vector<8x128xf32>
    %572 = arith.maximumf %567, %569 : vector<8x128xf32>
    %573 = arith.maximumf %572, %571 : vector<8x128xf32>
    %574 = arith.subf %567, %573 : vector<8x128xf32>
    %cst_226 = arith.constant 1.000000e+03 : f32
    %575 = vector.broadcast %cst_226 : f32 to vector<8x128xf32>
    %576 = arith.mulf %574, %575 : vector<8x128xf32>
    %577 = math.exp %576 : vector<8x128xf32>
    %578 = arith.subf %569, %573 : vector<8x128xf32>
    %cst_227 = arith.constant 1.000000e+03 : f32
    %579 = vector.broadcast %cst_227 : f32 to vector<8x128xf32>
    %580 = arith.mulf %578, %579 : vector<8x128xf32>
    %581 = math.exp %580 : vector<8x128xf32>
    %582 = arith.subf %571, %573 : vector<8x128xf32>
    %cst_228 = arith.constant 1.000000e+03 : f32
    %583 = vector.broadcast %cst_228 : f32 to vector<8x128xf32>
    %584 = arith.mulf %582, %583 : vector<8x128xf32>
    %585 = math.exp %584 : vector<8x128xf32>
    %586 = arith.addf %577, %581 : vector<8x128xf32>
    %587 = arith.addf %586, %585 : vector<8x128xf32>
    %c1_i32_229 = arith.constant 1 : i32
    %c0_i32_230 = arith.constant 0 : i32
    %588 = arith.maxsi %c1_i32_229, %c0_i32_230 : i32
    %589 = vector.broadcast %588 : i32 to vector<8x128xi32>
    %590 = arith.cmpi sge, %3, %589 : vector<8x128xi32>
    %c8_i32_231 = arith.constant 8 : i32
    %c7_i32_232 = arith.constant 7 : i32
    %591 = arith.minsi %c8_i32_231, %c7_i32_232 : i32
    %592 = vector.broadcast %591 : i32 to vector<8x128xi32>
    %593 = arith.cmpi sle, %3, %592 : vector<8x128xi32>
    %594 = arith.andi %590, %593 : vector<8x128xi1>
    %595 = tpu.reciprocal %587 {approx = true} : vector<8x128xf32> -> vector<8x128xf32>
    %596 = arith.extui %594 : vector<8x128xi1> to vector<8x128xi32>
    %597 = arith.sitofp %596 : vector<8x128xi32> to vector<8x128xf32>
    %598 = arith.mulf %595, %597 : vector<8x128xf32>
    %599 = math.log %587 : vector<8x128xf32>
    %cst_233 = arith.constant 1.000000e-03 : f32
    %600 = vector.broadcast %cst_233 : f32 to vector<8x128xf32>
    %601 = arith.mulf %600, %599 : vector<8x128xf32>
    %602 = arith.addf %601, %573 : vector<8x128xf32>
    %cst_234 = arith.constant 0.000000e+00 : f32
    %603 = vector.broadcast %cst_234 : f32 to vector<8x128xf32>
    %604 = arith.subf %603, %602 : vector<8x128xf32>
    %605 = arith.mulf %577, %598 : vector<8x128xf32>
    %c8 = arith.constant 8 : index
    %c0_235 = arith.constant 0 : index
    %c0_236 = arith.constant 0 : index
    %606 = vector.load %arg4[%c8, %c0_235, %c0_236] : memref<15x8x128xf32, #tpu.memory_space<vmem>>, vector<1x8x128xf32>
    %607 = vector.shape_cast %606 : vector<1x8x128xf32> to vector<8x128xf32>
    %608 = vector.shape_cast %605 : vector<8x128xf32> to vector<1x8x128xf32>
    tpu.vector_store %arg4[%c8, %c0_235, %c0_236], %608 {strides = array<i32>} : memref<15x8x128xf32, #tpu.memory_space<vmem>>, vector<1x8x128xf32>,
    %609 = arith.mulf %581, %598 : vector<8x128xf32>
    %c8_237 = arith.constant 8 : index
    %c0_238 = arith.constant 0 : index
    %c0_239 = arith.constant 0 : index
    %610 = vector.load %arg5[%c8_237, %c0_238, %c0_239] : memref<15x8x128xf32, #tpu.memory_space<vmem>>, vector<1x8x128xf32>
    %611 = vector.shape_cast %610 : vector<1x8x128xf32> to vector<8x128xf32>
    %612 = vector.shape_cast %609 : vector<8x128xf32> to vector<1x8x128xf32>
    tpu.vector_store %arg5[%c8_237, %c0_238, %c0_239], %612 {strides = array<i32>} : memref<15x8x128xf32, #tpu.memory_space<vmem>>, vector<1x8x128xf32>,
    %613 = arith.addf %557, %604 : vector<8x128xf32>
    %cst_240 = arith.constant 1.000000e+10 : f32
    %614 = vector.broadcast %cst_240 : f32 to vector<8x128xf32>
    %615 = arith.select %594, %613, %614 : vector<8x128xi1>, vector<8x128xf32>
    %c2_i32_241 = arith.constant 2 : i32
    %616 = tpu.dynamic_rotate %1 by %c2_i32_241 dim 0 : vector<8x128xf32>, i32 -> vector<8x128xf32>
    %617 = arith.mulf %616, %616 : vector<8x128xf32>
    %618 = arith.addf %2, %617 : vector<8x128xf32>
    %cst_242 = arith.constant 2.000000e+00 : f32
    %619 = vector.broadcast %cst_242 : f32 to vector<8x128xf32>
    %620 = arith.mulf %619, %0 : vector<8x128xf32>
    %621 = arith.mulf %620, %616 : vector<8x128xf32>
    %622 = arith.subf %618, %621 : vector<8x128xf32>
    %cst_243 = arith.constant 0.000000e+00 : f32
    %623 = vector.broadcast %cst_243 : f32 to vector<8x128xf32>
    %624 = arith.maximumf %622, %623 : vector<8x128xf32>
    %c11_i32 = arith.constant 11 : i32
    %c2_i32_244 = arith.constant 2 : i32
    %625 = arith.cmpi eq, %c11_i32, %c2_i32_244 : i32
    %cst_245 = arith.constant 0.000000e+00 : f32
    %cst_246 = arith.constant 1.000000e+10 : f32
    %626 = arith.select %625, %cst_245, %cst_246 : f32
    %c1_i32_247 = arith.constant 1 : i32
    %627 = tpu.dynamic_rotate %548 by %c1_i32_247 dim 0 : vector<8x128xf32>, i32 -> vector<8x128xf32>
    %628 = vector.broadcast %626 : f32 to vector<8x128xf32>
    %629 = arith.select %5, %628, %627 : vector<8x128xi1>, vector<8x128xf32>
    %c1_i32_248 = arith.constant 1 : i32
    %630 = tpu.dynamic_rotate %615 by %c1_i32_248 dim 0 : vector<8x128xf32>, i32 -> vector<8x128xf32>
    %cst_249 = arith.constant 1.000000e+10 : f32
    %631 = vector.broadcast %cst_249 : f32 to vector<8x128xf32>
    %632 = arith.select %5, %631, %630 : vector<8x128xi1>, vector<8x128xf32>
    %cst_250 = arith.constant 0.000000e+00 : f32
    %633 = vector.broadcast %cst_250 : f32 to vector<8x128xf32>
    %634 = arith.subf %633, %615 : vector<8x128xf32>
    %cst_251 = arith.constant 0.000000e+00 : f32
    %635 = vector.broadcast %cst_251 : f32 to vector<8x128xf32>
    %636 = arith.subf %635, %629 : vector<8x128xf32>
    %cst_252 = arith.constant 0.000000e+00 : f32
    %637 = vector.broadcast %cst_252 : f32 to vector<8x128xf32>
    %638 = arith.subf %637, %632 : vector<8x128xf32>
    %639 = arith.maximumf %634, %636 : vector<8x128xf32>
    %640 = arith.maximumf %639, %638 : vector<8x128xf32>
    %641 = arith.subf %634, %640 : vector<8x128xf32>
    %cst_253 = arith.constant 1.000000e+03 : f32
    %642 = vector.broadcast %cst_253 : f32 to vector<8x128xf32>
    %643 = arith.mulf %641, %642 : vector<8x128xf32>
    %644 = math.exp %643 : vector<8x128xf32>
    %645 = arith.subf %636, %640 : vector<8x128xf32>
    %cst_254 = arith.constant 1.000000e+03 : f32
    %646 = vector.broadcast %cst_254 : f32 to vector<8x128xf32>
    %647 = arith.mulf %645, %646 : vector<8x128xf32>
    %648 = math.exp %647 : vector<8x128xf32>
    %649 = arith.subf %638, %640 : vector<8x128xf32>
    %cst_255 = arith.constant 1.000000e+03 : f32
    %650 = vector.broadcast %cst_255 : f32 to vector<8x128xf32>
    %651 = arith.mulf %649, %650 : vector<8x128xf32>
    %652 = math.exp %651 : vector<8x128xf32>
    %653 = arith.addf %644, %648 : vector<8x128xf32>
    %654 = arith.addf %653, %652 : vector<8x128xf32>
    %c2_i32_256 = arith.constant 2 : i32
    %c0_i32_257 = arith.constant 0 : i32
    %655 = arith.maxsi %c2_i32_256, %c0_i32_257 : i32
    %656 = vector.broadcast %655 : i32 to vector<8x128xi32>
    %657 = arith.cmpi sge, %3, %656 : vector<8x128xi32>
    %c9_i32_258 = arith.constant 9 : i32
    %c7_i32_259 = arith.constant 7 : i32
    %658 = arith.minsi %c9_i32_258, %c7_i32_259 : i32
    %659 = vector.broadcast %658 : i32 to vector<8x128xi32>
    %660 = arith.cmpi sle, %3, %659 : vector<8x128xi32>
    %661 = arith.andi %657, %660 : vector<8x128xi1>
    %662 = tpu.reciprocal %654 {approx = true} : vector<8x128xf32> -> vector<8x128xf32>
    %663 = arith.extui %661 : vector<8x128xi1> to vector<8x128xi32>
    %664 = arith.sitofp %663 : vector<8x128xi32> to vector<8x128xf32>
    %665 = arith.mulf %662, %664 : vector<8x128xf32>
    %666 = math.log %654 : vector<8x128xf32>
    %cst_260 = arith.constant 1.000000e-03 : f32
    %667 = vector.broadcast %cst_260 : f32 to vector<8x128xf32>
    %668 = arith.mulf %667, %666 : vector<8x128xf32>
    %669 = arith.addf %668, %640 : vector<8x128xf32>
    %cst_261 = arith.constant 0.000000e+00 : f32
    %670 = vector.broadcast %cst_261 : f32 to vector<8x128xf32>
    %671 = arith.subf %670, %669 : vector<8x128xf32>
    %672 = arith.mulf %644, %665 : vector<8x128xf32>
    %c9 = arith.constant 9 : index
    %c0_262 = arith.constant 0 : index
    %c0_263 = arith.constant 0 : index
    %673 = vector.load %arg4[%c9, %c0_262, %c0_263] : memref<15x8x128xf32, #tpu.memory_space<vmem>>, vector<1x8x128xf32>
    %674 = vector.shape_cast %673 : vector<1x8x128xf32> to vector<8x128xf32>
    %675 = vector.shape_cast %672 : vector<8x128xf32> to vector<1x8x128xf32>
    tpu.vector_store %arg4[%c9, %c0_262, %c0_263], %675 {strides = array<i32>} : memref<15x8x128xf32, #tpu.memory_space<vmem>>, vector<1x8x128xf32>,
    %676 = arith.mulf %648, %665 : vector<8x128xf32>
    %c9_264 = arith.constant 9 : index
    %c0_265 = arith.constant 0 : index
    %c0_266 = arith.constant 0 : index
    %677 = vector.load %arg5[%c9_264, %c0_265, %c0_266] : memref<15x8x128xf32, #tpu.memory_space<vmem>>, vector<1x8x128xf32>
    %678 = vector.shape_cast %677 : vector<1x8x128xf32> to vector<8x128xf32>
    %679 = vector.shape_cast %676 : vector<8x128xf32> to vector<1x8x128xf32>
    tpu.vector_store %arg5[%c9_264, %c0_265, %c0_266], %679 {strides = array<i32>} : memref<15x8x128xf32, #tpu.memory_space<vmem>>, vector<1x8x128xf32>,
    %680 = arith.addf %624, %671 : vector<8x128xf32>
    %cst_267 = arith.constant 1.000000e+10 : f32
    %681 = vector.broadcast %cst_267 : f32 to vector<8x128xf32>
    %682 = arith.select %661, %680, %681 : vector<8x128xi1>, vector<8x128xf32>
    %c3_i32_268 = arith.constant 3 : i32
    %683 = tpu.dynamic_rotate %1 by %c3_i32_268 dim 0 : vector<8x128xf32>, i32 -> vector<8x128xf32>
    %684 = arith.mulf %683, %683 : vector<8x128xf32>
    %685 = arith.addf %2, %684 : vector<8x128xf32>
    %cst_269 = arith.constant 2.000000e+00 : f32
    %686 = vector.broadcast %cst_269 : f32 to vector<8x128xf32>
    %687 = arith.mulf %686, %0 : vector<8x128xf32>
    %688 = arith.mulf %687, %683 : vector<8x128xf32>
    %689 = arith.subf %685, %688 : vector<8x128xf32>
    %cst_270 = arith.constant 0.000000e+00 : f32
    %690 = vector.broadcast %cst_270 : f32 to vector<8x128xf32>
    %691 = arith.maximumf %689, %690 : vector<8x128xf32>
    %c12_i32 = arith.constant 12 : i32
    %c2_i32_271 = arith.constant 2 : i32
    %692 = arith.cmpi eq, %c12_i32, %c2_i32_271 : i32
    %cst_272 = arith.constant 0.000000e+00 : f32
    %cst_273 = arith.constant 1.000000e+10 : f32
    %693 = arith.select %692, %cst_272, %cst_273 : f32
    %c1_i32_274 = arith.constant 1 : i32
    %694 = tpu.dynamic_rotate %615 by %c1_i32_274 dim 0 : vector<8x128xf32>, i32 -> vector<8x128xf32>
    %695 = vector.broadcast %693 : f32 to vector<8x128xf32>
    %696 = arith.select %5, %695, %694 : vector<8x128xi1>, vector<8x128xf32>
    %c1_i32_275 = arith.constant 1 : i32
    %697 = tpu.dynamic_rotate %682 by %c1_i32_275 dim 0 : vector<8x128xf32>, i32 -> vector<8x128xf32>
    %cst_276 = arith.constant 1.000000e+10 : f32
    %698 = vector.broadcast %cst_276 : f32 to vector<8x128xf32>
    %699 = arith.select %5, %698, %697 : vector<8x128xi1>, vector<8x128xf32>
    %cst_277 = arith.constant 0.000000e+00 : f32
    %700 = vector.broadcast %cst_277 : f32 to vector<8x128xf32>
    %701 = arith.subf %700, %682 : vector<8x128xf32>
    %cst_278 = arith.constant 0.000000e+00 : f32
    %702 = vector.broadcast %cst_278 : f32 to vector<8x128xf32>
    %703 = arith.subf %702, %696 : vector<8x128xf32>
    %cst_279 = arith.constant 0.000000e+00 : f32
    %704 = vector.broadcast %cst_279 : f32 to vector<8x128xf32>
    %705 = arith.subf %704, %699 : vector<8x128xf32>
    %706 = arith.maximumf %701, %703 : vector<8x128xf32>
    %707 = arith.maximumf %706, %705 : vector<8x128xf32>
    %708 = arith.subf %701, %707 : vector<8x128xf32>
    %cst_280 = arith.constant 1.000000e+03 : f32
    %709 = vector.broadcast %cst_280 : f32 to vector<8x128xf32>
    %710 = arith.mulf %708, %709 : vector<8x128xf32>
    %711 = math.exp %710 : vector<8x128xf32>
    %712 = arith.subf %703, %707 : vector<8x128xf32>
    %cst_281 = arith.constant 1.000000e+03 : f32
    %713 = vector.broadcast %cst_281 : f32 to vector<8x128xf32>
    %714 = arith.mulf %712, %713 : vector<8x128xf32>
    %715 = math.exp %714 : vector<8x128xf32>
    %716 = arith.subf %705, %707 : vector<8x128xf32>
    %cst_282 = arith.constant 1.000000e+03 : f32
    %717 = vector.broadcast %cst_282 : f32 to vector<8x128xf32>
    %718 = arith.mulf %716, %717 : vector<8x128xf32>
    %719 = math.exp %718 : vector<8x128xf32>
    %720 = arith.addf %711, %715 : vector<8x128xf32>
    %721 = arith.addf %720, %719 : vector<8x128xf32>
    %c3_i32_283 = arith.constant 3 : i32
    %c0_i32_284 = arith.constant 0 : i32
    %722 = arith.maxsi %c3_i32_283, %c0_i32_284 : i32
    %723 = vector.broadcast %722 : i32 to vector<8x128xi32>
    %724 = arith.cmpi sge, %3, %723 : vector<8x128xi32>
    %c10_i32_285 = arith.constant 10 : i32
    %c7_i32_286 = arith.constant 7 : i32
    %725 = arith.minsi %c10_i32_285, %c7_i32_286 : i32
    %726 = vector.broadcast %725 : i32 to vector<8x128xi32>
    %727 = arith.cmpi sle, %3, %726 : vector<8x128xi32>
    %728 = arith.andi %724, %727 : vector<8x128xi1>
    %729 = tpu.reciprocal %721 {approx = true} : vector<8x128xf32> -> vector<8x128xf32>
    %730 = arith.extui %728 : vector<8x128xi1> to vector<8x128xi32>
    %731 = arith.sitofp %730 : vector<8x128xi32> to vector<8x128xf32>
    %732 = arith.mulf %729, %731 : vector<8x128xf32>
    %733 = math.log %721 : vector<8x128xf32>
    %cst_287 = arith.constant 1.000000e-03 : f32
    %734 = vector.broadcast %cst_287 : f32 to vector<8x128xf32>
    %735 = arith.mulf %734, %733 : vector<8x128xf32>
    %736 = arith.addf %735, %707 : vector<8x128xf32>
    %cst_288 = arith.constant 0.000000e+00 : f32
    %737 = vector.broadcast %cst_288 : f32 to vector<8x128xf32>
    %738 = arith.subf %737, %736 : vector<8x128xf32>
    %739 = arith.mulf %711, %732 : vector<8x128xf32>
    %c10 = arith.constant 10 : index
    %c0_289 = arith.constant 0 : index
    %c0_290 = arith.constant 0 : index
    %740 = vector.load %arg4[%c10, %c0_289, %c0_290] : memref<15x8x128xf32, #tpu.memory_space<vmem>>, vector<1x8x128xf32>
    %741 = vector.shape_cast %740 : vector<1x8x128xf32> to vector<8x128xf32>
    %742 = vector.shape_cast %739 : vector<8x128xf32> to vector<1x8x128xf32>
    tpu.vector_store %arg4[%c10, %c0_289, %c0_290], %742 {strides = array<i32>} : memref<15x8x128xf32, #tpu.memory_space<vmem>>, vector<1x8x128xf32>,
    %743 = arith.mulf %715, %732 : vector<8x128xf32>
    %c10_291 = arith.constant 10 : index
    %c0_292 = arith.constant 0 : index
    %c0_293 = arith.constant 0 : index
    %744 = vector.load %arg5[%c10_291, %c0_292, %c0_293] : memref<15x8x128xf32, #tpu.memory_space<vmem>>, vector<1x8x128xf32>
    %745 = vector.shape_cast %744 : vector<1x8x128xf32> to vector<8x128xf32>
    %746 = vector.shape_cast %743 : vector<8x128xf32> to vector<1x8x128xf32>
    tpu.vector_store %arg5[%c10_291, %c0_292, %c0_293], %746 {strides = array<i32>} : memref<15x8x128xf32, #tpu.memory_space<vmem>>, vector<1x8x128xf32>,
    %747 = arith.addf %691, %738 : vector<8x128xf32>
    %cst_294 = arith.constant 1.000000e+10 : f32
    %748 = vector.broadcast %cst_294 : f32 to vector<8x128xf32>
    %749 = arith.select %728, %747, %748 : vector<8x128xi1>, vector<8x128xf32>
    %c4_i32_295 = arith.constant 4 : i32
    %750 = tpu.dynamic_rotate %1 by %c4_i32_295 dim 0 : vector<8x128xf32>, i32 -> vector<8x128xf32>
    %751 = arith.mulf %750, %750 : vector<8x128xf32>
    %752 = arith.addf %2, %751 : vector<8x128xf32>
    %cst_296 = arith.constant 2.000000e+00 : f32
    %753 = vector.broadcast %cst_296 : f32 to vector<8x128xf32>
    %754 = arith.mulf %753, %0 : vector<8x128xf32>
    %755 = arith.mulf %754, %750 : vector<8x128xf32>
    %756 = arith.subf %752, %755 : vector<8x128xf32>
    %cst_297 = arith.constant 0.000000e+00 : f32
    %757 = vector.broadcast %cst_297 : f32 to vector<8x128xf32>
    %758 = arith.maximumf %756, %757 : vector<8x128xf32>
    %c13_i32 = arith.constant 13 : i32
    %c2_i32_298 = arith.constant 2 : i32
    %759 = arith.cmpi eq, %c13_i32, %c2_i32_298 : i32
    %cst_299 = arith.constant 0.000000e+00 : f32
    %cst_300 = arith.constant 1.000000e+10 : f32
    %760 = arith.select %759, %cst_299, %cst_300 : f32
    %c1_i32_301 = arith.constant 1 : i32
    %761 = tpu.dynamic_rotate %682 by %c1_i32_301 dim 0 : vector<8x128xf32>, i32 -> vector<8x128xf32>
    %762 = vector.broadcast %760 : f32 to vector<8x128xf32>
    %763 = arith.select %5, %762, %761 : vector<8x128xi1>, vector<8x128xf32>
    %c1_i32_302 = arith.constant 1 : i32
    %764 = tpu.dynamic_rotate %749 by %c1_i32_302 dim 0 : vector<8x128xf32>, i32 -> vector<8x128xf32>
    %cst_303 = arith.constant 1.000000e+10 : f32
    %765 = vector.broadcast %cst_303 : f32 to vector<8x128xf32>
    %766 = arith.select %5, %765, %764 : vector<8x128xi1>, vector<8x128xf32>
    %cst_304 = arith.constant 0.000000e+00 : f32
    %767 = vector.broadcast %cst_304 : f32 to vector<8x128xf32>
    %768 = arith.subf %767, %749 : vector<8x128xf32>
    %cst_305 = arith.constant 0.000000e+00 : f32
    %769 = vector.broadcast %cst_305 : f32 to vector<8x128xf32>
    %770 = arith.subf %769, %763 : vector<8x128xf32>
    %cst_306 = arith.constant 0.000000e+00 : f32
    %771 = vector.broadcast %cst_306 : f32 to vector<8x128xf32>
    %772 = arith.subf %771, %766 : vector<8x128xf32>
    %773 = arith.maximumf %768, %770 : vector<8x128xf32>
    %774 = arith.maximumf %773, %772 : vector<8x128xf32>
    %775 = arith.subf %768, %774 : vector<8x128xf32>
    %cst_307 = arith.constant 1.000000e+03 : f32
    %776 = vector.broadcast %cst_307 : f32 to vector<8x128xf32>
    %777 = arith.mulf %775, %776 : vector<8x128xf32>
    %778 = math.exp %777 : vector<8x128xf32>
    %779 = arith.subf %770, %774 : vector<8x128xf32>
    %cst_308 = arith.constant 1.000000e+03 : f32
    %780 = vector.broadcast %cst_308 : f32 to vector<8x128xf32>
    %781 = arith.mulf %779, %780 : vector<8x128xf32>
    %782 = math.exp %781 : vector<8x128xf32>
    %783 = arith.subf %772, %774 : vector<8x128xf32>
    %cst_309 = arith.constant 1.000000e+03 : f32
    %784 = vector.broadcast %cst_309 : f32 to vector<8x128xf32>
    %785 = arith.mulf %783, %784 : vector<8x128xf32>
    %786 = math.exp %785 : vector<8x128xf32>
    %787 = arith.addf %778, %782 : vector<8x128xf32>
    %788 = arith.addf %787, %786 : vector<8x128xf32>
    %c4_i32_310 = arith.constant 4 : i32
    %c0_i32_311 = arith.constant 0 : i32
    %789 = arith.maxsi %c4_i32_310, %c0_i32_311 : i32
    %790 = vector.broadcast %789 : i32 to vector<8x128xi32>
    %791 = arith.cmpi sge, %3, %790 : vector<8x128xi32>
    %c11_i32_312 = arith.constant 11 : i32
    %c7_i32_313 = arith.constant 7 : i32
    %792 = arith.minsi %c11_i32_312, %c7_i32_313 : i32
    %793 = vector.broadcast %792 : i32 to vector<8x128xi32>
    %794 = arith.cmpi sle, %3, %793 : vector<8x128xi32>
    %795 = arith.andi %791, %794 : vector<8x128xi1>
    %796 = tpu.reciprocal %788 {approx = true} : vector<8x128xf32> -> vector<8x128xf32>
    %797 = arith.extui %795 : vector<8x128xi1> to vector<8x128xi32>
    %798 = arith.sitofp %797 : vector<8x128xi32> to vector<8x128xf32>
    %799 = arith.mulf %796, %798 : vector<8x128xf32>
    %800 = math.log %788 : vector<8x128xf32>
    %cst_314 = arith.constant 1.000000e-03 : f32
    %801 = vector.broadcast %cst_314 : f32 to vector<8x128xf32>
    %802 = arith.mulf %801, %800 : vector<8x128xf32>
    %803 = arith.addf %802, %774 : vector<8x128xf32>
    %cst_315 = arith.constant 0.000000e+00 : f32
    %804 = vector.broadcast %cst_315 : f32 to vector<8x128xf32>
    %805 = arith.subf %804, %803 : vector<8x128xf32>
    %806 = arith.mulf %778, %799 : vector<8x128xf32>
    %c11 = arith.constant 11 : index
    %c0_316 = arith.constant 0 : index
    %c0_317 = arith.constant 0 : index
    %807 = vector.load %arg4[%c11, %c0_316, %c0_317] : memref<15x8x128xf32, #tpu.memory_space<vmem>>, vector<1x8x128xf32>
    %808 = vector.shape_cast %807 : vector<1x8x128xf32> to vector<8x128xf32>
    %809 = vector.shape_cast %806 : vector<8x128xf32> to vector<1x8x128xf32>
    tpu.vector_store %arg4[%c11, %c0_316, %c0_317], %809 {strides = array<i32>} : memref<15x8x128xf32, #tpu.memory_space<vmem>>, vector<1x8x128xf32>,
    %810 = arith.mulf %782, %799 : vector<8x128xf32>
    %c11_318 = arith.constant 11 : index
    %c0_319 = arith.constant 0 : index
    %c0_320 = arith.constant 0 : index
    %811 = vector.load %arg5[%c11_318, %c0_319, %c0_320] : memref<15x8x128xf32, #tpu.memory_space<vmem>>, vector<1x8x128xf32>
    %812 = vector.shape_cast %811 : vector<1x8x128xf32> to vector<8x128xf32>
    %813 = vector.shape_cast %810 : vector<8x128xf32> to vector<1x8x128xf32>
    tpu.vector_store %arg5[%c11_318, %c0_319, %c0_320], %813 {strides = array<i32>} : memref<15x8x128xf32, #tpu.memory_space<vmem>>, vector<1x8x128xf32>,
    %814 = arith.addf %758, %805 : vector<8x128xf32>
    %cst_321 = arith.constant 1.000000e+10 : f32
    %815 = vector.broadcast %cst_321 : f32 to vector<8x128xf32>
    %816 = arith.select %795, %814, %815 : vector<8x128xi1>, vector<8x128xf32>
    %c5_i32_322 = arith.constant 5 : i32
    %817 = tpu.dynamic_rotate %1 by %c5_i32_322 dim 0 : vector<8x128xf32>, i32 -> vector<8x128xf32>
    %818 = arith.mulf %817, %817 : vector<8x128xf32>
    %819 = arith.addf %2, %818 : vector<8x128xf32>
    %cst_323 = arith.constant 2.000000e+00 : f32
    %820 = vector.broadcast %cst_323 : f32 to vector<8x128xf32>
    %821 = arith.mulf %820, %0 : vector<8x128xf32>
    %822 = arith.mulf %821, %817 : vector<8x128xf32>
    %823 = arith.subf %819, %822 : vector<8x128xf32>
    %cst_324 = arith.constant 0.000000e+00 : f32
    %824 = vector.broadcast %cst_324 : f32 to vector<8x128xf32>
    %825 = arith.maximumf %823, %824 : vector<8x128xf32>
    %c14_i32 = arith.constant 14 : i32
    %c2_i32_325 = arith.constant 2 : i32
    %826 = arith.cmpi eq, %c14_i32, %c2_i32_325 : i32
    %cst_326 = arith.constant 0.000000e+00 : f32
    %cst_327 = arith.constant 1.000000e+10 : f32
    %827 = arith.select %826, %cst_326, %cst_327 : f32
    %c1_i32_328 = arith.constant 1 : i32
    %828 = tpu.dynamic_rotate %749 by %c1_i32_328 dim 0 : vector<8x128xf32>, i32 -> vector<8x128xf32>
    %829 = vector.broadcast %827 : f32 to vector<8x128xf32>
    %830 = arith.select %5, %829, %828 : vector<8x128xi1>, vector<8x128xf32>
    %c1_i32_329 = arith.constant 1 : i32
    %831 = tpu.dynamic_rotate %816 by %c1_i32_329 dim 0 : vector<8x128xf32>, i32 -> vector<8x128xf32>
    %cst_330 = arith.constant 1.000000e+10 : f32
    %832 = vector.broadcast %cst_330 : f32 to vector<8x128xf32>
    %833 = arith.select %5, %832, %831 : vector<8x128xi1>, vector<8x128xf32>
    %cst_331 = arith.constant 0.000000e+00 : f32
    %834 = vector.broadcast %cst_331 : f32 to vector<8x128xf32>
    %835 = arith.subf %834, %816 : vector<8x128xf32>
    %cst_332 = arith.constant 0.000000e+00 : f32
    %836 = vector.broadcast %cst_332 : f32 to vector<8x128xf32>
    %837 = arith.subf %836, %830 : vector<8x128xf32>
    %cst_333 = arith.constant 0.000000e+00 : f32
    %838 = vector.broadcast %cst_333 : f32 to vector<8x128xf32>
    %839 = arith.subf %838, %833 : vector<8x128xf32>
    %840 = arith.maximumf %835, %837 : vector<8x128xf32>
    %841 = arith.maximumf %840, %839 : vector<8x128xf32>
    %842 = arith.subf %835, %841 : vector<8x128xf32>
    %cst_334 = arith.constant 1.000000e+03 : f32
    %843 = vector.broadcast %cst_334 : f32 to vector<8x128xf32>
    %844 = arith.mulf %842, %843 : vector<8x128xf32>
    %845 = math.exp %844 : vector<8x128xf32>
    %846 = arith.subf %837, %841 : vector<8x128xf32>
    %cst_335 = arith.constant 1.000000e+03 : f32
    %847 = vector.broadcast %cst_335 : f32 to vector<8x128xf32>
    %848 = arith.mulf %846, %847 : vector<8x128xf32>
    %849 = math.exp %848 : vector<8x128xf32>
    %850 = arith.subf %839, %841 : vector<8x128xf32>
    %cst_336 = arith.constant 1.000000e+03 : f32
    %851 = vector.broadcast %cst_336 : f32 to vector<8x128xf32>
    %852 = arith.mulf %850, %851 : vector<8x128xf32>
    %853 = math.exp %852 : vector<8x128xf32>
    %854 = arith.addf %845, %849 : vector<8x128xf32>
    %855 = arith.addf %854, %853 : vector<8x128xf32>
    %c5_i32_337 = arith.constant 5 : i32
    %c0_i32_338 = arith.constant 0 : i32
    %856 = arith.maxsi %c5_i32_337, %c0_i32_338 : i32
    %857 = vector.broadcast %856 : i32 to vector<8x128xi32>
    %858 = arith.cmpi sge, %3, %857 : vector<8x128xi32>
    %c12_i32_339 = arith.constant 12 : i32
    %c7_i32_340 = arith.constant 7 : i32
    %859 = arith.minsi %c12_i32_339, %c7_i32_340 : i32
    %860 = vector.broadcast %859 : i32 to vector<8x128xi32>
    %861 = arith.cmpi sle, %3, %860 : vector<8x128xi32>
    %862 = arith.andi %858, %861 : vector<8x128xi1>
    %863 = tpu.reciprocal %855 {approx = true} : vector<8x128xf32> -> vector<8x128xf32>
    %864 = arith.extui %862 : vector<8x128xi1> to vector<8x128xi32>
    %865 = arith.sitofp %864 : vector<8x128xi32> to vector<8x128xf32>
    %866 = arith.mulf %863, %865 : vector<8x128xf32>
    %867 = math.log %855 : vector<8x128xf32>
    %cst_341 = arith.constant 1.000000e-03 : f32
    %868 = vector.broadcast %cst_341 : f32 to vector<8x128xf32>
    %869 = arith.mulf %868, %867 : vector<8x128xf32>
    %870 = arith.addf %869, %841 : vector<8x128xf32>
    %cst_342 = arith.constant 0.000000e+00 : f32
    %871 = vector.broadcast %cst_342 : f32 to vector<8x128xf32>
    %872 = arith.subf %871, %870 : vector<8x128xf32>
    %873 = arith.mulf %845, %866 : vector<8x128xf32>
    %c12 = arith.constant 12 : index
    %c0_343 = arith.constant 0 : index
    %c0_344 = arith.constant 0 : index
    %874 = vector.load %arg4[%c12, %c0_343, %c0_344] : memref<15x8x128xf32, #tpu.memory_space<vmem>>, vector<1x8x128xf32>
    %875 = vector.shape_cast %874 : vector<1x8x128xf32> to vector<8x128xf32>
    %876 = vector.shape_cast %873 : vector<8x128xf32> to vector<1x8x128xf32>
    tpu.vector_store %arg4[%c12, %c0_343, %c0_344], %876 {strides = array<i32>} : memref<15x8x128xf32, #tpu.memory_space<vmem>>, vector<1x8x128xf32>,
    %877 = arith.mulf %849, %866 : vector<8x128xf32>
    %c12_345 = arith.constant 12 : index
    %c0_346 = arith.constant 0 : index
    %c0_347 = arith.constant 0 : index
    %878 = vector.load %arg5[%c12_345, %c0_346, %c0_347] : memref<15x8x128xf32, #tpu.memory_space<vmem>>, vector<1x8x128xf32>
    %879 = vector.shape_cast %878 : vector<1x8x128xf32> to vector<8x128xf32>
    %880 = vector.shape_cast %877 : vector<8x128xf32> to vector<1x8x128xf32>
    tpu.vector_store %arg5[%c12_345, %c0_346, %c0_347], %880 {strides = array<i32>} : memref<15x8x128xf32, #tpu.memory_space<vmem>>, vector<1x8x128xf32>,
    %881 = arith.addf %825, %872 : vector<8x128xf32>
    %cst_348 = arith.constant 1.000000e+10 : f32
    %882 = vector.broadcast %cst_348 : f32 to vector<8x128xf32>
    %883 = arith.select %862, %881, %882 : vector<8x128xi1>, vector<8x128xf32>
    %c6_i32_349 = arith.constant 6 : i32
    %884 = tpu.dynamic_rotate %1 by %c6_i32_349 dim 0 : vector<8x128xf32>, i32 -> vector<8x128xf32>
    %885 = arith.mulf %884, %884 : vector<8x128xf32>
    %886 = arith.addf %2, %885 : vector<8x128xf32>
    %cst_350 = arith.constant 2.000000e+00 : f32
    %887 = vector.broadcast %cst_350 : f32 to vector<8x128xf32>
    %888 = arith.mulf %887, %0 : vector<8x128xf32>
    %889 = arith.mulf %888, %884 : vector<8x128xf32>
    %890 = arith.subf %886, %889 : vector<8x128xf32>
    %cst_351 = arith.constant 0.000000e+00 : f32
    %891 = vector.broadcast %cst_351 : f32 to vector<8x128xf32>
    %892 = arith.maximumf %890, %891 : vector<8x128xf32>
    %c15_i32 = arith.constant 15 : i32
    %c2_i32_352 = arith.constant 2 : i32
    %893 = arith.cmpi eq, %c15_i32, %c2_i32_352 : i32
    %cst_353 = arith.constant 0.000000e+00 : f32
    %cst_354 = arith.constant 1.000000e+10 : f32
    %894 = arith.select %893, %cst_353, %cst_354 : f32
    %c1_i32_355 = arith.constant 1 : i32
    %895 = tpu.dynamic_rotate %816 by %c1_i32_355 dim 0 : vector<8x128xf32>, i32 -> vector<8x128xf32>
    %896 = vector.broadcast %894 : f32 to vector<8x128xf32>
    %897 = arith.select %5, %896, %895 : vector<8x128xi1>, vector<8x128xf32>
    %c1_i32_356 = arith.constant 1 : i32
    %898 = tpu.dynamic_rotate %883 by %c1_i32_356 dim 0 : vector<8x128xf32>, i32 -> vector<8x128xf32>
    %cst_357 = arith.constant 1.000000e+10 : f32
    %899 = vector.broadcast %cst_357 : f32 to vector<8x128xf32>
    %900 = arith.select %5, %899, %898 : vector<8x128xi1>, vector<8x128xf32>
    %cst_358 = arith.constant 0.000000e+00 : f32
    %901 = vector.broadcast %cst_358 : f32 to vector<8x128xf32>
    %902 = arith.subf %901, %883 : vector<8x128xf32>
    %cst_359 = arith.constant 0.000000e+00 : f32
    %903 = vector.broadcast %cst_359 : f32 to vector<8x128xf32>
    %904 = arith.subf %903, %897 : vector<8x128xf32>
    %cst_360 = arith.constant 0.000000e+00 : f32
    %905 = vector.broadcast %cst_360 : f32 to vector<8x128xf32>
    %906 = arith.subf %905, %900 : vector<8x128xf32>
    %907 = arith.maximumf %902, %904 : vector<8x128xf32>
    %908 = arith.maximumf %907, %906 : vector<8x128xf32>
    %909 = arith.subf %902, %908 : vector<8x128xf32>
    %cst_361 = arith.constant 1.000000e+03 : f32
    %910 = vector.broadcast %cst_361 : f32 to vector<8x128xf32>
    %911 = arith.mulf %909, %910 : vector<8x128xf32>
    %912 = math.exp %911 : vector<8x128xf32>
    %913 = arith.subf %904, %908 : vector<8x128xf32>
    %cst_362 = arith.constant 1.000000e+03 : f32
    %914 = vector.broadcast %cst_362 : f32 to vector<8x128xf32>
    %915 = arith.mulf %913, %914 : vector<8x128xf32>
    %916 = math.exp %915 : vector<8x128xf32>
    %917 = arith.subf %906, %908 : vector<8x128xf32>
    %cst_363 = arith.constant 1.000000e+03 : f32
    %918 = vector.broadcast %cst_363 : f32 to vector<8x128xf32>
    %919 = arith.mulf %917, %918 : vector<8x128xf32>
    %920 = math.exp %919 : vector<8x128xf32>
    %921 = arith.addf %912, %916 : vector<8x128xf32>
    %922 = arith.addf %921, %920 : vector<8x128xf32>
    %c6_i32_364 = arith.constant 6 : i32
    %c0_i32_365 = arith.constant 0 : i32
    %923 = arith.maxsi %c6_i32_364, %c0_i32_365 : i32
    %924 = vector.broadcast %923 : i32 to vector<8x128xi32>
    %925 = arith.cmpi sge, %3, %924 : vector<8x128xi32>
    %c13_i32_366 = arith.constant 13 : i32
    %c7_i32_367 = arith.constant 7 : i32
    %926 = arith.minsi %c13_i32_366, %c7_i32_367 : i32
    %927 = vector.broadcast %926 : i32 to vector<8x128xi32>
    %928 = arith.cmpi sle, %3, %927 : vector<8x128xi32>
    %929 = arith.andi %925, %928 : vector<8x128xi1>
    %930 = tpu.reciprocal %922 {approx = true} : vector<8x128xf32> -> vector<8x128xf32>
    %931 = arith.extui %929 : vector<8x128xi1> to vector<8x128xi32>
    %932 = arith.sitofp %931 : vector<8x128xi32> to vector<8x128xf32>
    %933 = arith.mulf %930, %932 : vector<8x128xf32>
    %934 = math.log %922 : vector<8x128xf32>
    %cst_368 = arith.constant 1.000000e-03 : f32
    %935 = vector.broadcast %cst_368 : f32 to vector<8x128xf32>
    %936 = arith.mulf %935, %934 : vector<8x128xf32>
    %937 = arith.addf %936, %908 : vector<8x128xf32>
    %cst_369 = arith.constant 0.000000e+00 : f32
    %938 = vector.broadcast %cst_369 : f32 to vector<8x128xf32>
    %939 = arith.subf %938, %937 : vector<8x128xf32>
    %940 = arith.mulf %912, %933 : vector<8x128xf32>
    %c13 = arith.constant 13 : index
    %c0_370 = arith.constant 0 : index
    %c0_371 = arith.constant 0 : index
    %941 = vector.load %arg4[%c13, %c0_370, %c0_371] : memref<15x8x128xf32, #tpu.memory_space<vmem>>, vector<1x8x128xf32>
    %942 = vector.shape_cast %941 : vector<1x8x128xf32> to vector<8x128xf32>
    %943 = vector.shape_cast %940 : vector<8x128xf32> to vector<1x8x128xf32>
    tpu.vector_store %arg4[%c13, %c0_370, %c0_371], %943 {strides = array<i32>} : memref<15x8x128xf32, #tpu.memory_space<vmem>>, vector<1x8x128xf32>,
    %944 = arith.mulf %916, %933 : vector<8x128xf32>
    %c13_372 = arith.constant 13 : index
    %c0_373 = arith.constant 0 : index
    %c0_374 = arith.constant 0 : index
    %945 = vector.load %arg5[%c13_372, %c0_373, %c0_374] : memref<15x8x128xf32, #tpu.memory_space<vmem>>, vector<1x8x128xf32>
    %946 = vector.shape_cast %945 : vector<1x8x128xf32> to vector<8x128xf32>
    %947 = vector.shape_cast %944 : vector<8x128xf32> to vector<1x8x128xf32>
    tpu.vector_store %arg5[%c13_372, %c0_373, %c0_374], %947 {strides = array<i32>} : memref<15x8x128xf32, #tpu.memory_space<vmem>>, vector<1x8x128xf32>,
    %948 = arith.addf %892, %939 : vector<8x128xf32>
    %cst_375 = arith.constant 1.000000e+10 : f32
    %949 = vector.broadcast %cst_375 : f32 to vector<8x128xf32>
    %950 = arith.select %929, %948, %949 : vector<8x128xi1>, vector<8x128xf32>
    %c7_i32_376 = arith.constant 7 : i32
    %951 = tpu.dynamic_rotate %1 by %c7_i32_376 dim 0 : vector<8x128xf32>, i32 -> vector<8x128xf32>
    %952 = arith.mulf %951, %951 : vector<8x128xf32>
    %953 = arith.addf %2, %952 : vector<8x128xf32>
    %cst_377 = arith.constant 2.000000e+00 : f32
    %954 = vector.broadcast %cst_377 : f32 to vector<8x128xf32>
    %955 = arith.mulf %954, %0 : vector<8x128xf32>
    %956 = arith.mulf %955, %951 : vector<8x128xf32>
    %957 = arith.subf %953, %956 : vector<8x128xf32>
    %cst_378 = arith.constant 0.000000e+00 : f32
    %958 = vector.broadcast %cst_378 : f32 to vector<8x128xf32>
    %959 = arith.maximumf %957, %958 : vector<8x128xf32>
    %c16_i32 = arith.constant 16 : i32
    %c2_i32_379 = arith.constant 2 : i32
    %960 = arith.cmpi eq, %c16_i32, %c2_i32_379 : i32
    %cst_380 = arith.constant 0.000000e+00 : f32
    %cst_381 = arith.constant 1.000000e+10 : f32
    %961 = arith.select %960, %cst_380, %cst_381 : f32
    %c1_i32_382 = arith.constant 1 : i32
    %962 = tpu.dynamic_rotate %883 by %c1_i32_382 dim 0 : vector<8x128xf32>, i32 -> vector<8x128xf32>
    %963 = vector.broadcast %961 : f32 to vector<8x128xf32>
    %964 = arith.select %5, %963, %962 : vector<8x128xi1>, vector<8x128xf32>
    %c1_i32_383 = arith.constant 1 : i32
    %965 = tpu.dynamic_rotate %950 by %c1_i32_383 dim 0 : vector<8x128xf32>, i32 -> vector<8x128xf32>
    %cst_384 = arith.constant 1.000000e+10 : f32
    %966 = vector.broadcast %cst_384 : f32 to vector<8x128xf32>
    %967 = arith.select %5, %966, %965 : vector<8x128xi1>, vector<8x128xf32>
    %cst_385 = arith.constant 0.000000e+00 : f32
    %968 = vector.broadcast %cst_385 : f32 to vector<8x128xf32>
    %969 = arith.subf %968, %950 : vector<8x128xf32>
    %cst_386 = arith.constant 0.000000e+00 : f32
    %970 = vector.broadcast %cst_386 : f32 to vector<8x128xf32>
    %971 = arith.subf %970, %964 : vector<8x128xf32>
    %cst_387 = arith.constant 0.000000e+00 : f32
    %972 = vector.broadcast %cst_387 : f32 to vector<8x128xf32>
    %973 = arith.subf %972, %967 : vector<8x128xf32>
    %974 = arith.maximumf %969, %971 : vector<8x128xf32>
    %975 = arith.maximumf %974, %973 : vector<8x128xf32>
    %976 = arith.subf %969, %975 : vector<8x128xf32>
    %cst_388 = arith.constant 1.000000e+03 : f32
    %977 = vector.broadcast %cst_388 : f32 to vector<8x128xf32>
    %978 = arith.mulf %976, %977 : vector<8x128xf32>
    %979 = math.exp %978 : vector<8x128xf32>
    %980 = arith.subf %971, %975 : vector<8x128xf32>
    %cst_389 = arith.constant 1.000000e+03 : f32
    %981 = vector.broadcast %cst_389 : f32 to vector<8x128xf32>
    %982 = arith.mulf %980, %981 : vector<8x128xf32>
    %983 = math.exp %982 : vector<8x128xf32>
    %984 = arith.subf %973, %975 : vector<8x128xf32>
    %cst_390 = arith.constant 1.000000e+03 : f32
    %985 = vector.broadcast %cst_390 : f32 to vector<8x128xf32>
    %986 = arith.mulf %984, %985 : vector<8x128xf32>
    %987 = math.exp %986 : vector<8x128xf32>
    %988 = arith.addf %979, %983 : vector<8x128xf32>
    %989 = arith.addf %988, %987 : vector<8x128xf32>
    %c7_i32_391 = arith.constant 7 : i32
    %c0_i32_392 = arith.constant 0 : i32
    %990 = arith.maxsi %c7_i32_391, %c0_i32_392 : i32
    %991 = vector.broadcast %990 : i32 to vector<8x128xi32>
    %992 = arith.cmpi sge, %3, %991 : vector<8x128xi32>
    %c14_i32_393 = arith.constant 14 : i32
    %c7_i32_394 = arith.constant 7 : i32
    %993 = arith.minsi %c14_i32_393, %c7_i32_394 : i32
    %994 = vector.broadcast %993 : i32 to vector<8x128xi32>
    %995 = arith.cmpi sle, %3, %994 : vector<8x128xi32>
    %996 = arith.andi %992, %995 : vector<8x128xi1>
    %997 = tpu.reciprocal %989 {approx = true} : vector<8x128xf32> -> vector<8x128xf32>
    %998 = arith.extui %996 : vector<8x128xi1> to vector<8x128xi32>
    %999 = arith.sitofp %998 : vector<8x128xi32> to vector<8x128xf32>
    %1000 = arith.mulf %997, %999 : vector<8x128xf32>
    %1001 = math.log %989 : vector<8x128xf32>
    %cst_395 = arith.constant 1.000000e-03 : f32
    %1002 = vector.broadcast %cst_395 : f32 to vector<8x128xf32>
    %1003 = arith.mulf %1002, %1001 : vector<8x128xf32>
    %1004 = arith.addf %1003, %975 : vector<8x128xf32>
    %cst_396 = arith.constant 0.000000e+00 : f32
    %1005 = vector.broadcast %cst_396 : f32 to vector<8x128xf32>
    %1006 = arith.subf %1005, %1004 : vector<8x128xf32>
    %1007 = arith.mulf %979, %1000 : vector<8x128xf32>
    %c14 = arith.constant 14 : index
    %c0_397 = arith.constant 0 : index
    %c0_398 = arith.constant 0 : index
    %1008 = vector.load %arg4[%c14, %c0_397, %c0_398] : memref<15x8x128xf32, #tpu.memory_space<vmem>>, vector<1x8x128xf32>
    %1009 = vector.shape_cast %1008 : vector<1x8x128xf32> to vector<8x128xf32>
    %1010 = vector.shape_cast %1007 : vector<8x128xf32> to vector<1x8x128xf32>
    tpu.vector_store %arg4[%c14, %c0_397, %c0_398], %1010 {strides = array<i32>} : memref<15x8x128xf32, #tpu.memory_space<vmem>>, vector<1x8x128xf32>,
    %1011 = arith.mulf %983, %1000 : vector<8x128xf32>
    %c14_399 = arith.constant 14 : index
    %c0_400 = arith.constant 0 : index
    %c0_401 = arith.constant 0 : index
    %1012 = vector.load %arg5[%c14_399, %c0_400, %c0_401] : memref<15x8x128xf32, #tpu.memory_space<vmem>>, vector<1x8x128xf32>
    %1013 = vector.shape_cast %1012 : vector<1x8x128xf32> to vector<8x128xf32>
    %1014 = vector.shape_cast %1011 : vector<8x128xf32> to vector<1x8x128xf32>
    tpu.vector_store %arg5[%c14_399, %c0_400, %c0_401], %1014 {strides = array<i32>} : memref<15x8x128xf32, #tpu.memory_space<vmem>>, vector<1x8x128xf32>,
    %1015 = arith.addf %959, %1006 : vector<8x128xf32>
    %cst_402 = arith.constant 1.000000e+10 : f32
    %1016 = vector.broadcast %cst_402 : f32 to vector<8x128xf32>
    %1017 = arith.select %996, %1015, %1016 : vector<8x128xi1>, vector<8x128xf32>
    %cst_403 = arith.constant 0.000000e+00 : f32
    %1018 = vector.broadcast %cst_403 : f32 to vector<8x128xf32>
    %1019 = arith.select %9, %1017, %1018 : vector<8x128xi1>, vector<8x128xf32>
    %cst_404 = arith.constant dense<0.000000e+00> : vector<128xf32>
    %1020 = vector.multi_reduction <add>, %1019, %cst_404 [0] : vector<8x128xf32> to vector<128xf32>
    %1021 = vector.shape_cast %1020 : vector<128xf32> to vector<1x128xf32>
    %1022 = arith.extui %9 : vector<8x128xi1> to vector<8x128xi32>
    %1023 = arith.sitofp %1022 : vector<8x128xi32> to vector<8x128xf32>
    %cst_405 = arith.constant 0.000000e+00 : f32
    %1024 = vector.broadcast %cst_405 : f32 to vector<8x128xf32>
    %cst_406 = arith.constant 0.000000e+00 : f32
    %1025 = vector.broadcast %cst_406 : f32 to vector<8x128xf32>
    %c14_407 = arith.constant 14 : index
    %c0_408 = arith.constant 0 : index
    %c0_409 = arith.constant 0 : index
    %1026 = vector.load %arg4[%c14_407, %c0_408, %c0_409] : memref<15x8x128xf32, #tpu.memory_space<vmem>>, vector<1x8x128xf32>
    %1027 = vector.shape_cast %1026 : vector<1x8x128xf32> to vector<8x128xf32>
    %c14_410 = arith.constant 14 : index
    %c0_411 = arith.constant 0 : index
    %c0_412 = arith.constant 0 : index
    %1028 = vector.load %arg5[%c14_410, %c0_411, %c0_412] : memref<15x8x128xf32, #tpu.memory_space<vmem>>, vector<1x8x128xf32>
    %1029 = vector.shape_cast %1028 : vector<1x8x128xf32> to vector<8x128xf32>
    %c7_i32_413 = arith.constant 7 : i32
    %c0_i32_414 = arith.constant 0 : i32
    %1030 = arith.maxsi %c7_i32_413, %c0_i32_414 : i32
    %1031 = vector.broadcast %1030 : i32 to vector<8x128xi32>
    %1032 = arith.cmpi sge, %3, %1031 : vector<8x128xi32>
    %c14_i32_415 = arith.constant 14 : i32
    %c7_i32_416 = arith.constant 7 : i32
    %1033 = arith.minsi %c14_i32_415, %c7_i32_416 : i32
    %1034 = vector.broadcast %1033 : i32 to vector<8x128xi32>
    %1035 = arith.cmpi sle, %3, %1034 : vector<8x128xi32>
    %1036 = arith.andi %1032, %1035 : vector<8x128xi1>
    %1037 = arith.extui %1036 : vector<8x128xi1> to vector<8x128xi32>
    %1038 = arith.sitofp %1037 : vector<8x128xi32> to vector<8x128xf32>
    %1039 = arith.subf %1038, %1027 : vector<8x128xf32>
    %1040 = arith.subf %1039, %1029 : vector<8x128xf32>
    %c14_417 = arith.constant 14 : index
    %c0_418 = arith.constant 0 : index
    %c0_419 = arith.constant 0 : index
    %1041 = vector.load %arg5[%c14_417, %c0_418, %c0_419] : memref<15x8x128xf32, #tpu.memory_space<vmem>>, vector<1x8x128xf32>
    %1042 = vector.shape_cast %1041 : vector<1x8x128xf32> to vector<8x128xf32>
    %1043 = arith.mulf %1027, %1023 : vector<8x128xf32>
    %1044 = arith.mulf %1040, %1023 : vector<8x128xf32>
    %1045 = arith.mulf %1042, %1024 : vector<8x128xf32>
    %1046 = arith.addf %1044, %1045 : vector<8x128xf32>
    %c7_i32_420 = arith.constant 7 : i32
    %1047 = tpu.dynamic_rotate %1046 by %c7_i32_420 dim 0 : vector<8x128xf32>, i32 -> vector<8x128xf32>
    %cst_421 = arith.constant 0.000000e+00 : f32
    %1048 = vector.broadcast %cst_421 : f32 to vector<8x128xf32>
    %1049 = arith.select %7, %1048, %1047 : vector<8x128xi1>, vector<8x128xf32>
    %1050 = arith.addf %1043, %1049 : vector<8x128xf32>
    %c6_i32_422 = arith.constant 6 : i32
    %c0_i32_423 = arith.constant 0 : i32
    %1051 = arith.maxsi %c6_i32_422, %c0_i32_423 : i32
    %1052 = vector.broadcast %1051 : i32 to vector<8x128xi32>
    %1053 = arith.cmpi sge, %3, %1052 : vector<8x128xi32>
    %c13_i32_424 = arith.constant 13 : i32
    %c7_i32_425 = arith.constant 7 : i32
    %1054 = arith.minsi %c13_i32_424, %c7_i32_425 : i32
    %1055 = vector.broadcast %1054 : i32 to vector<8x128xi32>
    %1056 = arith.cmpi sle, %3, %1055 : vector<8x128xi32>
    %1057 = arith.andi %1053, %1056 : vector<8x128xi1>
    %cst_426 = arith.constant 0.000000e+00 : f32
    %1058 = vector.broadcast %cst_426 : f32 to vector<8x128xf32>
    %1059 = arith.select %1057, %1050, %1058 : vector<8x128xi1>, vector<8x128xf32>
    %cst_427 = arith.constant 2.000000e+00 : f32
    %1060 = vector.broadcast %cst_427 : f32 to vector<8x128xf32>
    %1061 = arith.addf %12, %1060 : vector<8x128xf32>
    %cst_428 = arith.constant 1.500000e+01 : f32
    %1062 = vector.broadcast %cst_428 : f32 to vector<8x128xf32>
    %1063 = arith.subf %1061, %1062 : vector<8x128xf32>
    %1064 = arith.mulf %1063, %1063 : vector<8x128xf32>
    %1065 = arith.mulf %1059, %1064 : vector<8x128xf32>
    %1066 = arith.addf %1025, %1065 : vector<8x128xf32>
    %c13_429 = arith.constant 13 : index
    %c0_430 = arith.constant 0 : index
    %c0_431 = arith.constant 0 : index
    %1067 = vector.load %arg4[%c13_429, %c0_430, %c0_431] : memref<15x8x128xf32, #tpu.memory_space<vmem>>, vector<1x8x128xf32>
    %1068 = vector.shape_cast %1067 : vector<1x8x128xf32> to vector<8x128xf32>
    %c13_432 = arith.constant 13 : index
    %c0_433 = arith.constant 0 : index
    %c0_434 = arith.constant 0 : index
    %1069 = vector.load %arg5[%c13_432, %c0_433, %c0_434] : memref<15x8x128xf32, #tpu.memory_space<vmem>>, vector<1x8x128xf32>
    %1070 = vector.shape_cast %1069 : vector<1x8x128xf32> to vector<8x128xf32>
    %c6_i32_435 = arith.constant 6 : i32
    %c0_i32_436 = arith.constant 0 : i32
    %1071 = arith.maxsi %c6_i32_435, %c0_i32_436 : i32
    %1072 = vector.broadcast %1071 : i32 to vector<8x128xi32>
    %1073 = arith.cmpi sge, %3, %1072 : vector<8x128xi32>
    %c13_i32_437 = arith.constant 13 : i32
    %c7_i32_438 = arith.constant 7 : i32
    %1074 = arith.minsi %c13_i32_437, %c7_i32_438 : i32
    %1075 = vector.broadcast %1074 : i32 to vector<8x128xi32>
    %1076 = arith.cmpi sle, %3, %1075 : vector<8x128xi32>
    %1077 = arith.andi %1073, %1076 : vector<8x128xi1>
    %1078 = arith.extui %1077 : vector<8x128xi1> to vector<8x128xi32>
    %1079 = arith.sitofp %1078 : vector<8x128xi32> to vector<8x128xf32>
    %1080 = arith.subf %1079, %1068 : vector<8x128xf32>
    %1081 = arith.subf %1080, %1070 : vector<8x128xf32>
    %c14_439 = arith.constant 14 : index
    %c0_440 = arith.constant 0 : index
    %c0_441 = arith.constant 0 : index
    %1082 = vector.load %arg5[%c14_439, %c0_440, %c0_441] : memref<15x8x128xf32, #tpu.memory_space<vmem>>, vector<1x8x128xf32>
    %1083 = vector.shape_cast %1082 : vector<1x8x128xf32> to vector<8x128xf32>
    %1084 = arith.mulf %1068, %1059 : vector<8x128xf32>
    %1085 = arith.mulf %1081, %1059 : vector<8x128xf32>
    %1086 = arith.mulf %1083, %1023 : vector<8x128xf32>
    %1087 = arith.addf %1085, %1086 : vector<8x128xf32>
    %c7_i32_442 = arith.constant 7 : i32
    %1088 = tpu.dynamic_rotate %1087 by %c7_i32_442 dim 0 : vector<8x128xf32>, i32 -> vector<8x128xf32>
    %cst_443 = arith.constant 0.000000e+00 : f32
    %1089 = vector.broadcast %cst_443 : f32 to vector<8x128xf32>
    %1090 = arith.select %7, %1089, %1088 : vector<8x128xi1>, vector<8x128xf32>
    %1091 = arith.addf %1084, %1090 : vector<8x128xf32>
    %c5_i32_444 = arith.constant 5 : i32
    %c0_i32_445 = arith.constant 0 : i32
    %1092 = arith.maxsi %c5_i32_444, %c0_i32_445 : i32
    %1093 = vector.broadcast %1092 : i32 to vector<8x128xi32>
    %1094 = arith.cmpi sge, %3, %1093 : vector<8x128xi32>
    %c12_i32_446 = arith.constant 12 : i32
    %c7_i32_447 = arith.constant 7 : i32
    %1095 = arith.minsi %c12_i32_446, %c7_i32_447 : i32
    %1096 = vector.broadcast %1095 : i32 to vector<8x128xi32>
    %1097 = arith.cmpi sle, %3, %1096 : vector<8x128xi32>
    %1098 = arith.andi %1094, %1097 : vector<8x128xi1>
    %cst_448 = arith.constant 0.000000e+00 : f32
    %1099 = vector.broadcast %cst_448 : f32 to vector<8x128xf32>
    %1100 = arith.select %1098, %1091, %1099 : vector<8x128xi1>, vector<8x128xf32>
    %cst_449 = arith.constant 2.000000e+00 : f32
    %1101 = vector.broadcast %cst_449 : f32 to vector<8x128xf32>
    %1102 = arith.addf %12, %1101 : vector<8x128xf32>
    %cst_450 = arith.constant 1.400000e+01 : f32
    %1103 = vector.broadcast %cst_450 : f32 to vector<8x128xf32>
    %1104 = arith.subf %1102, %1103 : vector<8x128xf32>
    %1105 = arith.mulf %1104, %1104 : vector<8x128xf32>
    %1106 = arith.mulf %1100, %1105 : vector<8x128xf32>
    %1107 = arith.addf %1066, %1106 : vector<8x128xf32>
    %c12_451 = arith.constant 12 : index
    %c0_452 = arith.constant 0 : index
    %c0_453 = arith.constant 0 : index
    %1108 = vector.load %arg4[%c12_451, %c0_452, %c0_453] : memref<15x8x128xf32, #tpu.memory_space<vmem>>, vector<1x8x128xf32>
    %1109 = vector.shape_cast %1108 : vector<1x8x128xf32> to vector<8x128xf32>
    %c12_454 = arith.constant 12 : index
    %c0_455 = arith.constant 0 : index
    %c0_456 = arith.constant 0 : index
    %1110 = vector.load %arg5[%c12_454, %c0_455, %c0_456] : memref<15x8x128xf32, #tpu.memory_space<vmem>>, vector<1x8x128xf32>
    %1111 = vector.shape_cast %1110 : vector<1x8x128xf32> to vector<8x128xf32>
    %c5_i32_457 = arith.constant 5 : i32
    %c0_i32_458 = arith.constant 0 : i32
    %1112 = arith.maxsi %c5_i32_457, %c0_i32_458 : i32
    %1113 = vector.broadcast %1112 : i32 to vector<8x128xi32>
    %1114 = arith.cmpi sge, %3, %1113 : vector<8x128xi32>
    %c12_i32_459 = arith.constant 12 : i32
    %c7_i32_460 = arith.constant 7 : i32
    %1115 = arith.minsi %c12_i32_459, %c7_i32_460 : i32
    %1116 = vector.broadcast %1115 : i32 to vector<8x128xi32>
    %1117 = arith.cmpi sle, %3, %1116 : vector<8x128xi32>
    %1118 = arith.andi %1114, %1117 : vector<8x128xi1>
    %1119 = arith.extui %1118 : vector<8x128xi1> to vector<8x128xi32>
    %1120 = arith.sitofp %1119 : vector<8x128xi32> to vector<8x128xf32>
    %1121 = arith.subf %1120, %1109 : vector<8x128xf32>
    %1122 = arith.subf %1121, %1111 : vector<8x128xf32>
    %c13_461 = arith.constant 13 : index
    %c0_462 = arith.constant 0 : index
    %c0_463 = arith.constant 0 : index
    %1123 = vector.load %arg5[%c13_461, %c0_462, %c0_463] : memref<15x8x128xf32, #tpu.memory_space<vmem>>, vector<1x8x128xf32>
    %1124 = vector.shape_cast %1123 : vector<1x8x128xf32> to vector<8x128xf32>
    %1125 = arith.mulf %1109, %1100 : vector<8x128xf32>
    %1126 = arith.mulf %1122, %1100 : vector<8x128xf32>
    %1127 = arith.mulf %1124, %1059 : vector<8x128xf32>
    %1128 = arith.addf %1126, %1127 : vector<8x128xf32>
    %c7_i32_464 = arith.constant 7 : i32
    %1129 = tpu.dynamic_rotate %1128 by %c7_i32_464 dim 0 : vector<8x128xf32>, i32 -> vector<8x128xf32>
    %cst_465 = arith.constant 0.000000e+00 : f32
    %1130 = vector.broadcast %cst_465 : f32 to vector<8x128xf32>
    %1131 = arith.select %7, %1130, %1129 : vector<8x128xi1>, vector<8x128xf32>
    %1132 = arith.addf %1125, %1131 : vector<8x128xf32>
    %c4_i32_466 = arith.constant 4 : i32
    %c0_i32_467 = arith.constant 0 : i32
    %1133 = arith.maxsi %c4_i32_466, %c0_i32_467 : i32
    %1134 = vector.broadcast %1133 : i32 to vector<8x128xi32>
    %1135 = arith.cmpi sge, %3, %1134 : vector<8x128xi32>
    %c11_i32_468 = arith.constant 11 : i32
    %c7_i32_469 = arith.constant 7 : i32
    %1136 = arith.minsi %c11_i32_468, %c7_i32_469 : i32
    %1137 = vector.broadcast %1136 : i32 to vector<8x128xi32>
    %1138 = arith.cmpi sle, %3, %1137 : vector<8x128xi32>
    %1139 = arith.andi %1135, %1138 : vector<8x128xi1>
    %cst_470 = arith.constant 0.000000e+00 : f32
    %1140 = vector.broadcast %cst_470 : f32 to vector<8x128xf32>
    %1141 = arith.select %1139, %1132, %1140 : vector<8x128xi1>, vector<8x128xf32>
    %cst_471 = arith.constant 2.000000e+00 : f32
    %1142 = vector.broadcast %cst_471 : f32 to vector<8x128xf32>
    %1143 = arith.addf %12, %1142 : vector<8x128xf32>
    %cst_472 = arith.constant 1.300000e+01 : f32
    %1144 = vector.broadcast %cst_472 : f32 to vector<8x128xf32>
    %1145 = arith.subf %1143, %1144 : vector<8x128xf32>
    %1146 = arith.mulf %1145, %1145 : vector<8x128xf32>
    %1147 = arith.mulf %1141, %1146 : vector<8x128xf32>
    %1148 = arith.addf %1107, %1147 : vector<8x128xf32>
    %c11_473 = arith.constant 11 : index
    %c0_474 = arith.constant 0 : index
    %c0_475 = arith.constant 0 : index
    %1149 = vector.load %arg4[%c11_473, %c0_474, %c0_475] : memref<15x8x128xf32, #tpu.memory_space<vmem>>, vector<1x8x128xf32>
    %1150 = vector.shape_cast %1149 : vector<1x8x128xf32> to vector<8x128xf32>
    %c11_476 = arith.constant 11 : index
    %c0_477 = arith.constant 0 : index
    %c0_478 = arith.constant 0 : index
    %1151 = vector.load %arg5[%c11_476, %c0_477, %c0_478] : memref<15x8x128xf32, #tpu.memory_space<vmem>>, vector<1x8x128xf32>
    %1152 = vector.shape_cast %1151 : vector<1x8x128xf32> to vector<8x128xf32>
    %c4_i32_479 = arith.constant 4 : i32
    %c0_i32_480 = arith.constant 0 : i32
    %1153 = arith.maxsi %c4_i32_479, %c0_i32_480 : i32
    %1154 = vector.broadcast %1153 : i32 to vector<8x128xi32>
    %1155 = arith.cmpi sge, %3, %1154 : vector<8x128xi32>
    %c11_i32_481 = arith.constant 11 : i32
    %c7_i32_482 = arith.constant 7 : i32
    %1156 = arith.minsi %c11_i32_481, %c7_i32_482 : i32
    %1157 = vector.broadcast %1156 : i32 to vector<8x128xi32>
    %1158 = arith.cmpi sle, %3, %1157 : vector<8x128xi32>
    %1159 = arith.andi %1155, %1158 : vector<8x128xi1>
    %1160 = arith.extui %1159 : vector<8x128xi1> to vector<8x128xi32>
    %1161 = arith.sitofp %1160 : vector<8x128xi32> to vector<8x128xf32>
    %1162 = arith.subf %1161, %1150 : vector<8x128xf32>
    %1163 = arith.subf %1162, %1152 : vector<8x128xf32>
    %c12_483 = arith.constant 12 : index
    %c0_484 = arith.constant 0 : index
    %c0_485 = arith.constant 0 : index
    %1164 = vector.load %arg5[%c12_483, %c0_484, %c0_485] : memref<15x8x128xf32, #tpu.memory_space<vmem>>, vector<1x8x128xf32>
    %1165 = vector.shape_cast %1164 : vector<1x8x128xf32> to vector<8x128xf32>
    %1166 = arith.mulf %1150, %1141 : vector<8x128xf32>
    %1167 = arith.mulf %1163, %1141 : vector<8x128xf32>
    %1168 = arith.mulf %1165, %1100 : vector<8x128xf32>
    %1169 = arith.addf %1167, %1168 : vector<8x128xf32>
    %c7_i32_486 = arith.constant 7 : i32
    %1170 = tpu.dynamic_rotate %1169 by %c7_i32_486 dim 0 : vector<8x128xf32>, i32 -> vector<8x128xf32>
    %cst_487 = arith.constant 0.000000e+00 : f32
    %1171 = vector.broadcast %cst_487 : f32 to vector<8x128xf32>
    %1172 = arith.select %7, %1171, %1170 : vector<8x128xi1>, vector<8x128xf32>
    %1173 = arith.addf %1166, %1172 : vector<8x128xf32>
    %c3_i32_488 = arith.constant 3 : i32
    %c0_i32_489 = arith.constant 0 : i32
    %1174 = arith.maxsi %c3_i32_488, %c0_i32_489 : i32
    %1175 = vector.broadcast %1174 : i32 to vector<8x128xi32>
    %1176 = arith.cmpi sge, %3, %1175 : vector<8x128xi32>
    %c10_i32_490 = arith.constant 10 : i32
    %c7_i32_491 = arith.constant 7 : i32
    %1177 = arith.minsi %c10_i32_490, %c7_i32_491 : i32
    %1178 = vector.broadcast %1177 : i32 to vector<8x128xi32>
    %1179 = arith.cmpi sle, %3, %1178 : vector<8x128xi32>
    %1180 = arith.andi %1176, %1179 : vector<8x128xi1>
    %cst_492 = arith.constant 0.000000e+00 : f32
    %1181 = vector.broadcast %cst_492 : f32 to vector<8x128xf32>
    %1182 = arith.select %1180, %1173, %1181 : vector<8x128xi1>, vector<8x128xf32>
    %cst_493 = arith.constant 2.000000e+00 : f32
    %1183 = vector.broadcast %cst_493 : f32 to vector<8x128xf32>
    %1184 = arith.addf %12, %1183 : vector<8x128xf32>
    %cst_494 = arith.constant 1.200000e+01 : f32
    %1185 = vector.broadcast %cst_494 : f32 to vector<8x128xf32>
    %1186 = arith.subf %1184, %1185 : vector<8x128xf32>
    %1187 = arith.mulf %1186, %1186 : vector<8x128xf32>
    %1188 = arith.mulf %1182, %1187 : vector<8x128xf32>
    %1189 = arith.addf %1148, %1188 : vector<8x128xf32>
    %c10_495 = arith.constant 10 : index
    %c0_496 = arith.constant 0 : index
    %c0_497 = arith.constant 0 : index
    %1190 = vector.load %arg4[%c10_495, %c0_496, %c0_497] : memref<15x8x128xf32, #tpu.memory_space<vmem>>, vector<1x8x128xf32>
    %1191 = vector.shape_cast %1190 : vector<1x8x128xf32> to vector<8x128xf32>
    %c10_498 = arith.constant 10 : index
    %c0_499 = arith.constant 0 : index
    %c0_500 = arith.constant 0 : index
    %1192 = vector.load %arg5[%c10_498, %c0_499, %c0_500] : memref<15x8x128xf32, #tpu.memory_space<vmem>>, vector<1x8x128xf32>
    %1193 = vector.shape_cast %1192 : vector<1x8x128xf32> to vector<8x128xf32>
    %c3_i32_501 = arith.constant 3 : i32
    %c0_i32_502 = arith.constant 0 : i32
    %1194 = arith.maxsi %c3_i32_501, %c0_i32_502 : i32
    %1195 = vector.broadcast %1194 : i32 to vector<8x128xi32>
    %1196 = arith.cmpi sge, %3, %1195 : vector<8x128xi32>
    %c10_i32_503 = arith.constant 10 : i32
    %c7_i32_504 = arith.constant 7 : i32
    %1197 = arith.minsi %c10_i32_503, %c7_i32_504 : i32
    %1198 = vector.broadcast %1197 : i32 to vector<8x128xi32>
    %1199 = arith.cmpi sle, %3, %1198 : vector<8x128xi32>
    %1200 = arith.andi %1196, %1199 : vector<8x128xi1>
    %1201 = arith.extui %1200 : vector<8x128xi1> to vector<8x128xi32>
    %1202 = arith.sitofp %1201 : vector<8x128xi32> to vector<8x128xf32>
    %1203 = arith.subf %1202, %1191 : vector<8x128xf32>
    %1204 = arith.subf %1203, %1193 : vector<8x128xf32>
    %c11_505 = arith.constant 11 : index
    %c0_506 = arith.constant 0 : index
    %c0_507 = arith.constant 0 : index
    %1205 = vector.load %arg5[%c11_505, %c0_506, %c0_507] : memref<15x8x128xf32, #tpu.memory_space<vmem>>, vector<1x8x128xf32>
    %1206 = vector.shape_cast %1205 : vector<1x8x128xf32> to vector<8x128xf32>
    %1207 = arith.mulf %1191, %1182 : vector<8x128xf32>
    %1208 = arith.mulf %1204, %1182 : vector<8x128xf32>
    %1209 = arith.mulf %1206, %1141 : vector<8x128xf32>
    %1210 = arith.addf %1208, %1209 : vector<8x128xf32>
    %c7_i32_508 = arith.constant 7 : i32
    %1211 = tpu.dynamic_rotate %1210 by %c7_i32_508 dim 0 : vector<8x128xf32>, i32 -> vector<8x128xf32>
    %cst_509 = arith.constant 0.000000e+00 : f32
    %1212 = vector.broadcast %cst_509 : f32 to vector<8x128xf32>
    %1213 = arith.select %7, %1212, %1211 : vector<8x128xi1>, vector<8x128xf32>
    %1214 = arith.addf %1207, %1213 : vector<8x128xf32>
    %c2_i32_510 = arith.constant 2 : i32
    %c0_i32_511 = arith.constant 0 : i32
    %1215 = arith.maxsi %c2_i32_510, %c0_i32_511 : i32
    %1216 = vector.broadcast %1215 : i32 to vector<8x128xi32>
    %1217 = arith.cmpi sge, %3, %1216 : vector<8x128xi32>
    %c9_i32_512 = arith.constant 9 : i32
    %c7_i32_513 = arith.constant 7 : i32
    %1218 = arith.minsi %c9_i32_512, %c7_i32_513 : i32
    %1219 = vector.broadcast %1218 : i32 to vector<8x128xi32>
    %1220 = arith.cmpi sle, %3, %1219 : vector<8x128xi32>
    %1221 = arith.andi %1217, %1220 : vector<8x128xi1>
    %cst_514 = arith.constant 0.000000e+00 : f32
    %1222 = vector.broadcast %cst_514 : f32 to vector<8x128xf32>
    %1223 = arith.select %1221, %1214, %1222 : vector<8x128xi1>, vector<8x128xf32>
    %cst_515 = arith.constant 2.000000e+00 : f32
    %1224 = vector.broadcast %cst_515 : f32 to vector<8x128xf32>
    %1225 = arith.addf %12, %1224 : vector<8x128xf32>
    %cst_516 = arith.constant 1.100000e+01 : f32
    %1226 = vector.broadcast %cst_516 : f32 to vector<8x128xf32>
    %1227 = arith.subf %1225, %1226 : vector<8x128xf32>
    %1228 = arith.mulf %1227, %1227 : vector<8x128xf32>
    %1229 = arith.mulf %1223, %1228 : vector<8x128xf32>
    %1230 = arith.addf %1189, %1229 : vector<8x128xf32>
    %c9_517 = arith.constant 9 : index
    %c0_518 = arith.constant 0 : index
    %c0_519 = arith.constant 0 : index
    %1231 = vector.load %arg4[%c9_517, %c0_518, %c0_519] : memref<15x8x128xf32, #tpu.memory_space<vmem>>, vector<1x8x128xf32>
    %1232 = vector.shape_cast %1231 : vector<1x8x128xf32> to vector<8x128xf32>
    %c9_520 = arith.constant 9 : index
    %c0_521 = arith.constant 0 : index
    %c0_522 = arith.constant 0 : index
    %1233 = vector.load %arg5[%c9_520, %c0_521, %c0_522] : memref<15x8x128xf32, #tpu.memory_space<vmem>>, vector<1x8x128xf32>
    %1234 = vector.shape_cast %1233 : vector<1x8x128xf32> to vector<8x128xf32>
    %c2_i32_523 = arith.constant 2 : i32
    %c0_i32_524 = arith.constant 0 : i32
    %1235 = arith.maxsi %c2_i32_523, %c0_i32_524 : i32
    %1236 = vector.broadcast %1235 : i32 to vector<8x128xi32>
    %1237 = arith.cmpi sge, %3, %1236 : vector<8x128xi32>
    %c9_i32_525 = arith.constant 9 : i32
    %c7_i32_526 = arith.constant 7 : i32
    %1238 = arith.minsi %c9_i32_525, %c7_i32_526 : i32
    %1239 = vector.broadcast %1238 : i32 to vector<8x128xi32>
    %1240 = arith.cmpi sle, %3, %1239 : vector<8x128xi32>
    %1241 = arith.andi %1237, %1240 : vector<8x128xi1>
    %1242 = arith.extui %1241 : vector<8x128xi1> to vector<8x128xi32>
    %1243 = arith.sitofp %1242 : vector<8x128xi32> to vector<8x128xf32>
    %1244 = arith.subf %1243, %1232 : vector<8x128xf32>
    %1245 = arith.subf %1244, %1234 : vector<8x128xf32>
    %c10_527 = arith.constant 10 : index
    %c0_528 = arith.constant 0 : index
    %c0_529 = arith.constant 0 : index
    %1246 = vector.load %arg5[%c10_527, %c0_528, %c0_529] : memref<15x8x128xf32, #tpu.memory_space<vmem>>, vector<1x8x128xf32>
    %1247 = vector.shape_cast %1246 : vector<1x8x128xf32> to vector<8x128xf32>
    %1248 = arith.mulf %1232, %1223 : vector<8x128xf32>
    %1249 = arith.mulf %1245, %1223 : vector<8x128xf32>
    %1250 = arith.mulf %1247, %1182 : vector<8x128xf32>
    %1251 = arith.addf %1249, %1250 : vector<8x128xf32>
    %c7_i32_530 = arith.constant 7 : i32
    %1252 = tpu.dynamic_rotate %1251 by %c7_i32_530 dim 0 : vector<8x128xf32>, i32 -> vector<8x128xf32>
    %cst_531 = arith.constant 0.000000e+00 : f32
    %1253 = vector.broadcast %cst_531 : f32 to vector<8x128xf32>
    %1254 = arith.select %7, %1253, %1252 : vector<8x128xi1>, vector<8x128xf32>
    %1255 = arith.addf %1248, %1254 : vector<8x128xf32>
    %c1_i32_532 = arith.constant 1 : i32
    %c0_i32_533 = arith.constant 0 : i32
    %1256 = arith.maxsi %c1_i32_532, %c0_i32_533 : i32
    %1257 = vector.broadcast %1256 : i32 to vector<8x128xi32>
    %1258 = arith.cmpi sge, %3, %1257 : vector<8x128xi32>
    %c8_i32_534 = arith.constant 8 : i32
    %c7_i32_535 = arith.constant 7 : i32
    %1259 = arith.minsi %c8_i32_534, %c7_i32_535 : i32
    %1260 = vector.broadcast %1259 : i32 to vector<8x128xi32>
    %1261 = arith.cmpi sle, %3, %1260 : vector<8x128xi32>
    %1262 = arith.andi %1258, %1261 : vector<8x128xi1>
    %cst_536 = arith.constant 0.000000e+00 : f32
    %1263 = vector.broadcast %cst_536 : f32 to vector<8x128xf32>
    %1264 = arith.select %1262, %1255, %1263 : vector<8x128xi1>, vector<8x128xf32>
    %cst_537 = arith.constant 2.000000e+00 : f32
    %1265 = vector.broadcast %cst_537 : f32 to vector<8x128xf32>
    %1266 = arith.addf %12, %1265 : vector<8x128xf32>
    %cst_538 = arith.constant 1.000000e+01 : f32
    %1267 = vector.broadcast %cst_538 : f32 to vector<8x128xf32>
    %1268 = arith.subf %1266, %1267 : vector<8x128xf32>
    %1269 = arith.mulf %1268, %1268 : vector<8x128xf32>
    %1270 = arith.mulf %1264, %1269 : vector<8x128xf32>
    %1271 = arith.addf %1230, %1270 : vector<8x128xf32>
    %c8_539 = arith.constant 8 : index
    %c0_540 = arith.constant 0 : index
    %c0_541 = arith.constant 0 : index
    %1272 = vector.load %arg4[%c8_539, %c0_540, %c0_541] : memref<15x8x128xf32, #tpu.memory_space<vmem>>, vector<1x8x128xf32>
    %1273 = vector.shape_cast %1272 : vector<1x8x128xf32> to vector<8x128xf32>
    %c8_542 = arith.constant 8 : index
    %c0_543 = arith.constant 0 : index
    %c0_544 = arith.constant 0 : index
    %1274 = vector.load %arg5[%c8_542, %c0_543, %c0_544] : memref<15x8x128xf32, #tpu.memory_space<vmem>>, vector<1x8x128xf32>
    %1275 = vector.shape_cast %1274 : vector<1x8x128xf32> to vector<8x128xf32>
    %c1_i32_545 = arith.constant 1 : i32
    %c0_i32_546 = arith.constant 0 : i32
    %1276 = arith.maxsi %c1_i32_545, %c0_i32_546 : i32
    %1277 = vector.broadcast %1276 : i32 to vector<8x128xi32>
    %1278 = arith.cmpi sge, %3, %1277 : vector<8x128xi32>
    %c8_i32_547 = arith.constant 8 : i32
    %c7_i32_548 = arith.constant 7 : i32
    %1279 = arith.minsi %c8_i32_547, %c7_i32_548 : i32
    %1280 = vector.broadcast %1279 : i32 to vector<8x128xi32>
    %1281 = arith.cmpi sle, %3, %1280 : vector<8x128xi32>
    %1282 = arith.andi %1278, %1281 : vector<8x128xi1>
    %1283 = arith.extui %1282 : vector<8x128xi1> to vector<8x128xi32>
    %1284 = arith.sitofp %1283 : vector<8x128xi32> to vector<8x128xf32>
    %1285 = arith.subf %1284, %1273 : vector<8x128xf32>
    %1286 = arith.subf %1285, %1275 : vector<8x128xf32>
    %c9_549 = arith.constant 9 : index
    %c0_550 = arith.constant 0 : index
    %c0_551 = arith.constant 0 : index
    %1287 = vector.load %arg5[%c9_549, %c0_550, %c0_551] : memref<15x8x128xf32, #tpu.memory_space<vmem>>, vector<1x8x128xf32>
    %1288 = vector.shape_cast %1287 : vector<1x8x128xf32> to vector<8x128xf32>
    %1289 = arith.mulf %1273, %1264 : vector<8x128xf32>
    %1290 = arith.mulf %1286, %1264 : vector<8x128xf32>
    %1291 = arith.mulf %1288, %1223 : vector<8x128xf32>
    %1292 = arith.addf %1290, %1291 : vector<8x128xf32>
    %c7_i32_552 = arith.constant 7 : i32
    %1293 = tpu.dynamic_rotate %1292 by %c7_i32_552 dim 0 : vector<8x128xf32>, i32 -> vector<8x128xf32>
    %cst_553 = arith.constant 0.000000e+00 : f32
    %1294 = vector.broadcast %cst_553 : f32 to vector<8x128xf32>
    %1295 = arith.select %7, %1294, %1293 : vector<8x128xi1>, vector<8x128xf32>
    %1296 = arith.addf %1289, %1295 : vector<8x128xf32>
    %c0_i32_554 = arith.constant 0 : i32
    %c0_i32_555 = arith.constant 0 : i32
    %1297 = arith.maxsi %c0_i32_554, %c0_i32_555 : i32
    %1298 = vector.broadcast %1297 : i32 to vector<8x128xi32>
    %1299 = arith.cmpi sge, %3, %1298 : vector<8x128xi32>
    %c7_i32_556 = arith.constant 7 : i32
    %c7_i32_557 = arith.constant 7 : i32
    %1300 = arith.minsi %c7_i32_556, %c7_i32_557 : i32
    %1301 = vector.broadcast %1300 : i32 to vector<8x128xi32>
    %1302 = arith.cmpi sle, %3, %1301 : vector<8x128xi32>
    %1303 = arith.andi %1299, %1302 : vector<8x128xi1>
    %cst_558 = arith.constant 0.000000e+00 : f32
    %1304 = vector.broadcast %cst_558 : f32 to vector<8x128xf32>
    %1305 = arith.select %1303, %1296, %1304 : vector<8x128xi1>, vector<8x128xf32>
    %cst_559 = arith.constant 2.000000e+00 : f32
    %1306 = vector.broadcast %cst_559 : f32 to vector<8x128xf32>
    %1307 = arith.addf %12, %1306 : vector<8x128xf32>
    %cst_560 = arith.constant 9.000000e+00 : f32
    %1308 = vector.broadcast %cst_560 : f32 to vector<8x128xf32>
    %1309 = arith.subf %1307, %1308 : vector<8x128xf32>
    %1310 = arith.mulf %1309, %1309 : vector<8x128xf32>
    %1311 = arith.mulf %1305, %1310 : vector<8x128xf32>
    %1312 = arith.addf %1271, %1311 : vector<8x128xf32>
    %c7_561 = arith.constant 7 : index
    %c0_562 = arith.constant 0 : index
    %c0_563 = arith.constant 0 : index
    %1313 = vector.load %arg4[%c7_561, %c0_562, %c0_563] : memref<15x8x128xf32, #tpu.memory_space<vmem>>, vector<1x8x128xf32>
    %1314 = vector.shape_cast %1313 : vector<1x8x128xf32> to vector<8x128xf32>
    %c7_564 = arith.constant 7 : index
    %c0_565 = arith.constant 0 : index
    %c0_566 = arith.constant 0 : index
    %1315 = vector.load %arg5[%c7_564, %c0_565, %c0_566] : memref<15x8x128xf32, #tpu.memory_space<vmem>>, vector<1x8x128xf32>
    %1316 = vector.shape_cast %1315 : vector<1x8x128xf32> to vector<8x128xf32>
    %c0_i32_567 = arith.constant 0 : i32
    %c0_i32_568 = arith.constant 0 : i32
    %1317 = arith.maxsi %c0_i32_567, %c0_i32_568 : i32
    %1318 = vector.broadcast %1317 : i32 to vector<8x128xi32>
    %1319 = arith.cmpi sge, %3, %1318 : vector<8x128xi32>
    %c7_i32_569 = arith.constant 7 : i32
    %c7_i32_570 = arith.constant 7 : i32
    %1320 = arith.minsi %c7_i32_569, %c7_i32_570 : i32
    %1321 = vector.broadcast %1320 : i32 to vector<8x128xi32>
    %1322 = arith.cmpi sle, %3, %1321 : vector<8x128xi32>
    %1323 = arith.andi %1319, %1322 : vector<8x128xi1>
    %1324 = arith.extui %1323 : vector<8x128xi1> to vector<8x128xi32>
    %1325 = arith.sitofp %1324 : vector<8x128xi32> to vector<8x128xf32>
    %1326 = arith.subf %1325, %1314 : vector<8x128xf32>
    %1327 = arith.subf %1326, %1316 : vector<8x128xf32>
    %c8_571 = arith.constant 8 : index
    %c0_572 = arith.constant 0 : index
    %c0_573 = arith.constant 0 : index
    %1328 = vector.load %arg5[%c8_571, %c0_572, %c0_573] : memref<15x8x128xf32, #tpu.memory_space<vmem>>, vector<1x8x128xf32>
    %1329 = vector.shape_cast %1328 : vector<1x8x128xf32> to vector<8x128xf32>
    %1330 = arith.mulf %1314, %1305 : vector<8x128xf32>
    %1331 = arith.mulf %1327, %1305 : vector<8x128xf32>
    %1332 = arith.mulf %1329, %1264 : vector<8x128xf32>
    %1333 = arith.addf %1331, %1332 : vector<8x128xf32>
    %c7_i32_574 = arith.constant 7 : i32
    %1334 = tpu.dynamic_rotate %1333 by %c7_i32_574 dim 0 : vector<8x128xf32>, i32 -> vector<8x128xf32>
    %cst_575 = arith.constant 0.000000e+00 : f32
    %1335 = vector.broadcast %cst_575 : f32 to vector<8x128xf32>
    %1336 = arith.select %7, %1335, %1334 : vector<8x128xi1>, vector<8x128xf32>
    %1337 = arith.addf %1330, %1336 : vector<8x128xf32>
    %c-1_i32_576 = arith.constant -1 : i32
    %c0_i32_577 = arith.constant 0 : i32
    %1338 = arith.maxsi %c-1_i32_576, %c0_i32_577 : i32
    %1339 = vector.broadcast %1338 : i32 to vector<8x128xi32>
    %1340 = arith.cmpi sge, %3, %1339 : vector<8x128xi32>
    %c6_i32_578 = arith.constant 6 : i32
    %c7_i32_579 = arith.constant 7 : i32
    %1341 = arith.minsi %c6_i32_578, %c7_i32_579 : i32
    %1342 = vector.broadcast %1341 : i32 to vector<8x128xi32>
    %1343 = arith.cmpi sle, %3, %1342 : vector<8x128xi32>
    %1344 = arith.andi %1340, %1343 : vector<8x128xi1>
    %cst_580 = arith.constant 0.000000e+00 : f32
    %1345 = vector.broadcast %cst_580 : f32 to vector<8x128xf32>
    %1346 = arith.select %1344, %1337, %1345 : vector<8x128xi1>, vector<8x128xf32>
    %cst_581 = arith.constant 2.000000e+00 : f32
    %1347 = vector.broadcast %cst_581 : f32 to vector<8x128xf32>
    %1348 = arith.addf %12, %1347 : vector<8x128xf32>
    %cst_582 = arith.constant 8.000000e+00 : f32
    %1349 = vector.broadcast %cst_582 : f32 to vector<8x128xf32>
    %1350 = arith.subf %1348, %1349 : vector<8x128xf32>
    %1351 = arith.mulf %1350, %1350 : vector<8x128xf32>
    %1352 = arith.mulf %1346, %1351 : vector<8x128xf32>
    %1353 = arith.addf %1312, %1352 : vector<8x128xf32>
    %c6_583 = arith.constant 6 : index
    %c0_584 = arith.constant 0 : index
    %c0_585 = arith.constant 0 : index
    %1354 = vector.load %arg4[%c6_583, %c0_584, %c0_585] : memref<15x8x128xf32, #tpu.memory_space<vmem>>, vector<1x8x128xf32>
    %1355 = vector.shape_cast %1354 : vector<1x8x128xf32> to vector<8x128xf32>
    %c6_586 = arith.constant 6 : index
    %c0_587 = arith.constant 0 : index
    %c0_588 = arith.constant 0 : index
    %1356 = vector.load %arg5[%c6_586, %c0_587, %c0_588] : memref<15x8x128xf32, #tpu.memory_space<vmem>>, vector<1x8x128xf32>
    %1357 = vector.shape_cast %1356 : vector<1x8x128xf32> to vector<8x128xf32>
    %c-1_i32_589 = arith.constant -1 : i32
    %c0_i32_590 = arith.constant 0 : i32
    %1358 = arith.maxsi %c-1_i32_589, %c0_i32_590 : i32
    %1359 = vector.broadcast %1358 : i32 to vector<8x128xi32>
    %1360 = arith.cmpi sge, %3, %1359 : vector<8x128xi32>
    %c6_i32_591 = arith.constant 6 : i32
    %c7_i32_592 = arith.constant 7 : i32
    %1361 = arith.minsi %c6_i32_591, %c7_i32_592 : i32
    %1362 = vector.broadcast %1361 : i32 to vector<8x128xi32>
    %1363 = arith.cmpi sle, %3, %1362 : vector<8x128xi32>
    %1364 = arith.andi %1360, %1363 : vector<8x128xi1>
    %1365 = arith.extui %1364 : vector<8x128xi1> to vector<8x128xi32>
    %1366 = arith.sitofp %1365 : vector<8x128xi32> to vector<8x128xf32>
    %1367 = arith.subf %1366, %1355 : vector<8x128xf32>
    %1368 = arith.subf %1367, %1357 : vector<8x128xf32>
    %c7_593 = arith.constant 7 : index
    %c0_594 = arith.constant 0 : index
    %c0_595 = arith.constant 0 : index
    %1369 = vector.load %arg5[%c7_593, %c0_594, %c0_595] : memref<15x8x128xf32, #tpu.memory_space<vmem>>, vector<1x8x128xf32>
    %1370 = vector.shape_cast %1369 : vector<1x8x128xf32> to vector<8x128xf32>
    %1371 = arith.mulf %1355, %1346 : vector<8x128xf32>
    %1372 = arith.mulf %1368, %1346 : vector<8x128xf32>
    %1373 = arith.mulf %1370, %1305 : vector<8x128xf32>
    %1374 = arith.addf %1372, %1373 : vector<8x128xf32>
    %c7_i32_596 = arith.constant 7 : i32
    %1375 = tpu.dynamic_rotate %1374 by %c7_i32_596 dim 0 : vector<8x128xf32>, i32 -> vector<8x128xf32>
    %cst_597 = arith.constant 0.000000e+00 : f32
    %1376 = vector.broadcast %cst_597 : f32 to vector<8x128xf32>
    %1377 = arith.select %7, %1376, %1375 : vector<8x128xi1>, vector<8x128xf32>
    %1378 = arith.addf %1371, %1377 : vector<8x128xf32>
    %c-2_i32_598 = arith.constant -2 : i32
    %c0_i32_599 = arith.constant 0 : i32
    %1379 = arith.maxsi %c-2_i32_598, %c0_i32_599 : i32
    %1380 = vector.broadcast %1379 : i32 to vector<8x128xi32>
    %1381 = arith.cmpi sge, %3, %1380 : vector<8x128xi32>
    %c5_i32_600 = arith.constant 5 : i32
    %c7_i32_601 = arith.constant 7 : i32
    %1382 = arith.minsi %c5_i32_600, %c7_i32_601 : i32
    %1383 = vector.broadcast %1382 : i32 to vector<8x128xi32>
    %1384 = arith.cmpi sle, %3, %1383 : vector<8x128xi32>
    %1385 = arith.andi %1381, %1384 : vector<8x128xi1>
    %cst_602 = arith.constant 0.000000e+00 : f32
    %1386 = vector.broadcast %cst_602 : f32 to vector<8x128xf32>
    %1387 = arith.select %1385, %1378, %1386 : vector<8x128xi1>, vector<8x128xf32>
    %cst_603 = arith.constant 2.000000e+00 : f32
    %1388 = vector.broadcast %cst_603 : f32 to vector<8x128xf32>
    %1389 = arith.addf %12, %1388 : vector<8x128xf32>
    %cst_604 = arith.constant 7.000000e+00 : f32
    %1390 = vector.broadcast %cst_604 : f32 to vector<8x128xf32>
    %1391 = arith.subf %1389, %1390 : vector<8x128xf32>
    %1392 = arith.mulf %1391, %1391 : vector<8x128xf32>
    %1393 = arith.mulf %1387, %1392 : vector<8x128xf32>
    %1394 = arith.addf %1353, %1393 : vector<8x128xf32>
    %c5_605 = arith.constant 5 : index
    %c0_606 = arith.constant 0 : index
    %c0_607 = arith.constant 0 : index
    %1395 = vector.load %arg4[%c5_605, %c0_606, %c0_607] : memref<15x8x128xf32, #tpu.memory_space<vmem>>, vector<1x8x128xf32>
    %1396 = vector.shape_cast %1395 : vector<1x8x128xf32> to vector<8x128xf32>
    %c5_608 = arith.constant 5 : index
    %c0_609 = arith.constant 0 : index
    %c0_610 = arith.constant 0 : index
    %1397 = vector.load %arg5[%c5_608, %c0_609, %c0_610] : memref<15x8x128xf32, #tpu.memory_space<vmem>>, vector<1x8x128xf32>
    %1398 = vector.shape_cast %1397 : vector<1x8x128xf32> to vector<8x128xf32>
    %c-2_i32_611 = arith.constant -2 : i32
    %c0_i32_612 = arith.constant 0 : i32
    %1399 = arith.maxsi %c-2_i32_611, %c0_i32_612 : i32
    %1400 = vector.broadcast %1399 : i32 to vector<8x128xi32>
    %1401 = arith.cmpi sge, %3, %1400 : vector<8x128xi32>
    %c5_i32_613 = arith.constant 5 : i32
    %c7_i32_614 = arith.constant 7 : i32
    %1402 = arith.minsi %c5_i32_613, %c7_i32_614 : i32
    %1403 = vector.broadcast %1402 : i32 to vector<8x128xi32>
    %1404 = arith.cmpi sle, %3, %1403 : vector<8x128xi32>
    %1405 = arith.andi %1401, %1404 : vector<8x128xi1>
    %1406 = arith.extui %1405 : vector<8x128xi1> to vector<8x128xi32>
    %1407 = arith.sitofp %1406 : vector<8x128xi32> to vector<8x128xf32>
    %1408 = arith.subf %1407, %1396 : vector<8x128xf32>
    %1409 = arith.subf %1408, %1398 : vector<8x128xf32>
    %c6_615 = arith.constant 6 : index
    %c0_616 = arith.constant 0 : index
    %c0_617 = arith.constant 0 : index
    %1410 = vector.load %arg5[%c6_615, %c0_616, %c0_617] : memref<15x8x128xf32, #tpu.memory_space<vmem>>, vector<1x8x128xf32>
    %1411 = vector.shape_cast %1410 : vector<1x8x128xf32> to vector<8x128xf32>
    %1412 = arith.mulf %1396, %1387 : vector<8x128xf32>
    %1413 = arith.mulf %1409, %1387 : vector<8x128xf32>
    %1414 = arith.mulf %1411, %1346 : vector<8x128xf32>
    %1415 = arith.addf %1413, %1414 : vector<8x128xf32>
    %c7_i32_618 = arith.constant 7 : i32
    %1416 = tpu.dynamic_rotate %1415 by %c7_i32_618 dim 0 : vector<8x128xf32>, i32 -> vector<8x128xf32>
    %cst_619 = arith.constant 0.000000e+00 : f32
    %1417 = vector.broadcast %cst_619 : f32 to vector<8x128xf32>
    %1418 = arith.select %7, %1417, %1416 : vector<8x128xi1>, vector<8x128xf32>
    %1419 = arith.addf %1412, %1418 : vector<8x128xf32>
    %c-3_i32_620 = arith.constant -3 : i32
    %c0_i32_621 = arith.constant 0 : i32
    %1420 = arith.maxsi %c-3_i32_620, %c0_i32_621 : i32
    %1421 = vector.broadcast %1420 : i32 to vector<8x128xi32>
    %1422 = arith.cmpi sge, %3, %1421 : vector<8x128xi32>
    %c4_i32_622 = arith.constant 4 : i32
    %c7_i32_623 = arith.constant 7 : i32
    %1423 = arith.minsi %c4_i32_622, %c7_i32_623 : i32
    %1424 = vector.broadcast %1423 : i32 to vector<8x128xi32>
    %1425 = arith.cmpi sle, %3, %1424 : vector<8x128xi32>
    %1426 = arith.andi %1422, %1425 : vector<8x128xi1>
    %cst_624 = arith.constant 0.000000e+00 : f32
    %1427 = vector.broadcast %cst_624 : f32 to vector<8x128xf32>
    %1428 = arith.select %1426, %1419, %1427 : vector<8x128xi1>, vector<8x128xf32>
    %cst_625 = arith.constant 2.000000e+00 : f32
    %1429 = vector.broadcast %cst_625 : f32 to vector<8x128xf32>
    %1430 = arith.addf %12, %1429 : vector<8x128xf32>
    %cst_626 = arith.constant 6.000000e+00 : f32
    %1431 = vector.broadcast %cst_626 : f32 to vector<8x128xf32>
    %1432 = arith.subf %1430, %1431 : vector<8x128xf32>
    %1433 = arith.mulf %1432, %1432 : vector<8x128xf32>
    %1434 = arith.mulf %1428, %1433 : vector<8x128xf32>
    %1435 = arith.addf %1394, %1434 : vector<8x128xf32>
    %c4_627 = arith.constant 4 : index
    %c0_628 = arith.constant 0 : index
    %c0_629 = arith.constant 0 : index
    %1436 = vector.load %arg4[%c4_627, %c0_628, %c0_629] : memref<15x8x128xf32, #tpu.memory_space<vmem>>, vector<1x8x128xf32>
    %1437 = vector.shape_cast %1436 : vector<1x8x128xf32> to vector<8x128xf32>
    %c4_630 = arith.constant 4 : index
    %c0_631 = arith.constant 0 : index
    %c0_632 = arith.constant 0 : index
    %1438 = vector.load %arg5[%c4_630, %c0_631, %c0_632] : memref<15x8x128xf32, #tpu.memory_space<vmem>>, vector<1x8x128xf32>
    %1439 = vector.shape_cast %1438 : vector<1x8x128xf32> to vector<8x128xf32>
    %c-3_i32_633 = arith.constant -3 : i32
    %c0_i32_634 = arith.constant 0 : i32
    %1440 = arith.maxsi %c-3_i32_633, %c0_i32_634 : i32
    %1441 = vector.broadcast %1440 : i32 to vector<8x128xi32>
    %1442 = arith.cmpi sge, %3, %1441 : vector<8x128xi32>
    %c4_i32_635 = arith.constant 4 : i32
    %c7_i32_636 = arith.constant 7 : i32
    %1443 = arith.minsi %c4_i32_635, %c7_i32_636 : i32
    %1444 = vector.broadcast %1443 : i32 to vector<8x128xi32>
    %1445 = arith.cmpi sle, %3, %1444 : vector<8x128xi32>
    %1446 = arith.andi %1442, %1445 : vector<8x128xi1>
    %1447 = arith.extui %1446 : vector<8x128xi1> to vector<8x128xi32>
    %1448 = arith.sitofp %1447 : vector<8x128xi32> to vector<8x128xf32>
    %1449 = arith.subf %1448, %1437 : vector<8x128xf32>
    %1450 = arith.subf %1449, %1439 : vector<8x128xf32>
    %c5_637 = arith.constant 5 : index
    %c0_638 = arith.constant 0 : index
    %c0_639 = arith.constant 0 : index
    %1451 = vector.load %arg5[%c5_637, %c0_638, %c0_639] : memref<15x8x128xf32, #tpu.memory_space<vmem>>, vector<1x8x128xf32>
    %1452 = vector.shape_cast %1451 : vector<1x8x128xf32> to vector<8x128xf32>
    %1453 = arith.mulf %1437, %1428 : vector<8x128xf32>
    %1454 = arith.mulf %1450, %1428 : vector<8x128xf32>
    %1455 = arith.mulf %1452, %1387 : vector<8x128xf32>
    %1456 = arith.addf %1454, %1455 : vector<8x128xf32>
    %c7_i32_640 = arith.constant 7 : i32
    %1457 = tpu.dynamic_rotate %1456 by %c7_i32_640 dim 0 : vector<8x128xf32>, i32 -> vector<8x128xf32>
    %cst_641 = arith.constant 0.000000e+00 : f32
    %1458 = vector.broadcast %cst_641 : f32 to vector<8x128xf32>
    %1459 = arith.select %7, %1458, %1457 : vector<8x128xi1>, vector<8x128xf32>
    %1460 = arith.addf %1453, %1459 : vector<8x128xf32>
    %c-4_i32_642 = arith.constant -4 : i32
    %c0_i32_643 = arith.constant 0 : i32
    %1461 = arith.maxsi %c-4_i32_642, %c0_i32_643 : i32
    %1462 = vector.broadcast %1461 : i32 to vector<8x128xi32>
    %1463 = arith.cmpi sge, %3, %1462 : vector<8x128xi32>
    %c3_i32_644 = arith.constant 3 : i32
    %c7_i32_645 = arith.constant 7 : i32
    %1464 = arith.minsi %c3_i32_644, %c7_i32_645 : i32
    %1465 = vector.broadcast %1464 : i32 to vector<8x128xi32>
    %1466 = arith.cmpi sle, %3, %1465 : vector<8x128xi32>
    %1467 = arith.andi %1463, %1466 : vector<8x128xi1>
    %cst_646 = arith.constant 0.000000e+00 : f32
    %1468 = vector.broadcast %cst_646 : f32 to vector<8x128xf32>
    %1469 = arith.select %1467, %1460, %1468 : vector<8x128xi1>, vector<8x128xf32>
    %cst_647 = arith.constant 2.000000e+00 : f32
    %1470 = vector.broadcast %cst_647 : f32 to vector<8x128xf32>
    %1471 = arith.addf %12, %1470 : vector<8x128xf32>
    %cst_648 = arith.constant 5.000000e+00 : f32
    %1472 = vector.broadcast %cst_648 : f32 to vector<8x128xf32>
    %1473 = arith.subf %1471, %1472 : vector<8x128xf32>
    %1474 = arith.mulf %1473, %1473 : vector<8x128xf32>
    %1475 = arith.mulf %1469, %1474 : vector<8x128xf32>
    %1476 = arith.addf %1435, %1475 : vector<8x128xf32>
    %c3_649 = arith.constant 3 : index
    %c0_650 = arith.constant 0 : index
    %c0_651 = arith.constant 0 : index
    %1477 = vector.load %arg4[%c3_649, %c0_650, %c0_651] : memref<15x8x128xf32, #tpu.memory_space<vmem>>, vector<1x8x128xf32>
    %1478 = vector.shape_cast %1477 : vector<1x8x128xf32> to vector<8x128xf32>
    %c3_652 = arith.constant 3 : index
    %c0_653 = arith.constant 0 : index
    %c0_654 = arith.constant 0 : index
    %1479 = vector.load %arg5[%c3_652, %c0_653, %c0_654] : memref<15x8x128xf32, #tpu.memory_space<vmem>>, vector<1x8x128xf32>
    %1480 = vector.shape_cast %1479 : vector<1x8x128xf32> to vector<8x128xf32>
    %c-4_i32_655 = arith.constant -4 : i32
    %c0_i32_656 = arith.constant 0 : i32
    %1481 = arith.maxsi %c-4_i32_655, %c0_i32_656 : i32
    %1482 = vector.broadcast %1481 : i32 to vector<8x128xi32>
    %1483 = arith.cmpi sge, %3, %1482 : vector<8x128xi32>
    %c3_i32_657 = arith.constant 3 : i32
    %c7_i32_658 = arith.constant 7 : i32
    %1484 = arith.minsi %c3_i32_657, %c7_i32_658 : i32
    %1485 = vector.broadcast %1484 : i32 to vector<8x128xi32>
    %1486 = arith.cmpi sle, %3, %1485 : vector<8x128xi32>
    %1487 = arith.andi %1483, %1486 : vector<8x128xi1>
    %1488 = arith.extui %1487 : vector<8x128xi1> to vector<8x128xi32>
    %1489 = arith.sitofp %1488 : vector<8x128xi32> to vector<8x128xf32>
    %1490 = arith.subf %1489, %1478 : vector<8x128xf32>
    %1491 = arith.subf %1490, %1480 : vector<8x128xf32>
    %c4_659 = arith.constant 4 : index
    %c0_660 = arith.constant 0 : index
    %c0_661 = arith.constant 0 : index
    %1492 = vector.load %arg5[%c4_659, %c0_660, %c0_661] : memref<15x8x128xf32, #tpu.memory_space<vmem>>, vector<1x8x128xf32>
    %1493 = vector.shape_cast %1492 : vector<1x8x128xf32> to vector<8x128xf32>
    %1494 = arith.mulf %1478, %1469 : vector<8x128xf32>
    %1495 = arith.mulf %1491, %1469 : vector<8x128xf32>
    %1496 = arith.mulf %1493, %1428 : vector<8x128xf32>
    %1497 = arith.addf %1495, %1496 : vector<8x128xf32>
    %c7_i32_662 = arith.constant 7 : i32
    %1498 = tpu.dynamic_rotate %1497 by %c7_i32_662 dim 0 : vector<8x128xf32>, i32 -> vector<8x128xf32>
    %cst_663 = arith.constant 0.000000e+00 : f32
    %1499 = vector.broadcast %cst_663 : f32 to vector<8x128xf32>
    %1500 = arith.select %7, %1499, %1498 : vector<8x128xi1>, vector<8x128xf32>
    %1501 = arith.addf %1494, %1500 : vector<8x128xf32>
    %c-5_i32_664 = arith.constant -5 : i32
    %c0_i32_665 = arith.constant 0 : i32
    %1502 = arith.maxsi %c-5_i32_664, %c0_i32_665 : i32
    %1503 = vector.broadcast %1502 : i32 to vector<8x128xi32>
    %1504 = arith.cmpi sge, %3, %1503 : vector<8x128xi32>
    %c2_i32_666 = arith.constant 2 : i32
    %c7_i32_667 = arith.constant 7 : i32
    %1505 = arith.minsi %c2_i32_666, %c7_i32_667 : i32
    %1506 = vector.broadcast %1505 : i32 to vector<8x128xi32>
    %1507 = arith.cmpi sle, %3, %1506 : vector<8x128xi32>
    %1508 = arith.andi %1504, %1507 : vector<8x128xi1>
    %cst_668 = arith.constant 0.000000e+00 : f32
    %1509 = vector.broadcast %cst_668 : f32 to vector<8x128xf32>
    %1510 = arith.select %1508, %1501, %1509 : vector<8x128xi1>, vector<8x128xf32>
    %cst_669 = arith.constant 2.000000e+00 : f32
    %1511 = vector.broadcast %cst_669 : f32 to vector<8x128xf32>
    %1512 = arith.addf %12, %1511 : vector<8x128xf32>
    %cst_670 = arith.constant 4.000000e+00 : f32
    %1513 = vector.broadcast %cst_670 : f32 to vector<8x128xf32>
    %1514 = arith.subf %1512, %1513 : vector<8x128xf32>
    %1515 = arith.mulf %1514, %1514 : vector<8x128xf32>
    %1516 = arith.mulf %1510, %1515 : vector<8x128xf32>
    %1517 = arith.addf %1476, %1516 : vector<8x128xf32>
    %c2_671 = arith.constant 2 : index
    %c0_672 = arith.constant 0 : index
    %c0_673 = arith.constant 0 : index
    %1518 = vector.load %arg4[%c2_671, %c0_672, %c0_673] : memref<15x8x128xf32, #tpu.memory_space<vmem>>, vector<1x8x128xf32>
    %1519 = vector.shape_cast %1518 : vector<1x8x128xf32> to vector<8x128xf32>
    %c2_674 = arith.constant 2 : index
    %c0_675 = arith.constant 0 : index
    %c0_676 = arith.constant 0 : index
    %1520 = vector.load %arg5[%c2_674, %c0_675, %c0_676] : memref<15x8x128xf32, #tpu.memory_space<vmem>>, vector<1x8x128xf32>
    %1521 = vector.shape_cast %1520 : vector<1x8x128xf32> to vector<8x128xf32>
    %c-5_i32_677 = arith.constant -5 : i32
    %c0_i32_678 = arith.constant 0 : i32
    %1522 = arith.maxsi %c-5_i32_677, %c0_i32_678 : i32
    %1523 = vector.broadcast %1522 : i32 to vector<8x128xi32>
    %1524 = arith.cmpi sge, %3, %1523 : vector<8x128xi32>
    %c2_i32_679 = arith.constant 2 : i32
    %c7_i32_680 = arith.constant 7 : i32
    %1525 = arith.minsi %c2_i32_679, %c7_i32_680 : i32
    %1526 = vector.broadcast %1525 : i32 to vector<8x128xi32>
    %1527 = arith.cmpi sle, %3, %1526 : vector<8x128xi32>
    %1528 = arith.andi %1524, %1527 : vector<8x128xi1>
    %1529 = arith.extui %1528 : vector<8x128xi1> to vector<8x128xi32>
    %1530 = arith.sitofp %1529 : vector<8x128xi32> to vector<8x128xf32>
    %1531 = arith.subf %1530, %1519 : vector<8x128xf32>
    %1532 = arith.subf %1531, %1521 : vector<8x128xf32>
    %c3_681 = arith.constant 3 : index
    %c0_682 = arith.constant 0 : index
    %c0_683 = arith.constant 0 : index
    %1533 = vector.load %arg5[%c3_681, %c0_682, %c0_683] : memref<15x8x128xf32, #tpu.memory_space<vmem>>, vector<1x8x128xf32>
    %1534 = vector.shape_cast %1533 : vector<1x8x128xf32> to vector<8x128xf32>
    %1535 = arith.mulf %1519, %1510 : vector<8x128xf32>
    %1536 = arith.mulf %1532, %1510 : vector<8x128xf32>
    %1537 = arith.mulf %1534, %1469 : vector<8x128xf32>
    %1538 = arith.addf %1536, %1537 : vector<8x128xf32>
    %c7_i32_684 = arith.constant 7 : i32
    %1539 = tpu.dynamic_rotate %1538 by %c7_i32_684 dim 0 : vector<8x128xf32>, i32 -> vector<8x128xf32>
    %cst_685 = arith.constant 0.000000e+00 : f32
    %1540 = vector.broadcast %cst_685 : f32 to vector<8x128xf32>
    %1541 = arith.select %7, %1540, %1539 : vector<8x128xi1>, vector<8x128xf32>
    %1542 = arith.addf %1535, %1541 : vector<8x128xf32>
    %c-6_i32_686 = arith.constant -6 : i32
    %c0_i32_687 = arith.constant 0 : i32
    %1543 = arith.maxsi %c-6_i32_686, %c0_i32_687 : i32
    %1544 = vector.broadcast %1543 : i32 to vector<8x128xi32>
    %1545 = arith.cmpi sge, %3, %1544 : vector<8x128xi32>
    %c1_i32_688 = arith.constant 1 : i32
    %c7_i32_689 = arith.constant 7 : i32
    %1546 = arith.minsi %c1_i32_688, %c7_i32_689 : i32
    %1547 = vector.broadcast %1546 : i32 to vector<8x128xi32>
    %1548 = arith.cmpi sle, %3, %1547 : vector<8x128xi32>
    %1549 = arith.andi %1545, %1548 : vector<8x128xi1>
    %cst_690 = arith.constant 0.000000e+00 : f32
    %1550 = vector.broadcast %cst_690 : f32 to vector<8x128xf32>
    %1551 = arith.select %1549, %1542, %1550 : vector<8x128xi1>, vector<8x128xf32>
    %cst_691 = arith.constant 2.000000e+00 : f32
    %1552 = vector.broadcast %cst_691 : f32 to vector<8x128xf32>
    %1553 = arith.addf %12, %1552 : vector<8x128xf32>
    %cst_692 = arith.constant 3.000000e+00 : f32
    %1554 = vector.broadcast %cst_692 : f32 to vector<8x128xf32>
    %1555 = arith.subf %1553, %1554 : vector<8x128xf32>
    %1556 = arith.mulf %1555, %1555 : vector<8x128xf32>
    %1557 = arith.mulf %1551, %1556 : vector<8x128xf32>
    %1558 = arith.addf %1517, %1557 : vector<8x128xf32>
    %c1_693 = arith.constant 1 : index
    %c0_694 = arith.constant 0 : index
    %c0_695 = arith.constant 0 : index
    %1559 = vector.load %arg4[%c1_693, %c0_694, %c0_695] : memref<15x8x128xf32, #tpu.memory_space<vmem>>, vector<1x8x128xf32>
    %1560 = vector.shape_cast %1559 : vector<1x8x128xf32> to vector<8x128xf32>
    %c1_696 = arith.constant 1 : index
    %c0_697 = arith.constant 0 : index
    %c0_698 = arith.constant 0 : index
    %1561 = vector.load %arg5[%c1_696, %c0_697, %c0_698] : memref<15x8x128xf32, #tpu.memory_space<vmem>>, vector<1x8x128xf32>
    %1562 = vector.shape_cast %1561 : vector<1x8x128xf32> to vector<8x128xf32>
    %c-6_i32_699 = arith.constant -6 : i32
    %c0_i32_700 = arith.constant 0 : i32
    %1563 = arith.maxsi %c-6_i32_699, %c0_i32_700 : i32
    %1564 = vector.broadcast %1563 : i32 to vector<8x128xi32>
    %1565 = arith.cmpi sge, %3, %1564 : vector<8x128xi32>
    %c1_i32_701 = arith.constant 1 : i32
    %c7_i32_702 = arith.constant 7 : i32
    %1566 = arith.minsi %c1_i32_701, %c7_i32_702 : i32
    %1567 = vector.broadcast %1566 : i32 to vector<8x128xi32>
    %1568 = arith.cmpi sle, %3, %1567 : vector<8x128xi32>
    %1569 = arith.andi %1565, %1568 : vector<8x128xi1>
    %1570 = arith.extui %1569 : vector<8x128xi1> to vector<8x128xi32>
    %1571 = arith.sitofp %1570 : vector<8x128xi32> to vector<8x128xf32>
    %1572 = arith.subf %1571, %1560 : vector<8x128xf32>
    %1573 = arith.subf %1572, %1562 : vector<8x128xf32>
    %c2_703 = arith.constant 2 : index
    %c0_704 = arith.constant 0 : index
    %c0_705 = arith.constant 0 : index
    %1574 = vector.load %arg5[%c2_703, %c0_704, %c0_705] : memref<15x8x128xf32, #tpu.memory_space<vmem>>, vector<1x8x128xf32>
    %1575 = vector.shape_cast %1574 : vector<1x8x128xf32> to vector<8x128xf32>
    %1576 = arith.mulf %1560, %1551 : vector<8x128xf32>
    %1577 = arith.mulf %1573, %1551 : vector<8x128xf32>
    %1578 = arith.mulf %1575, %1510 : vector<8x128xf32>
    %1579 = arith.addf %1577, %1578 : vector<8x128xf32>
    %c7_i32_706 = arith.constant 7 : i32
    %1580 = tpu.dynamic_rotate %1579 by %c7_i32_706 dim 0 : vector<8x128xf32>, i32 -> vector<8x128xf32>
    %cst_707 = arith.constant 0.000000e+00 : f32
    %1581 = vector.broadcast %cst_707 : f32 to vector<8x128xf32>
    %1582 = arith.select %7, %1581, %1580 : vector<8x128xi1>, vector<8x128xf32>
    %1583 = arith.addf %1576, %1582 : vector<8x128xf32>
    %c-7_i32_708 = arith.constant -7 : i32
    %c0_i32_709 = arith.constant 0 : i32
    %1584 = arith.maxsi %c-7_i32_708, %c0_i32_709 : i32
    %1585 = vector.broadcast %1584 : i32 to vector<8x128xi32>
    %1586 = arith.cmpi sge, %3, %1585 : vector<8x128xi32>
    %c0_i32_710 = arith.constant 0 : i32
    %c7_i32_711 = arith.constant 7 : i32
    %1587 = arith.minsi %c0_i32_710, %c7_i32_711 : i32
    %1588 = vector.broadcast %1587 : i32 to vector<8x128xi32>
    %1589 = arith.cmpi sle, %3, %1588 : vector<8x128xi32>
    %1590 = arith.andi %1586, %1589 : vector<8x128xi1>
    %cst_712 = arith.constant 0.000000e+00 : f32
    %1591 = vector.broadcast %cst_712 : f32 to vector<8x128xf32>
    %1592 = arith.select %1590, %1583, %1591 : vector<8x128xi1>, vector<8x128xf32>
    %cst_713 = arith.constant 2.000000e+00 : f32
    %1593 = vector.broadcast %cst_713 : f32 to vector<8x128xf32>
    %1594 = arith.addf %12, %1593 : vector<8x128xf32>
    %cst_714 = arith.constant 2.000000e+00 : f32
    %1595 = vector.broadcast %cst_714 : f32 to vector<8x128xf32>
    %1596 = arith.subf %1594, %1595 : vector<8x128xf32>
    %1597 = arith.mulf %1596, %1596 : vector<8x128xf32>
    %1598 = arith.mulf %1592, %1597 : vector<8x128xf32>
    %1599 = arith.addf %1558, %1598 : vector<8x128xf32>
    %cst_715 = arith.constant dense<0.000000e+00> : vector<128xf32>
    %1600 = vector.multi_reduction <add>, %1599, %cst_715 [0] : vector<8x128xf32> to vector<128xf32>
    %1601 = vector.shape_cast %1600 : vector<128xf32> to vector<1x128xf32>
    %1602 = tpu.iota {dimensions = array<i32: 0>} : vector<8x128xi32>
    %c0_i32_716 = arith.constant 0 : i32
    %1603 = vector.broadcast %c0_i32_716 : i32 to vector<8x128xi32>
    %1604 = arith.cmpi eq, %1602, %1603 : vector<8x128xi32>
    %cst_717 = arith.constant 0.000000e+00 : f32
    %1605 = vector.shape_cast %1021 : vector<1x128xf32> to vector<1x128xf32>
    %1606 = vector.broadcast %1605 : vector<1x128xf32> to vector<8x128xf32>
    %1607 = vector.broadcast %cst_717 : f32 to vector<8x128xf32>
    %1608 = arith.select %1604, %1606, %1607 : vector<8x128xi1>, vector<8x128xf32>
    %c1_i32_718 = arith.constant 1 : i32
    %1609 = vector.broadcast %c1_i32_718 : i32 to vector<8x128xi32>
    %1610 = arith.cmpi eq, %1602, %1609 : vector<8x128xi32>
    %cst_719 = arith.constant 0.000000e+00 : f32
    %1611 = vector.shape_cast %1601 : vector<1x128xf32> to vector<1x128xf32>
    %1612 = vector.broadcast %1611 : vector<1x128xf32> to vector<8x128xf32>
    %1613 = vector.broadcast %cst_719 : f32 to vector<8x128xf32>
    %1614 = arith.select %1610, %1612, %1613 : vector<8x128xi1>, vector<8x128xf32>
    %1615 = arith.addf %1608, %1614 : vector<8x128xf32>
    %1616 = vector.shape_cast %1615 : vector<8x128xf32> to vector<1x8x128xf32>
    %c0_720 = arith.constant 0 : index
    %c0_721 = arith.constant 0 : index
    %c0_722 = arith.constant 0 : index
    %1617 = vector.load %arg3[%c0_720, %c0_721, %c0_722] : memref<1x8x128xf32, #tpu.memory_space<vmem>>, vector<1x8x128xf32>
    tpu.vector_store %arg3[%c0_720, %c0_721, %c0_722], %1616 {strides = array<i32>} : memref<1x8x128xf32, #tpu.memory_space<vmem>>, vector<1x8x128xf32>,
    return
  }
  func.func @transform_0(%arg0: i32) -> (i32, i32) {
    %c0_i32 = arith.constant 0 : i32
    %c0_i32_0 = arith.constant 0 : i32
    return %c0_i32, %arg0 : i32, i32
  }
  func.func @transform_1(%arg0: i32) -> (i32, i32) {
    %c0_i32 = arith.constant 0 : i32
    %c0_i32_0 = arith.constant 0 : i32
    return %c0_i32, %arg0 : i32, i32
  }
  func.func @transform_2(%arg0: i32) -> (i32, i32, i32) {
    %c0_i32 = arith.constant 0 : i32
    %c0_i32_0 = arith.constant 0 : i32
    %c0_i32_1 = arith.constant 0 : i32
    return %arg0, %c0_i32, %c0_i32_0 : i32, i32, i32
  }
}

</mosaic_0001>

<llo_original>
// kernel: tpu_custom_call.1
$region0: #{tpu_custom_call.1}
  #allocation0 [shape = 'u32[]', space=smem, size = 0x4, offset = 0x4, fixed_abs, tag = 'smem constant byte address 0x4 - core index']
  #allocation1 [shape = 'u32[144,128]{1,0:T(1,128)}', space=vmem, size = 0x12000, scoped, tag = 'internal scratch']
  #allocation2 [shape = 'f32[15,8,128]{2,1,0:T(8,128)}', space=vmem, size = 0xf000, scoped, tag = 'scratch operand']
  #allocation3 [shape = 'f32[15,8,128]{2,1,0:T(8,128)}', space=vmem, size = 0xf000, scoped, tag = 'scratch operand']
  %s0 = inlined_call_operand.hbm [shape: f32[8,128], index: 0, kind: input, shape index: {}]
  %s1 = inlined_call_operand.hbm [shape: f32[8,128], index: 1, kind: input, shape index: {}]
  %s2 = inlined_call_operand.hbm [shape: f32[1,8,128], index: 2, kind: output, shape index: {}]
  %s3 = sld [smem:[#allocation0]]
  $region26: #{tpu_custom_call.1} parent=0
    _
  %s5 = ssub.s32 1, %s3
  %s6 = scalar_select 0, %s5, %s3
  $region1: #{tpu_custom_call.1} parent=0
    #allocation4 [shape = 'u8[4096]{0}', space=vmem, size = 0x1000, scoped, tag = 'input window, operand 0, single buffered']
    #allocation5 [shape = 's32[1]{0}', space=sflag, size = 0x4, scoped, tag = 'scoped memory for tpu_custom_call.1']
    #allocation6 [shape = 's32[1]{0}', space=sflag, size = 0x4, scoped, tag = 'scoped memory for tpu_custom_call.1']
    #allocation7 [shape = 'u8[4096]{0}', space=vmem, size = 0x1000, scoped, tag = 'input window, operand 1, single buffered']
    #allocation8 [shape = 's32[1]{0}', space=sflag, size = 0x4, scoped, tag = 'scoped memory for tpu_custom_call.1']
    #allocation9 [shape = 'u8[4096]{0}', space=vmem, size = 0x1000, scoped, tag = 'output window, operand 0, single buffered']
    %7 = vsyncpa [#allocation5], 0
    %8 = vsyncpa [#allocation8], 0
    %9 = vsyncpa [#allocation6], 0
    // Predicated region
    $region2: #{tpu_custom_call.1} parent=1 // pred_check
      _
    $region3: #{tpu_custom_call.1} parent=1 // pred_check_branch
      %11 = sbr.rel (0) target = $region5
    $region4: #{tpu_custom_call.1} parent=1 // pred_region
      %s13 = ssub.s32 128, 128
      %14 = vsyncadd [#allocation5], %s13
      %s16 = sshll.u32 [#allocation4], 4
      %s17 = int_to_ptr.vmem [resolvable:$true] %s16
      %19 = dma.hbm_to_vmem [thread:$0]  %s0, 128, %s17, [#allocation5]
    $region5: #{tpu_custom_call.1} parent=1 // pred_fallthru
      _
    // Predicated region
    $region6: #{tpu_custom_call.1} parent=1 // pred_check
      _
    $region7: #{tpu_custom_call.1} parent=1 // pred_check_branch
      %21 = sbr.rel (0) target = $region9
    $region8: #{tpu_custom_call.1} parent=1 // pred_region
      %s23 = ssub.s32 128, 128
      %24 = vsyncadd [#allocation8], %s23
      %s26 = sshll.u32 [#allocation7], 4
      %s27 = int_to_ptr.vmem [resolvable:$true] %s26
      %29 = dma.hbm_to_vmem [thread:$0]  %s1, 128, %s27, [#allocation8]
    $region9: #{tpu_custom_call.1} parent=1 // pred_fallthru
      _
    // Predicated region
    $region10: #{tpu_custom_call.1} parent=1 // pred_check
      _
    $region11: #{tpu_custom_call.1} parent=1 // pred_check_branch
      %31 = sbr.rel (0) target = $region13
    $region12: #{tpu_custom_call.1} parent=1 // pred_region
      %32 = dma.done [#allocation5], 128
    $region13: #{tpu_custom_call.1} parent=1 // pred_fallthru
      _
    // Predicated region
    $region14: #{tpu_custom_call.1} parent=1 // pred_check
      _
    $region15: #{tpu_custom_call.1} parent=1 // pred_check_branch
      %34 = sbr.rel (0) target = $region17
    $region16: #{tpu_custom_call.1} parent=1 // pred_region
      %35 = dma.done [#allocation8], 128
    $region17: #{tpu_custom_call.1} parent=1 // pred_fallthru
      _
    %v36 = vld [vmem:[#allocation4] sm:$0xff]
    %v37 = vld [vmem:[#allocation7] sm:$0xff]
    %v38 = vmul.f32 %v36, %v36
    %v39 = vlaneseq
    %v40 = vshrl.u32 %v39, 7
    %vm41 = vcmp.eq.s32.totalorder %v40, 0
    %vm42 = vcmp.eq.s32.totalorder %v40, 7
    %v43 = vmul.u32 %v40, 2
    %v44 = vcvt.s32.f32 %v43
    %v45 = vrot.slane %v37, 7
    %v46 = vmul.f32 %v45, %v45
    %v47 = vadd.f32 %v38, %v46
    %v48 = vmul.f32 %v36, 2.0
    %v49 = vmul.f32 %v48, %v45
    %v50 = vsub.f32 %v47, %v49
    %v51 = vmax.f32 %v50, 0.0
    %v52 = vsel %vm41, 0.0, 1e+10
    %v53 = vsel %vm41, 1e+10, 1e+10
    %v54 = vsub.f32 0.0, %v52
    %v55 = vsub.f32 0.0, %v53
    %v56 = vmax.f32 %v54, -1e+10
    %v57 = vmax.f32 %v56, %v55
    %v58 = vsub.f32 -1e+10, %v57
    %v59 = vmul.f32 %v58, 1000.0
    %v60 = vmul.f32 %v59, 1.442695
    %v61 = vpow.pop %v60
    %v62 = vsub.f32 %v54, %v57
    %v63 = vmul.f32 %v62, 1000.0
    %v64 = vmul.f32 %v63, 1.442695
    %v65 = vpow.pop %v64
    %v66 = vsub.f32 %v55, %v57
    %v67 = vmul.f32 %v66, 1000.0
    %v68 = vmul.f32 %v67, 1.442695
    %v69 = vpow.pop %v68
    %v70 = vadd.f32 %v61, %v65
    %v71 = vadd.f32 %v70, %v69
    %vm72 = vcmp.ge.s32.totalorder %v40, 0
    %vm73 = vcmp.le.s32.totalorder %v40, 0
    %vm74 = vmand %vm72, %vm73
    %v75 = vrcp.pop %v71
    %v76 = vsel %vm74, 1, 0
    %v77 = vcvt.s32.f32 %v76
    %v78 = vmul.f32 %v75, %v77
    %v79 = vlog2.pop %v71
    %v80 = vmul.f32 %v79, 0.6931472
    %v81 = vmul.f32 %v80, 0.001
    %v82 = vadd.f32 %v81, %v57
    %v83 = vsub.f32 0.0, %v82
    %v84 = vmul.f32 %v61, %v78
    %85 = vst [vmem:[#allocation2] sm:$0xff] %v84
    %v86 = vmul.f32 %v65, %v78
    %87 = vst [vmem:[#allocation3] sm:$0xff] %v86
    %v88 = vadd.f32 %v51, %v83
    %v89 = vsel %vm74, %v88, 1e+10
    %v90 = vrot.slane %v37, 6
    %v91 = vmul.f32 %v90, %v90
    %v92 = vadd.f32 %v38, %v91
    %v93 = vmul.f32 %v48, %v90
    %v94 = vsub.f32 %v92, %v93
    %v95 = vmax.f32 %v94, 0.0
    %v96 = vrot.slane %v89, 7
    %v97 = vsel %vm41, 1e+10, %v96
    %v98 = vsub.f32 0.0, %v89
    %v99 = vsub.f32 0.0, %v97
    %v100 = vmax.f32 %v98, %v55
    %v101 = vmax.f32 %v100, %v99
    %v102 = vsub.f32 %v98, %v101
    %v103 = vmul.f32 %v102, 1000.0
    %v104 = vmul.f32 %v103, 1.442695
    %v105 = vpow.pop %v104
    %v106 = vsub.f32 %v55, %v101
    %v107 = vmul.f32 %v106, 1000.0
    %v108 = vmul.f32 %v107, 1.442695
    %v109 = vpow.pop %v108
    %v110 = vsub.f32 %v99, %v101
    %v111 = vmul.f32 %v110, 1000.0
    %v112 = vmul.f32 %v111, 1.442695
    %v113 = vpow.pop %v112
    %v114 = vadd.f32 %v105, %v109
    %v115 = vadd.f32 %v114, %v113
    %vm116 = vcmp.le.s32.totalorder %v40, 1
    %vm117 = vmand %vm72, %vm116
    %v118 = vrcp.pop %v115
    %v119 = vsel %vm117, 1, 0
    %v120 = vcvt.s32.f32 %v119
    %v121 = vmul.f32 %v118, %v120
    %v122 = vlog2.pop %v115
    %v123 = vmul.f32 %v122, 0.6931472
    %v124 = vmul.f32 %v123, 0.001
    %v125 = vadd.f32 %v124, %v101
    %v126 = vsub.f32 0.0, %v125
    %v127 = vmul.f32 %v105, %v121
    %s128 = scalar_lea.vmem [#allocation2], 8
    %129 = vst [vmem:[%s128] sm:$0xff] %v127
    %v130 = vmul.f32 %v109, %v121
    %s131 = scalar_lea.vmem [#allocation3], 8
    %132 = vst [vmem:[%s131] sm:$0xff] %v130
    %v133 = vadd.f32 %v95, %v126
    %v134 = vsel %vm117, %v133, 1e+10
    %v135 = vrot.slane %v37, 5
    %v136 = vmul.f32 %v135, %v135
    %v137 = vadd.f32 %v38, %v136
    %v138 = vmul.f32 %v48, %v135
    %v139 = vsub.f32 %v137, %v138
    %v140 = vmax.f32 %v139, 0.0
    %v141 = vrot.slane %v134, 7
    %v142 = vsel %vm41, 1e+10, %v141
    %v143 = vsub.f32 0.0, %v134
    %v144 = vsub.f32 0.0, %v142
    %v145 = vmax.f32 %v143, %v99
    %v146 = vmax.f32 %v145, %v144
    %v147 = vsub.f32 %v143, %v146
    %v148 = vmul.f32 %v147, 1000.0
    %v149 = vmul.f32 %v148, 1.442695
    %v150 = vpow.pop %v149
    %v151 = vsub.f32 %v99, %v146
    %v152 = vmul.f32 %v151, 1000.0
    %v153 = vmul.f32 %v152, 1.442695
    %v154 = vpow.pop %v153
    %v155 = vsub.f32 %v144, %v146
    %v156 = vmul.f32 %v155, 1000.0
    %v157 = vmul.f32 %v156, 1.442695
    %v158 = vpow.pop %v157
    %v159 = vadd.f32 %v150, %v154
    %v160 = vadd.f32 %v159, %v158
    %vm161 = vcmp.le.s32.totalorder %v40, 2
    %vm162 = vmand %vm72, %vm161
    %v163 = vrcp.pop %v160
    %v164 = vsel %vm162, 1, 0
    %v165 = vcvt.s32.f32 %v164
    %v166 = vmul.f32 %v163, %v165
    %v167 = vlog2.pop %v160
    %v168 = vmul.f32 %v167, 0.6931472
    %v169 = vmul.f32 %v168, 0.001
    %v170 = vadd.f32 %v169, %v146
    %v171 = vsub.f32 0.0, %v170
    %v172 = vmul.f32 %v150, %v166
    %s173 = scalar_lea.vmem [#allocation2], 16
    %174 = vst [vmem:[%s173] sm:$0xff] %v172
    %v175 = vmul.f32 %v154, %v166
    %s176 = scalar_lea.vmem [#allocation3], 16
    %177 = vst [vmem:[%s176] sm:$0xff] %v175
    %v178 = vadd.f32 %v140, %v171
    %v179 = vsel %vm162, %v178, 1e+10
    %v180 = vrot.slane %v37, 4
    %v181 = vmul.f32 %v180, %v180
    %v182 = vadd.f32 %v38, %v181
    %v183 = vmul.f32 %v48, %v180
    %v184 = vsub.f32 %v182, %v183
    %v185 = vmax.f32 %v184, 0.0
    %v186 = vrot.slane %v179, 7
    %v187 = vsel %vm41, 1e+10, %v186
    %v188 = vsub.f32 0.0, %v179
    %v189 = vsub.f32 0.0, %v187
    %v190 = vmax.f32 %v188, %v144
    %v191 = vmax.f32 %v190, %v189
    %v192 = vsub.f32 %v188, %v191
    %v193 = vmul.f32 %v192, 1000.0
    %v194 = vmul.f32 %v193, 1.442695
    %v195 = vpow.pop %v194
    %v196 = vsub.f32 %v144, %v191
    %v197 = vmul.f32 %v196, 1000.0
    %v198 = vmul.f32 %v197, 1.442695
    %v199 = vpow.pop %v198
    %v200 = vsub.f32 %v189, %v191
    %v201 = vmul.f32 %v200, 1000.0
    %v202 = vmul.f32 %v201, 1.442695
    %v203 = vpow.pop %v202
    %v204 = vadd.f32 %v195, %v199
    %v205 = vadd.f32 %v204, %v203
    %vm206 = vcmp.le.s32.totalorder %v40, 3
    %vm207 = vmand %vm72, %vm206
    %v208 = vrcp.pop %v205
    %v209 = vsel %vm207, 1, 0
    %v210 = vcvt.s32.f32 %v209
    %v211 = vmul.f32 %v208, %v210
    %v212 = vlog2.pop %v205
    %v213 = vmul.f32 %v212, 0.6931472
    %v214 = vmul.f32 %v213, 0.001
    %v215 = vadd.f32 %v214, %v191
    %v216 = vsub.f32 0.0, %v215
    %v217 = vmul.f32 %v195, %v211
    %s218 = scalar_lea.vmem [#allocation2], 24
    %219 = vst [vmem:[%s218] sm:$0xff] %v217
    %v220 = vmul.f32 %v199, %v211
    %s221 = scalar_lea.vmem [#allocation3], 24
    %222 = vst [vmem:[%s221] sm:$0xff] %v220
    %v223 = vadd.f32 %v185, %v216
    %v224 = vsel %vm207, %v223, 1e+10
    %v225 = vrot.slane %v37, 3
    %v226 = vmul.f32 %v225, %v225
    %v227 = vadd.f32 %v38, %v226
    %v228 = vmul.f32 %v48, %v225
    %v229 = vsub.f32 %v227, %v228
    %v230 = vmax.f32 %v229, 0.0
    %v231 = vrot.slane %v224, 7
    %v232 = vsel %vm41, 1e+10, %v231
    %v233 = vsub.f32 0.0, %v224
    %v234 = vsub.f32 0.0, %v232
    %v235 = vmax.f32 %v233, %v189
    %v236 = vmax.f32 %v235, %v234
    %v237 = vsub.f32 %v233, %v236
    %v238 = vmul.f32 %v237, 1000.0
    %v239 = vmul.f32 %v238, 1.442695
    %v240 = vpow.pop %v239
    %v241 = vsub.f32 %v189, %v236
    %v242 = vmul.f32 %v241, 1000.0
    %v243 = vmul.f32 %v242, 1.442695
    %v244 = vpow.pop %v243
    %v245 = vsub.f32 %v234, %v236
    %v246 = vmul.f32 %v245, 1000.0
    %v247 = vmul.f32 %v246, 1.442695
    %v248 = vpow.pop %v247
    %v249 = vadd.f32 %v240, %v244
    %v250 = vadd.f32 %v249, %v248
    %vm251 = vcmp.le.s32.totalorder %v40, 4
    %vm252 = vmand %vm72, %vm251
    %v253 = vrcp.pop %v250
    %v254 = vsel %vm252, 1, 0
    %v255 = vcvt.s32.f32 %v254
    %v256 = vmul.f32 %v253, %v255
    %v257 = vlog2.pop %v250
    %v258 = vmul.f32 %v257, 0.6931472
    %v259 = vmul.f32 %v258, 0.001
    %v260 = vadd.f32 %v259, %v236
    %v261 = vsub.f32 0.0, %v260
    %v262 = vmul.f32 %v240, %v256
    %s263 = scalar_lea.vmem [#allocation2], 32
    %264 = vst [vmem:[%s263] sm:$0xff] %v262
    %v265 = vmul.f32 %v244, %v256
    %s266 = scalar_lea.vmem [#allocation3], 32
    %267 = vst [vmem:[%s266] sm:$0xff] %v265
    %v268 = vadd.f32 %v230, %v261
    %v269 = vsel %vm252, %v268, 1e+10
    %v270 = vrot.slane %v37, 2
    %v271 = vmul.f32 %v270, %v270
    %v272 = vadd.f32 %v38, %v271
    %v273 = vmul.f32 %v48, %v270
    %v274 = vsub.f32 %v272, %v273
    %v275 = vmax.f32 %v274, 0.0
    %v276 = vrot.slane %v269, 7
    %v277 = vsel %vm41, 1e+10, %v276
    %v278 = vsub.f32 0.0, %v269
    %v279 = vsub.f32 0.0, %v277
    %v280 = vmax.f32 %v278, %v234
    %v281 = vmax.f32 %v280, %v279
    %v282 = vsub.f32 %v278, %v281
    %v283 = vmul.f32 %v282, 1000.0
    %v284 = vmul.f32 %v283, 1.442695
    %v285 = vpow.pop %v284
    %v286 = vsub.f32 %v234, %v281
    %v287 = vmul.f32 %v286, 1000.0
    %v288 = vmul.f32 %v287, 1.442695
    %v289 = vpow.pop %v288
    %v290 = vsub.f32 %v279, %v281
    %v291 = vmul.f32 %v290, 1000.0
    %v292 = vmul.f32 %v291, 1.442695
    %v293 = vpow.pop %v292
    %v294 = vadd.f32 %v285, %v289
    %v295 = vadd.f32 %v294, %v293
    %vm296 = vcmp.le.s32.totalorder %v40, 5
    %vm297 = vmand %vm72, %vm296
    %v298 = vrcp.pop %v295
    %v299 = vsel %vm297, 1, 0
    %v300 = vcvt.s32.f32 %v299
    %v301 = vmul.f32 %v298, %v300
    %v302 = vlog2.pop %v295
    %v303 = vmul.f32 %v302, 0.6931472
    %v304 = vmul.f32 %v303, 0.001
    %v305 = vadd.f32 %v304, %v281
    %v306 = vsub.f32 0.0, %v305
    %v307 = vmul.f32 %v285, %v301
    %s308 = scalar_lea.vmem [#allocation2], 40
    %309 = vst [vmem:[%s308] sm:$0xff] %v307
    %v310 = vmul.f32 %v289, %v301
    %s311 = scalar_lea.vmem [#allocation3], 40
    %312 = vst [vmem:[%s311] sm:$0xff] %v310
    %v313 = vadd.f32 %v275, %v306
    %v314 = vsel %vm297, %v313, 1e+10
    %v315 = vrot.slane %v37, 1
    %v316 = vmul.f32 %v315, %v315
    %v317 = vadd.f32 %v38, %v316
    %v318 = vmul.f32 %v48, %v315
    %v319 = vsub.f32 %v317, %v318
    %v320 = vmax.f32 %v319, 0.0
    %v321 = vrot.slane %v314, 7
    %v322 = vsel %vm41, 1e+10, %v321
    %v323 = vsub.f32 0.0, %v314
    %v324 = vsub.f32 0.0, %v322
    %v325 = vmax.f32 %v323, %v279
    %v326 = vmax.f32 %v325, %v324
    %v327 = vsub.f32 %v323, %v326
    %v328 = vmul.f32 %v327, 1000.0
    %v329 = vmul.f32 %v328, 1.442695
    %v330 = vpow.pop %v329
    %v331 = vsub.f32 %v279, %v326
    %v332 = vmul.f32 %v331, 1000.0
    %v333 = vmul.f32 %v332, 1.442695
    %v334 = vpow.pop %v333
    %v335 = vsub.f32 %v324, %v326
    %v336 = vmul.f32 %v335, 1000.0
    %v337 = vmul.f32 %v336, 1.442695
    %v338 = vpow.pop %v337
    %v339 = vadd.f32 %v330, %v334
    %v340 = vadd.f32 %v339, %v338
    %vm341 = vcmp.le.s32.totalorder %v40, 6
    %vm342 = vmand %vm72, %vm341
    %v343 = vrcp.pop %v340
    %v344 = vsel %vm342, 1, 0
    %v345 = vcvt.s32.f32 %v344
    %v346 = vmul.f32 %v343, %v345
    %v347 = vlog2.pop %v340
    %v348 = vmul.f32 %v347, 0.6931472
    %v349 = vmul.f32 %v348, 0.001
    %v350 = vadd.f32 %v349, %v326
    %v351 = vsub.f32 0.0, %v350
    %v352 = vmul.f32 %v330, %v346
    %s353 = scalar_lea.vmem [#allocation2], 48
    %354 = vst [vmem:[%s353] sm:$0xff] %v352
    %v355 = vmul.f32 %v334, %v346
    %s356 = scalar_lea.vmem [#allocation3], 48
    %357 = vst [vmem:[%s356] sm:$0xff] %v355
    %v358 = vadd.f32 %v320, %v351
    %v359 = vsel %vm342, %v358, 1e+10
    %v360 = vmul.f32 %v37, %v37
    %v361 = vadd.f32 %v38, %v360
    %v362 = vmul.f32 %v48, %v37
    %v363 = vsub.f32 %v361, %v362
    %v364 = vmax.f32 %v363, 0.0
    %v365 = vrot.slane %v359, 7
    %v366 = vsel %vm41, 1e+10, %v365
    %v367 = vsub.f32 0.0, %v359
    %v368 = vsub.f32 0.0, %v366
    %v369 = vmax.f32 %v367, %v324
    %v370 = vmax.f32 %v369, %v368
    %v371 = vsub.f32 %v367, %v370
    %v372 = vmul.f32 %v371, 1000.0
    %v373 = vmul.f32 %v372, 1.442695
    %v374 = vpow.pop %v373
    %v375 = vsub.f32 %v324, %v370
    %v376 = vmul.f32 %v375, 1000.0
    %v377 = vmul.f32 %v376, 1.442695
    %v378 = vpow.pop %v377
    %v379 = vsub.f32 %v368, %v370
    %v380 = vmul.f32 %v379, 1000.0
    %v381 = vmul.f32 %v380, 1.442695
    %v382 = vpow.pop %v381
    %v383 = vadd.f32 %v374, %v378
    %v384 = vadd.f32 %v383, %v382
    %vm385 = vcmp.le.s32.totalorder %v40, 7
    %vm386 = vmand %vm72, %vm385
    %v387 = vrcp.pop %v384
    %v388 = vsel %vm386, 1, 0
    %v389 = vcvt.s32.f32 %v388
    %v390 = vmul.f32 %v387, %v389
    %v391 = vlog2.pop %v384
    %v392 = vmul.f32 %v391, 0.6931472
    %v393 = vmul.f32 %v392, 0.001
    %v394 = vadd.f32 %v393, %v370
    %v395 = vsub.f32 0.0, %v394
    %v396 = vmul.f32 %v374, %v390
    %s397 = scalar_lea.vmem [#allocation2], 56
    %398 = vst [vmem:[%s397] sm:$0xff] %v396
    %v399 = vmul.f32 %v378, %v390
    %s400 = scalar_lea.vmem [#allocation3], 56
    %401 = vst [vmem:[%s400] sm:$0xff] %v399
    %v402 = vadd.f32 %v364, %v395
    %v403 = vsel %vm386, %v402, 1e+10
    %v404 = vrot.slane %v403, 7
    %v405 = vsel %vm41, 1e+10, %v404
    %v406 = vsub.f32 0.0, %v403
    %v407 = vsub.f32 0.0, %v405
    %v408 = vmax.f32 %v406, %v368
    %v409 = vmax.f32 %v408, %v407
    %v410 = vsub.f32 %v406, %v409
    %v411 = vmul.f32 %v410, 1000.0
    %v412 = vmul.f32 %v411, 1.442695
    %v413 = vpow.pop %v412
    %v414 = vsub.f32 %v368, %v409
    %v415 = vmul.f32 %v414, 1000.0
    %v416 = vmul.f32 %v415, 1.442695
    %v417 = vpow.pop %v416
    %v418 = vsub.f32 %v407, %v409
    %v419 = vmul.f32 %v418, 1000.0
    %v420 = vmul.f32 %v419, 1.442695
    %v421 = vpow.pop %v420
    %v422 = vadd.f32 %v413, %v417
    %v423 = vadd.f32 %v422, %v421
    %vm424 = vcmp.ge.s32.totalorder %v40, 1
    %vm425 = vmand %vm424, %vm385
    %v426 = vrcp.pop %v423
    %v427 = vsel %vm425, 1, 0
    %v428 = vcvt.s32.f32 %v427
    %v429 = vmul.f32 %v426, %v428
    %v430 = vlog2.pop %v423
    %v431 = vmul.f32 %v430, 0.6931472
    %v432 = vmul.f32 %v431, 0.001
    %v433 = vadd.f32 %v432, %v409
    %v434 = vsub.f32 0.0, %v433
    %v435 = vmul.f32 %v413, %v429
    %s436 = scalar_lea.vmem [#allocation2], 64
    %437 = vst [vmem:[%s436] sm:$0xff] %v435
    %v438 = vmul.f32 %v417, %v429
    %s439 = scalar_lea.vmem [#allocation3], 64
    %440 = vst [vmem:[%s439] sm:$0xff] %v438
    %v441 = vadd.f32 %v51, %v434
    %v442 = vsel %vm425, %v441, 1e+10
    %v443 = vrot.slane %v442, 7
    %v444 = vsel %vm41, 1e+10, %v443
    %v445 = vsub.f32 0.0, %v442
    %v446 = vsub.f32 0.0, %v444
    %v447 = vmax.f32 %v445, %v407
    %v448 = vmax.f32 %v447, %v446
    %v449 = vsub.f32 %v445, %v448
    %v450 = vmul.f32 %v449, 1000.0
    %v451 = vmul.f32 %v450, 1.442695
    %v452 = vpow.pop %v451
    %v453 = vsub.f32 %v407, %v448
    %v454 = vmul.f32 %v453, 1000.0
    %v455 = vmul.f32 %v454, 1.442695
    %v456 = vpow.pop %v455
    %v457 = vsub.f32 %v446, %v448
    %v458 = vmul.f32 %v457, 1000.0
    %v459 = vmul.f32 %v458, 1.442695
    %v460 = vpow.pop %v459
    %v461 = vadd.f32 %v452, %v456
    %v462 = vadd.f32 %v461, %v460
    %vm463 = vcmp.ge.s32.totalorder %v40, 2
    %vm464 = vmand %vm463, %vm385
    %v465 = vrcp.pop %v462
    %v466 = vsel %vm464, 1, 0
    %v467 = vcvt.s32.f32 %v466
    %v468 = vmul.f32 %v465, %v467
    %v469 = vlog2.pop %v462
    %v470 = vmul.f32 %v469, 0.6931472
    %v471 = vmul.f32 %v470, 0.001
    %v472 = vadd.f32 %v471, %v448
    %v473 = vsub.f32 0.0, %v472
    %v474 = vmul.f32 %v452, %v468
    %s475 = scalar_lea.vmem [#allocation2], 72
    %476 = vst [vmem:[%s475] sm:$0xff] %v474
    %v477 = vmul.f32 %v456, %v468
    %s478 = scalar_lea.vmem [#allocation3], 72
    %479 = vst [vmem:[%s478] sm:$0xff] %v477
    %v480 = vadd.f32 %v95, %v473
    %v481 = vsel %vm464, %v480, 1e+10
    %v482 = vrot.slane %v481, 7
    %v483 = vsel %vm41, 1e+10, %v482
    %v484 = vsub.f32 0.0, %v481
    %v485 = vsub.f32 0.0, %v483
    %v486 = vmax.f32 %v484, %v446
    %v487 = vmax.f32 %v486, %v485
    %v488 = vsub.f32 %v484, %v487
    %v489 = vmul.f32 %v488, 1000.0
    %v490 = vmul.f32 %v489, 1.442695
    %v491 = vpow.pop %v490
    %v492 = vsub.f32 %v446, %v487
    %v493 = vmul.f32 %v492, 1000.0
    %v494 = vmul.f32 %v493, 1.442695
    %v495 = vpow.pop %v494
    %v496 = vsub.f32 %v485, %v487
    %v497 = vmul.f32 %v496, 1000.0
    %v498 = vmul.f32 %v497, 1.442695
    %v499 = vpow.pop %v498
    %v500 = vadd.f32 %v491, %v495
    %v501 = vadd.f32 %v500, %v499
    %vm502 = vcmp.ge.s32.totalorder %v40, 3
    %vm503 = vmand %vm502, %vm385
    %v504 = vrcp.pop %v501
    %v505 = vsel %vm503, 1, 0
    %v506 = vcvt.s32.f32 %v505
    %v507 = vmul.f32 %v504, %v506
    %v508 = vlog2.pop %v501
    %v509 = vmul.f32 %v508, 0.6931472
    %v510 = vmul.f32 %v509, 0.001
    %v511 = vadd.f32 %v510, %v487
    %v512 = vsub.f32 0.0, %v511
    %v513 = vmul.f32 %v491, %v507
    %s514 = scalar_lea.vmem [#allocation2], 80
    %515 = vst [vmem:[%s514] sm:$0xff] %v513
    %v516 = vmul.f32 %v495, %v507
    %s517 = scalar_lea.vmem [#allocation3], 80
    %518 = vst [vmem:[%s517] sm:$0xff] %v516
    %v519 = vadd.f32 %v140, %v512
    %v520 = vsel %vm503, %v519, 1e+10
    %v521 = vrot.slane %v520, 7
    %v522 = vsel %vm41, 1e+10, %v521
    %v523 = vsub.f32 0.0, %v520
    %v524 = vsub.f32 0.0, %v522
    %v525 = vmax.f32 %v523, %v485
    %v526 = vmax.f32 %v525, %v524
    %v527 = vsub.f32 %v523, %v526
    %v528 = vmul.f32 %v527, 1000.0
    %v529 = vmul.f32 %v528, 1.442695
    %v530 = vpow.pop %v529
    %v531 = vsub.f32 %v485, %v526
    %v532 = vmul.f32 %v531, 1000.0
    %v533 = vmul.f32 %v532, 1.442695
    %v534 = vpow.pop %v533
    %v535 = vsub.f32 %v524, %v526
    %v536 = vmul.f32 %v535, 1000.0
    %v537 = vmul.f32 %v536, 1.442695
    %v538 = vpow.pop %v537
    %v539 = vadd.f32 %v530, %v534
    %v540 = vadd.f32 %v539, %v538
    %vm541 = vcmp.ge.s32.totalorder %v40, 4
    %vm542 = vmand %vm541, %vm385
    %v543 = vrcp.pop %v540
    %v544 = vsel %vm542, 1, 0
    %v545 = vcvt.s32.f32 %v544
    %v546 = vmul.f32 %v543, %v545
    %v547 = vlog2.pop %v540
    %v548 = vmul.f32 %v547, 0.6931472
    %v549 = vmul.f32 %v548, 0.001
    %v550 = vadd.f32 %v549, %v526
    %v551 = vsub.f32 0.0, %v550
    %v552 = vmul.f32 %v530, %v546
    %s553 = scalar_lea.vmem [#allocation2], 88
    %554 = vst [vmem:[%s553] sm:$0xff] %v552
    %v555 = vmul.f32 %v534, %v546
    %s556 = scalar_lea.vmem [#allocation3], 88
    %557 = vst [vmem:[%s556] sm:$0xff] %v555
    %v558 = vadd.f32 %v185, %v551
    %v559 = vsel %vm542, %v558, 1e+10
    %v560 = vrot.slane %v559, 7
    %v561 = vsel %vm41, 1e+10, %v560
    %v562 = vsub.f32 0.0, %v559
    %v563 = vsub.f32 0.0, %v561
    %v564 = vmax.f32 %v562, %v524
    %v565 = vmax.f32 %v564, %v563
    %v566 = vsub.f32 %v562, %v565
    %v567 = vmul.f32 %v566, 1000.0
    %v568 = vmul.f32 %v567, 1.442695
    %v569 = vpow.pop %v568
    %v570 = vsub.f32 %v524, %v565
    %v571 = vmul.f32 %v570, 1000.0
    %v572 = vmul.f32 %v571, 1.442695
    %v573 = vpow.pop %v572
    %v574 = vsub.f32 %v563, %v565
    %v575 = vmul.f32 %v574, 1000.0
    %v576 = vmul.f32 %v575, 1.442695
    %v577 = vpow.pop %v576
    %v578 = vadd.f32 %v569, %v573
    %v579 = vadd.f32 %v578, %v577
    %vm580 = vcmp.ge.s32.totalorder %v40, 5
    %vm581 = vmand %vm580, %vm385
    %v582 = vrcp.pop %v579
    %v583 = vsel %vm581, 1, 0
    %v584 = vcvt.s32.f32 %v583
    %v585 = vmul.f32 %v582, %v584
    %v586 = vlog2.pop %v579
    %v587 = vmul.f32 %v586, 0.6931472
    %v588 = vmul.f32 %v587, 0.001
    %v589 = vadd.f32 %v588, %v565
    %v590 = vsub.f32 0.0, %v589
    %v591 = vmul.f32 %v569, %v585
    %s592 = scalar_lea.vmem [#allocation2], 96
    %593 = vst [vmem:[%s592] sm:$0xff] %v591
    %v594 = vmul.f32 %v573, %v585
    %s595 = scalar_lea.vmem [#allocation3], 96
    %596 = vst [vmem:[%s595] sm:$0xff] %v594
    %v597 = vadd.f32 %v230, %v590
    %v598 = vsel %vm581, %v597, 1e+10
    %v599 = vrot.slane %v598, 7
    %v600 = vsel %vm41, 1e+10, %v599
    %v601 = vsub.f32 0.0, %v598
    %v602 = vsub.f32 0.0, %v600
    %v603 = vmax.f32 %v601, %v563
    %v604 = vmax.f32 %v603, %v602
    %v605 = vsub.f32 %v601, %v604
    %v606 = vmul.f32 %v605, 1000.0
    %v607 = vmul.f32 %v606, 1.442695
    %v608 = vpow.pop %v607
    %v609 = vsub.f32 %v563, %v604
    %v610 = vmul.f32 %v609, 1000.0
    %v611 = vmul.f32 %v610, 1.442695
    %v612 = vpow.pop %v611
    %v613 = vsub.f32 %v602, %v604
    %v614 = vmul.f32 %v613, 1000.0
    %v615 = vmul.f32 %v614, 1.442695
    %v616 = vpow.pop %v615
    %v617 = vadd.f32 %v608, %v612
    %v618 = vadd.f32 %v617, %v616
    %vm619 = vcmp.ge.s32.totalorder %v40, 6
    %vm620 = vmand %vm619, %vm385
    %v621 = vrcp.pop %v618
    %v622 = vsel %vm620, 1, 0
    %v623 = vcvt.s32.f32 %v622
    %v624 = vmul.f32 %v621, %v623
    %v625 = vlog2.pop %v618
    %v626 = vmul.f32 %v625, 0.6931472
    %v627 = vmul.f32 %v626, 0.001
    %v628 = vadd.f32 %v627, %v604
    %v629 = vsub.f32 0.0, %v628
    %v630 = vmul.f32 %v608, %v624
    %s631 = scalar_lea.vmem [#allocation2], 104
    %632 = vst [vmem:[%s631] sm:$0xff] %v630
    %v633 = vmul.f32 %v612, %v624
    %s634 = scalar_lea.vmem [#allocation3], 104
    %635 = vst [vmem:[%s634] sm:$0xff] %v633
    %v636 = vadd.f32 %v275, %v629
    %v637 = vsel %vm620, %v636, 1e+10
    %v638 = vrot.slane %v637, 7
    %v639 = vsel %vm41, 1e+10, %v638
    %v640 = vsub.f32 0.0, %v637
    %v641 = vsub.f32 0.0, %v639
    %v642 = vmax.f32 %v640, %v602
    %v643 = vmax.f32 %v642, %v641
    %v644 = vsub.f32 %v640, %v643
    %v645 = vmul.f32 %v644, 1000.0
    %v646 = vmul.f32 %v645, 1.442695
    %v647 = vpow.pop %v646
    %v648 = vsub.f32 %v602, %v643
    %v649 = vmul.f32 %v648, 1000.0
    %v650 = vmul.f32 %v649, 1.442695
    %v651 = vpow.pop %v650
    %v652 = vsub.f32 %v641, %v643
    %v653 = vmul.f32 %v652, 1000.0
    %v654 = vmul.f32 %v653, 1.442695
    %v655 = vpow.pop %v654
    %v656 = vadd.f32 %v647, %v651
    %v657 = vadd.f32 %v656, %v655
    %vm658 = vcmp.ge.s32.totalorder %v40, 7
    %vm659 = vmand %vm658, %vm385
    %v660 = vrcp.pop %v657
    %v661 = vsel %vm659, 1, 0
    %v662 = vcvt.s32.f32 %v661
    %v663 = vmul.f32 %v660, %v662
    %v664 = vlog2.pop %v657
    %v665 = vmul.f32 %v664, 0.6931472
    %v666 = vmul.f32 %v665, 0.001
    %v667 = vadd.f32 %v666, %v643
    %v668 = vsub.f32 0.0, %v667
    %v669 = vmul.f32 %v647, %v663
    %s670 = scalar_lea.vmem [#allocation2], 112
    %671 = vst [vmem:[%s670] sm:$0xff] %v669
    %v672 = vmul.f32 %v651, %v663
    %s673 = scalar_lea.vmem [#allocation3], 112
    %674 = vst [vmem:[%s673] sm:$0xff] %v672
    %v675 = vadd.f32 %v320, %v668
    %v676 = vsel %vm659, %v675, 1e+10
    %v677 = vsel %vm42, %v676, 0.0
    %v678 = vrot.slane %v677, 4
    %v679 = vadd.f32 %v677, %v678
    %v680 = vrot.slane %v679, 2
    %v681 = vadd.f32 %v679, %v680
    %v682 = vrot.slane %v681, 1
    %v683 = vadd.f32 %v681, %v682
    %v684 = vsel %vm42, 1, 0
    %v685 = vcvt.s32.f32 %v684
    %v686 = vld [vmem:[%s670] sm:$0xff]
    %v687 = vld [vmem:[%s673] sm:$0xff]
    %v688 = vsub.f32 %v662, %v686
    %v689 = vsub.f32 %v688, %v687
    %v690 = vmul.f32 %v686, %v685
    %v691 = vmul.f32 %v689, %v685
    %v692 = vmul.f32 %v687, 0.0
    %v693 = vadd.f32 %v691, %v692
    %v694 = vrot.slane %v693, 1
    %v695 = vsel %vm42, 0.0, %v694
    %v696 = vadd.f32 %v690, %v695
    %v697 = vsel %vm620, %v696, 0.0
    %v698 = vadd.f32 %v44, 2.0
    %v699 = vsub.f32 %v698, 15.0
    %v700 = vmul.f32 %v699, %v699
    %v701 = vmul.f32 %v697, %v700
    %v702 = vadd.f32 %v701, 0.0
    %v703 = vld [vmem:[%s631] sm:$0xff]
    %v704 = vld [vmem:[%s634] sm:$0xff]
    %v705 = vsub.f32 %v623, %v703
    %v706 = vsub.f32 %v705, %v704
    %v707 = vmul.f32 %v703, %v697
    %v708 = vmul.f32 %v706, %v697
    %v709 = vmul.f32 %v687, %v685
    %v710 = vadd.f32 %v708, %v709
    %v711 = vrot.slane %v710, 1
    %v712 = vsel %vm42, 0.0, %v711
    %v713 = vadd.f32 %v707, %v712
    %v714 = vsel %vm581, %v713, 0.0
    %v715 = vsub.f32 %v698, 14.0
    %v716 = vmul.f32 %v715, %v715
    %v717 = vmul.f32 %v714, %v716
    %v718 = vadd.f32 %v702, %v717
    %v719 = vld [vmem:[%s592] sm:$0xff]
    %v720 = vld [vmem:[%s595] sm:$0xff]
    %v721 = vsub.f32 %v584, %v719
    %v722 = vsub.f32 %v721, %v720
    %v723 = vmul.f32 %v719, %v714
    %v724 = vmul.f32 %v722, %v714
    %v725 = vmul.f32 %v704, %v697
    %v726 = vadd.f32 %v724, %v725
    %v727 = vrot.slane %v726, 1
    %v728 = vsel %vm42, 0.0, %v727
    %v729 = vadd.f32 %v723, %v728
    %v730 = vsel %vm542, %v729, 0.0
    %v731 = vsub.f32 %v698, 13.0
    %v732 = vmul.f32 %v731, %v731
    %v733 = vmul.f32 %v730, %v732
    %v734 = vadd.f32 %v718, %v733
    %v735 = vld [vmem:[%s553] sm:$0xff]
    %v736 = vld [vmem:[%s556] sm:$0xff]
    %v737 = vsub.f32 %v545, %v735
    %v738 = vsub.f32 %v737, %v736
    %v739 = vmul.f32 %v735, %v730
    %v740 = vmul.f32 %v738, %v730
    %v741 = vmul.f32 %v720, %v714
    %v742 = vadd.f32 %v740, %v741
    %v743 = vrot.slane %v742, 1
    %v744 = vsel %vm42, 0.0, %v743
    %v745 = vadd.f32 %v739, %v744
    %v746 = vsel %vm503, %v745, 0.0
    %v747 = vsub.f32 %v698, 12.0
    %v748 = vmul.f32 %v747, %v747
    %v749 = vmul.f32 %v746, %v748
    %v750 = vadd.f32 %v734, %v749
    %v751 = vld [vmem:[%s514] sm:$0xff]
    %v752 = vld [vmem:[%s517] sm:$0xff]
    %v753 = vsub.f32 %v506, %v751
    %v754 = vsub.f32 %v753, %v752
    %v755 = vmul.f32 %v751, %v746
    %v756 = vmul.f32 %v754, %v746
    %v757 = vmul.f32 %v736, %v730
    %v758 = vadd.f32 %v756, %v757
    %v759 = vrot.slane %v758, 1
    %v760 = vsel %vm42, 0.0, %v759
    %v761 = vadd.f32 %v755, %v760
    %v762 = vsel %vm464, %v761, 0.0
    %v763 = vsub.f32 %v698, 11.0
    %v764 = vmul.f32 %v763, %v763
    %v765 = vmul.f32 %v762, %v764
    %v766 = vadd.f32 %v750, %v765
    %v767 = vld [vmem:[%s475] sm:$0xff]
    %v768 = vld [vmem:[%s478] sm:$0xff]
    %v769 = vsub.f32 %v467, %v767
    %v770 = vsub.f32 %v769, %v768
    %v771 = vmul.f32 %v767, %v762
    %v772 = vmul.f32 %v770, %v762
    %v773 = vmul.f32 %v752, %v746
    %v774 = vadd.f32 %v772, %v773
    %v775 = vrot.slane %v774, 1
    %v776 = vsel %vm42, 0.0, %v775
    %v777 = vadd.f32 %v771, %v776
    %v778 = vsel %vm425, %v777, 0.0
    %v779 = vsub.f32 %v698, 10.0
    %v780 = vmul.f32 %v779, %v779
    %v781 = vmul.f32 %v778, %v780
    %v782 = vadd.f32 %v766, %v781
    %v783 = vld [vmem:[%s436] sm:$0xff]
    %v784 = vld [vmem:[%s439] sm:$0xff]
    %v785 = vsub.f32 %v428, %v783
    %v786 = vsub.f32 %v785, %v784
    %v787 = vmul.f32 %v783, %v778
    %v788 = vmul.f32 %v786, %v778
    %v789 = vmul.f32 %v768, %v762
    %v790 = vadd.f32 %v788, %v789
    %v791 = vrot.slane %v790, 1
    %v792 = vsel %vm42, 0.0, %v791
    %v793 = vadd.f32 %v787, %v792
    %v794 = vsel %vm386, %v793, 0.0
    %v795 = vsub.f32 %v698, 9.0
    %v796 = vmul.f32 %v795, %v795
    %v797 = vmul.f32 %v794, %v796
    %v798 = vadd.f32 %v782, %v797
    %v799 = vld [vmem:[%s397] sm:$0xff]
    %v800 = vld [vmem:[%s400] sm:$0xff]
    %v801 = vsub.f32 %v389, %v799
    %v802 = vsub.f32 %v801, %v800
    %v803 = vmul.f32 %v799, %v794
    %v804 = vmul.f32 %v802, %v794
    %v805 = vmul.f32 %v784, %v778
    %v806 = vadd.f32 %v804, %v805
    %v807 = vrot.slane %v806, 1
    %v808 = vsel %vm42, 0.0, %v807
    %v809 = vadd.f32 %v803, %v808
    %v810 = vsel %vm342, %v809, 0.0
    %v811 = vsub.f32 %v698, 8.0
    %v812 = vmul.f32 %v811, %v811
    %v813 = vmul.f32 %v810, %v812
    %v814 = vadd.f32 %v798, %v813
    %v815 = vld [vmem:[%s353] sm:$0xff]
    %v816 = vld [vmem:[%s356] sm:$0xff]
    %v817 = vsub.f32 %v345, %v815
    %v818 = vsub.f32 %v817, %v816
    %v819 = vmul.f32 %v815, %v810
    %v820 = vmul.f32 %v818, %v810
    %v821 = vmul.f32 %v800, %v794
    %v822 = vadd.f32 %v820, %v821
    %v823 = vrot.slane %v822, 1
    %v824 = vsel %vm42, 0.0, %v823
    %v825 = vadd.f32 %v819, %v824
    %v826 = vsel %vm297, %v825, 0.0
    %v827 = vsub.f32 %v698, 7.0
    %v828 = vmul.f32 %v827, %v827
    %v829 = vmul.f32 %v826, %v828
    %v830 = vadd.f32 %v814, %v829
    %v831 = vld [vmem:[%s308] sm:$0xff]
    %v832 = vld [vmem:[%s311] sm:$0xff]
    %v833 = vsub.f32 %v300, %v831
    %v834 = vsub.f32 %v833, %v832
    %v835 = vmul.f32 %v831, %v826
    %v836 = vmul.f32 %v834, %v826
    %v837 = vmul.f32 %v816, %v810
    %v838 = vadd.f32 %v836, %v837
    %v839 = vrot.slane %v838, 1
    %v840 = vsel %vm42, 0.0, %v839
    %v841 = vadd.f32 %v835, %v840
    %v842 = vsel %vm252, %v841, 0.0
    %v843 = vsub.f32 %v698, 6.0
    %v844 = vmul.f32 %v843, %v843
    %v845 = vmul.f32 %v842, %v844
    %v846 = vadd.f32 %v830, %v845
    %v847 = vld [vmem:[%s263] sm:$0xff]
    %v848 = vld [vmem:[%s266] sm:$0xff]
    %v849 = vsub.f32 %v255, %v847
    %v850 = vsub.f32 %v849, %v848
    %v851 = vmul.f32 %v847, %v842
    %v852 = vmul.f32 %v850, %v842
    %v853 = vmul.f32 %v832, %v826
    %v854 = vadd.f32 %v852, %v853
    %v855 = vrot.slane %v854, 1
    %v856 = vsel %vm42, 0.0, %v855
    %v857 = vadd.f32 %v851, %v856
    %v858 = vsel %vm207, %v857, 0.0
    %v859 = vsub.f32 %v698, 5.0
    %v860 = vmul.f32 %v859, %v859
    %v861 = vmul.f32 %v858, %v860
    %v862 = vadd.f32 %v846, %v861
    %v863 = vld [vmem:[%s218] sm:$0xff]
    %v864 = vld [vmem:[%s221] sm:$0xff]
    %v865 = vsub.f32 %v210, %v863
    %v866 = vsub.f32 %v865, %v864
    %v867 = vmul.f32 %v863, %v858
    %v868 = vmul.f32 %v866, %v858
    %v869 = vmul.f32 %v848, %v842
    %v870 = vadd.f32 %v868, %v869
    %v871 = vrot.slane %v870, 1
    %v872 = vsel %vm42, 0.0, %v871
    %v873 = vadd.f32 %v867, %v872
    %v874 = vsel %vm162, %v873, 0.0
    %v875 = vsub.f32 %v698, 4.0
    %v876 = vmul.f32 %v875, %v875
    %v877 = vmul.f32 %v874, %v876
    %v878 = vadd.f32 %v862, %v877
    %v879 = vld [vmem:[%s173] sm:$0xff]
    %v880 = vld [vmem:[%s176] sm:$0xff]
    %v881 = vsub.f32 %v165, %v879
    %v882 = vsub.f32 %v881, %v880
    %v883 = vmul.f32 %v879, %v874
    %v884 = vmul.f32 %v882, %v874
    %v885 = vmul.f32 %v864, %v858
    %v886 = vadd.f32 %v884, %v885
    %v887 = vrot.slane %v886, 1
    %v888 = vsel %vm42, 0.0, %v887
    %v889 = vadd.f32 %v883, %v888
    %v890 = vsel %vm117, %v889, 0.0
    %v891 = vsub.f32 %v698, 3.0
    %v892 = vmul.f32 %v891, %v891
    %v893 = vmul.f32 %v890, %v892
    %v894 = vadd.f32 %v878, %v893
    %v895 = vld [vmem:[%s128] sm:$0xff]
    %v896 = vld [vmem:[%s131] sm:$0xff]
    %v897 = vsub.f32 %v120, %v895
    %v898 = vsub.f32 %v897, %v896
    %v899 = vmul.f32 %v895, %v890
    %v900 = vmul.f32 %v898, %v890
    %v901 = vmul.f32 %v880, %v874
    %v902 = vadd.f32 %v900, %v901
    %v903 = vrot.slane %v902, 1
    %v904 = vsel %vm42, 0.0, %v903
    %v905 = vadd.f32 %v899, %v904
    %v906 = vsel %vm74, %v905, 0.0
    %v907 = vsub.f32 %v698, 2.0
    %v908 = vmul.f32 %v907, %v907
    %v909 = vmul.f32 %v906, %v908
    %v910 = vadd.f32 %v894, %v909
    %v911 = vrot.slane %v910, 4
    %v912 = vadd.f32 %v910, %v911
    %v913 = vrot.slane %v912, 2
    %v914 = vadd.f32 %v912, %v913
    %v915 = vrot.slane %v914, 1
    %v916 = vadd.f32 %v914, %v915
    %v917 = vsel %vm41, %v683, 0.0
    %vm918 = vcmp.eq.s32.totalorder %v40, 1
    %v919 = vsel %vm918, %v916, 0.0
    %v920 = vadd.f32 %v917, %v919
    %921 = vst [vmem:[#allocation9] sm:$0xff] %v920
    // Predicated region
    $region18: #{tpu_custom_call.1} parent=1 // pred_check
      _
    $region19: #{tpu_custom_call.1} parent=1 // pred_check_branch
      %923 = sbr.rel (0) target = $region21
    $region20: #{tpu_custom_call.1} parent=1 // pred_region
      %s925 = ssub.s32 128, 128
      %926 = vsyncadd [#allocation6], %s925
      %s928 = sshll.u32 [#allocation9], 4
      %s929 = int_to_ptr.vmem [resolvable:$true] %s928
      %931 = dma.vmem_to_hbm [thread:$0]  %s929, 128, %s2, [#allocation6]
    $region21: #{tpu_custom_call.1} parent=1 // pred_fallthru
      _
    // Predicated region
    $region22: #{tpu_custom_call.1} parent=1 // pred_check
      _
    $region23: #{tpu_custom_call.1} parent=1 // pred_check_branch
      %933 = sbr.rel (0) target = $region25
    $region24: #{tpu_custom_call.1} parent=1 // pred_region
      %934 = dma.done [#allocation6], 128
    $region25: #{tpu_custom_call.1} parent=1 // pred_fallthru
      _
    %935 = vsyncpa [#allocation5], 1
    %936 = vsyncpa [#allocation8], 1
    %937 = vsyncpa [#allocation6], 1

</llo_original>
